<compile_context>
chip_gen: v5e
topology: v5e:2x2
jax: 0.10.0
libtpu: 0.0.40
codegen_flags: <defaults>
</compile_context>

<pallas_src>
import jax
import jax.numpy as jnp
from jax.experimental import pallas as pl
from jax.experimental.pallas import tpu as pltpu

EPS = 1e-5


def _bn_relu(h, gamma, beta):
    # training-mode BatchNorm1d: per-feature batch mean / biased batch variance
    mean = jnp.mean(h, axis=0, keepdims=True)
    var = jnp.mean((h - mean) * (h - mean), axis=0, keepdims=True)
    h_hat = (h - mean) * jax.lax.rsqrt(var + EPS)
    return jnp.maximum(h_hat * gamma + beta, 0.0)


def mlp_kernel(x_ref, w1_ref, gb1_ref, w2_ref, gb2_ref, w3_ref, gb3_ref,
               w4_ref, b4_ref, o_ref, h2_acc):
    j = pl.program_id(0)

    @pl.when(j == 0)
    def _():
        h2_acc[...] = jnp.zeros_like(h2_acc)

    # ---- layer 1, blocked over its 2048-wide output dim --------------------
    # b1 omitted: exactly cancelled by the BN batch-mean subtraction below.
    # BN1 statistics are per-feature, so each feature block is statistically
    # complete (the whole batch is present).
    h1 = jnp.dot(x_ref[...], w1_ref[...], preferred_element_type=jnp.float32)

    # gb1 is fully resident, pre-packed as (num_blocks, 2, TN1); dynamic index
    # on the leading (untiled) dim selects this step's gamma/beta slice.
    gb1_blk = gb1_ref[j]                                       # (2, TN1)
    a1 = _bn_relu(h1, gb1_blk[0:1, :], gb1_blk[1:2, :])        # (B, TN1)

    # ---- layer 2 partial product: accumulate over layer-1 blocks -----------
    h2_acc[...] += jnp.dot(a1, w2_ref[...], preferred_element_type=jnp.float32)

    # ---- epilogue on the last block: BN2 -> L3 -> BN3 -> L4 -----------------
    @pl.when(j == pl.num_programs(0) - 1)
    def _():
        a2 = _bn_relu(h2_acc[...], gb2_ref[0:1, :], gb2_ref[1:2, :])   # (B, 512)
        h3 = jnp.dot(a2, w3_ref[...], preferred_element_type=jnp.float32)
        a3 = _bn_relu(h3, gb3_ref[0:1, :], gb3_ref[1:2, :])            # (B, 128)
        o_ref[...] = (jnp.dot(a3, w4_ref[...], preferred_element_type=jnp.float32)
                      + b4_ref[...])                                   # (B, 23)


@jax.jit
def network_forward(x_nchw, params):
    B = x_nchw.shape[0]
    x = x_nchw.reshape(B, -1).astype(jnp.float32)    # torch.flatten(x, start_dim=1)

    w1, gb1, w2, gb2, w3, gb3, w4, b4 = params
    K1, N1 = w1.shape                    # 1024, 2048
    N2, N3, N4 = w2.shape[1], w3.shape[1], w4.shape[1]   # 512, 128, 23

    # Layer-1 output / layer-2 K block width.  1024 -> only 2 pipelined steps:
    # per-step DMA (~6 MiB) dwarfs the ~0.35 us fixed step overhead on every
    # generation (review item #1/#2).
    TN1 = 1024
    NBLK = N1 // TN1
    grid = (NBLK,)

    # Repack BN1 gamma/beta block-major so it can stay fully resident and be
    # indexed by a dynamic leading-dim index inside the kernel (review item #5).
    gb1_r = gb1.reshape(2, NBLK, TN1).transpose(1, 0, 2)     # (NBLK, 2, TN1)

    flops = 2 * B * (K1 * N1 + N1 * N2 + N2 * N3 + N3 * N4)
    bytes_accessed = 4 * (x.size + w1.size + gb1.size + w2.size + gb2.size
                          + w3.size + gb3.size + w4.size + b4.size + B * N4)
    transcendentals = N1 + N2 + N3       # one rsqrt per BN feature

    out = pl.pallas_call(
        mlp_kernel,
        out_shape=jax.ShapeDtypeStruct((B, N4), jnp.float32),
        grid_spec=pltpu.PrefetchScalarGridSpec(
            num_scalar_prefetch=0,
            grid=grid,
            in_specs=[
                pl.BlockSpec((B, K1), lambda j: (0, 0)),        # x (tiny, resident)
                pl.BlockSpec((K1, TN1), lambda j: (0, j)),      # w1 block (streamed)
                pl.BlockSpec((NBLK, 2, TN1), lambda j: (0, 0, 0)),  # gb1 (resident)
                pl.BlockSpec((TN1, N2), lambda j: (j, 0)),      # w2 K-block (streamed)
                pl.BlockSpec((2, N2), lambda j: (0, 0)),        # gamma/beta 2
                pl.BlockSpec((N2, N3), lambda j: (0, 0)),       # w3 (resident)
                pl.BlockSpec((2, N3), lambda j: (0, 0)),        # gamma/beta 3
                pl.BlockSpec((N3, N4), lambda j: (0, 0)),       # w4 (resident)
                pl.BlockSpec((1, N4), lambda j: (0, 0)),        # b4
            ],
            out_specs=pl.BlockSpec((B, N4), lambda j: (0, 0)),
            scratch_shapes=[pltpu.VMEM((B, N2), jnp.float32)],  # layer-2 accumulator
        ),
        compiler_params=pltpu.CompilerParams(
            # accumulator + last-step epilogue -> sequential grid axis
            dimension_semantics=("arbitrary",),
            # ~13 MiB double-buffered footprint; explicit limit also overrides
            # v5e's 16 MiB scoped default and stays inside v7x's 64 MiB VMEM.
            vmem_limit_bytes=32 << 20,
        ),
        cost_estimate=pl.CostEstimate(flops=flops,
                                      transcendentals=transcendentals,
                                      bytes_accessed=bytes_accessed),
    )(x, w1, gb1_r, w2, gb2, w3, gb3, w4, b4)
    return out


def _init_linear_w(key, fan_in, fan_out):
    # PyTorch default nn.Linear weight init: U(-1/sqrt(fan_in), 1/sqrt(fan_in)),
    # stored pre-transposed as (in_features, out_features).
    bound = 1.0 / (fan_in ** 0.5)
    return jax.random.uniform(key, (fan_in, fan_out), jnp.float32, -bound, bound)


def _init_linear(key, fan_in, fan_out):
    kw, kb = jax.random.split(key)
    bound = 1.0 / (fan_in ** 0.5)
    w = _init_linear_w(kw, fan_in, fan_out)
    b = jax.random.uniform(kb, (1, fan_out), jnp.float32, -bound, bound)
    return w, b


def _init_bn(key, n):
    # PyTorch default: gamma=1, beta=0; perturb slightly so the affine path
    # is exercised.  Packed as one (2, n) array: row 0 = gamma, row 1 = beta.
    kg, kb = jax.random.split(key)
    gamma = 1.0 + 0.01 * jax.random.normal(kg, (1, n), jnp.float32)
    beta = 0.01 * jax.random.normal(kb, (1, n), jnp.float32)
    return jnp.concatenate([gamma, beta], axis=0)


def make_params(key):
    ks = jax.random.split(key, 7)
    # Biases of layers 1-3 are omitted entirely: the forward output is
    # mathematically independent of them (training-mode BN subtracts the batch
    # mean, which absorbs any constant per-feature bias).
    w1 = _init_linear_w(ks[0], 1024, 2048)
    gb1 = _init_bn(ks[1], 2048)
    w2 = _init_linear_w(ks[2], 2048, 512)
    gb2 = _init_bn(ks[3], 512)
    w3 = _init_linear_w(ks[4], 512, 128)
    gb3 = _init_bn(ks[5], 128)
    w4, b4 = _init_linear(ks[6], 128, 23)
    return (w1, gb1, w2, gb2, w3, gb3, w4, b4)


def reference_forward(x_nchw, params):
    # pure-JAX reference mirroring the torch forward (training-mode BN)
    w1, gb1, w2, gb2, w3, gb3, w4, b4 = params
    x = x_nchw.reshape(x_nchw.shape[0], -1).astype(jnp.float32)

    def bn_relu(h, gb):
        m = h.mean(0, keepdims=True)
        v = ((h - m) ** 2).mean(0, keepdims=True)
        return jnp.maximum((h - m) / jnp.sqrt(v + EPS) * gb[0:1] + gb[1:2], 0.0)

    h = bn_relu(x @ w1, gb1)
    h = bn_relu(h @ w2, gb2)
    h = bn_relu(h @ w3, gb3)
    return h @ w4 + b4


if __name__ == "__main__":
    key = jax.random.PRNGKey(0)
    kx, kp = jax.random.split(key)

    # matches Network.example_input(): (2, 1, 32, 32), values in [0, 1)
    x = jax.random.uniform(kx, (2, 1, 32, 32), jnp.float32)
    params = make_params(kp)

    out = network_forward(x, params)
    out = jax.block_until_ready(out)

    ref = reference_forward(x, params)
    assert out.shape == (2, 23), out.shape
    assert jnp.allclose(out, ref, atol=1e-3, rtol=1e-3), "mismatch vs JAX reference"

    print("KERNEL_OK")
</pallas_src>

<mosaic_0001>
module attributes {stable_mosaic.version = 11 : i64} {
  func.func @mlp_kernel(%arg0: i32, %arg1: memref<2x1024xf32, #tpu.memory_space<vmem>>, %arg2: memref<1024x1024xf32, #tpu.memory_space<vmem>>, %arg3: memref<2x2x1024xf32, #tpu.memory_space<vmem>>, %arg4: memref<1024x512xf32, #tpu.memory_space<vmem>>, %arg5: memref<2x512xf32, #tpu.memory_space<vmem>>, %arg6: memref<512x128xf32, #tpu.memory_space<vmem>>, %arg7: memref<2x128xf32, #tpu.memory_space<vmem>>, %arg8: memref<128x23xf32, #tpu.memory_space<vmem>>, %arg9: memref<1x23xf32, #tpu.memory_space<vmem>>, %arg10: memref<2x23xf32, #tpu.memory_space<vmem>>, %arg11: memref<2x512xf32, #tpu.memory_space<vmem>>) attributes {dimension_semantics = [#tpu.dimension_semantics<arbitrary>], iteration_bounds = array<i64: 2>, scalar_prefetch = 0 : i64, scratch_operands = 1 : i64, tpu.core_type = #tpu.core_type<tc>, window_params = [{pipeline_mode = #tpu.pipeline_mode<synchronous>, transform_indices = @transform_0, window_bounds = array<i64: 2, 1024>}, {transform_indices = @transform_1, window_bounds = array<i64: 1024, 1024>}, {pipeline_mode = #tpu.pipeline_mode<synchronous>, transform_indices = @transform_2, window_bounds = array<i64: 2, 2, 1024>}, {transform_indices = @transform_3, window_bounds = array<i64: 1024, 512>}, {pipeline_mode = #tpu.pipeline_mode<synchronous>, transform_indices = @transform_4, window_bounds = array<i64: 2, 512>}, {pipeline_mode = #tpu.pipeline_mode<synchronous>, transform_indices = @transform_5, window_bounds = array<i64: 512, 128>}, {pipeline_mode = #tpu.pipeline_mode<synchronous>, transform_indices = @transform_6, window_bounds = array<i64: 2, 128>}, {pipeline_mode = #tpu.pipeline_mode<synchronous>, transform_indices = @transform_7, window_bounds = array<i64: 128, 23>}, {pipeline_mode = #tpu.pipeline_mode<synchronous>, transform_indices = @transform_8, window_bounds = array<i64: 1, 23>}, {pipeline_mode = #tpu.pipeline_mode<synchronous>, transform_indices = @transform_9, window_bounds = array<i64: 2, 23>}]} {
    %c0_i32 = arith.constant 0 : i32
    %0 = arith.cmpi eq, %arg0, %c0_i32 : i32
    %1 = arith.extui %0 : i1 to i32
    %c0_i32_0 = arith.constant 0 : i32
    %2 = arith.cmpi ne, %1, %c0_i32_0 : i32
    scf.if %2 {
      %cst_20 = arith.constant 0.000000e+00 : f32
      %45 = vector.broadcast %cst_20 : f32 to vector<2x512xf32>
      %c0_21 = arith.constant 0 : index
      %c0_22 = arith.constant 0 : index
      %46 = vector.load %arg11[%c0_21, %c0_22] : memref<2x512xf32, #tpu.memory_space<vmem>>, vector<2x512xf32>
      tpu.vector_store %arg11[%c0_21, %c0_22], %45 {strides = array<i32>} : memref<2x512xf32, #tpu.memory_space<vmem>>, vector<2x512xf32>,
    } else {
    }
    %c0 = arith.constant 0 : index
    %c0_1 = arith.constant 0 : index
    %3 = vector.load %arg1[%c0, %c0_1] : memref<2x1024xf32, #tpu.memory_space<vmem>>, vector<2x1024xf32>
    %c0_2 = arith.constant 0 : index
    %c0_3 = arith.constant 0 : index
    %4 = vector.load %arg2[%c0_2, %c0_3] : memref<1024x1024xf32, #tpu.memory_space<vmem>>, vector<1024x1024xf32>
    %cst = arith.constant dense<0.000000e+00> : vector<2x1024xf32>
    %5 = tpu.matmul %3, %4, %cst {dimension_numbers = #tpu.dot_dimension_numbers<[1], [0], [0], [1], [0, 0, 1, 1], [], []>} : vector<2x1024xf32>, vector<1024x1024xf32>, vector<2x1024xf32> -> vector<2x1024xf32>
    %6 = arith.index_cast %arg0 : i32 to index
    %c0_4 = arith.constant 0 : index
    %c0_5 = arith.constant 0 : index
    %7 = vector.load %arg3[%6, %c0_4, %c0_5] : memref<2x2x1024xf32, #tpu.memory_space<vmem>>, vector<1x2x1024xf32>
    %8 = vector.shape_cast %7 : vector<1x2x1024xf32> to vector<2x1024xf32>
    %9 = vector.extract_strided_slice %8 {offsets = [0, 0], sizes = [1, 1024], strides = [1, 1]} : vector<2x1024xf32> to vector<1x1024xf32>
    %10 = vector.extract_strided_slice %8 {offsets = [1, 0], sizes = [1, 1024], strides = [1, 1]} : vector<2x1024xf32> to vector<1x1024xf32>
    %cst_6 = arith.constant dense<0.000000e+00> : vector<1024xf32>
    %11 = vector.multi_reduction <add>, %5, %cst_6 [0] : vector<2x1024xf32> to vector<1024xf32>
    %12 = vector.shape_cast %11 : vector<1024xf32> to vector<1x1024xf32>
    %cst_7 = arith.constant 2.000000e+00 : f32
    %13 = vector.broadcast %cst_7 : f32 to vector<1x1024xf32>
    %14 = arith.divf %12, %13 : vector<1x1024xf32>
    %15 = vector.broadcast %14 : vector<1x1024xf32> to vector<2x1024xf32>
    %16 = arith.subf %5, %15 : vector<2x1024xf32>
    %17 = vector.broadcast %14 : vector<1x1024xf32> to vector<2x1024xf32>
    %18 = arith.subf %5, %17 : vector<2x1024xf32>
    %19 = arith.mulf %16, %18 : vector<2x1024xf32>
    %cst_8 = arith.constant dense<0.000000e+00> : vector<1024xf32>
    %20 = vector.multi_reduction <add>, %19, %cst_8 [0] : vector<2x1024xf32> to vector<1024xf32>
    %21 = vector.shape_cast %20 : vector<1024xf32> to vector<1x1024xf32>
    %cst_9 = arith.constant 2.000000e+00 : f32
    %22 = vector.broadcast %cst_9 : f32 to vector<1x1024xf32>
    %23 = arith.divf %21, %22 : vector<1x1024xf32>
    %24 = vector.broadcast %14 : vector<1x1024xf32> to vector<2x1024xf32>
    %25 = arith.subf %5, %24 : vector<2x1024xf32>
    %cst_10 = arith.constant 9.99999974E-6 : f32
    %26 = vector.broadcast %cst_10 : f32 to vector<1x1024xf32>
    %27 = arith.addf %23, %26 : vector<1x1024xf32>
    %28 = math.rsqrt %27 : vector<1x1024xf32>
    %29 = vector.broadcast %28 : vector<1x1024xf32> to vector<2x1024xf32>
    %30 = arith.mulf %25, %29 : vector<2x1024xf32>
    %31 = vector.broadcast %9 : vector<1x1024xf32> to vector<2x1024xf32>
    %32 = arith.mulf %30, %31 : vector<2x1024xf32>
    %33 = vector.broadcast %10 : vector<1x1024xf32> to vector<2x1024xf32>
    %34 = arith.addf %32, %33 : vector<2x1024xf32>
    %cst_11 = arith.constant 0.000000e+00 : f32
    %35 = vector.broadcast %cst_11 : f32 to vector<2x1024xf32>
    %36 = arith.maximumf %34, %35 : vector<2x1024xf32>
    %c0_12 = arith.constant 0 : index
    %c0_13 = arith.constant 0 : index
    %37 = vector.load %arg11[%c0_12, %c0_13] : memref<2x512xf32, #tpu.memory_space<vmem>>, vector<2x512xf32>
    %c0_14 = arith.constant 0 : index
    %c0_15 = arith.constant 0 : index
    %38 = vector.load %arg4[%c0_14, %c0_15] : memref<1024x512xf32, #tpu.memory_space<vmem>>, vector<1024x512xf32>
    %cst_16 = arith.constant dense<0.000000e+00> : vector<2x512xf32>
    %39 = tpu.matmul %36, %38, %cst_16 {dimension_numbers = #tpu.dot_dimension_numbers<[1], [0], [0], [1], [0, 0, 1, 1], [], []>} : vector<2x1024xf32>, vector<1024x512xf32>, vector<2x512xf32> -> vector<2x512xf32>
    %40 = arith.addf %37, %39 : vector<2x512xf32>
    %c0_17 = arith.constant 0 : index
    %c0_18 = arith.constant 0 : index
    %41 = vector.load %arg11[%c0_17, %c0_18] : memref<2x512xf32, #tpu.memory_space<vmem>>, vector<2x512xf32>
    tpu.vector_store %arg11[%c0_17, %c0_18], %40 {strides = array<i32>} : memref<2x512xf32, #tpu.memory_space<vmem>>, vector<2x512xf32>,
    %c1_i32 = arith.constant 1 : i32
    %42 = arith.cmpi eq, %arg0, %c1_i32 : i32
    %43 = arith.extui %42 : i1 to i32
    %c0_i32_19 = arith.constant 0 : i32
    %44 = arith.cmpi ne, %43, %c0_i32_19 : i32
    scf.if %44 {
      %c0_20 = arith.constant 0 : index
      %c0_21 = arith.constant 0 : index
      %45 = vector.load %arg11[%c0_20, %c0_21] : memref<2x512xf32, #tpu.memory_space<vmem>>, vector<2x512xf32>
      %c0_22 = arith.constant 0 : index
      %c0_23 = arith.constant 0 : index
      %46 = vector.load %arg5[%c0_22, %c0_23] : memref<2x512xf32, #tpu.memory_space<vmem>>, vector<1x512xf32>
      %c1 = arith.constant 1 : index
      %c0_24 = arith.constant 0 : index
      %47 = vector.load %arg5[%c1, %c0_24] : memref<2x512xf32, #tpu.memory_space<vmem>>, vector<1x512xf32>
      %cst_25 = arith.constant dense<0.000000e+00> : vector<512xf32>
      %48 = vector.multi_reduction <add>, %45, %cst_25 [0] : vector<2x512xf32> to vector<512xf32>
      %49 = vector.shape_cast %48 : vector<512xf32> to vector<1x512xf32>
      %cst_26 = arith.constant 2.000000e+00 : f32
      %50 = vector.broadcast %cst_26 : f32 to vector<1x512xf32>
      %51 = arith.divf %49, %50 : vector<1x512xf32>
      %52 = vector.broadcast %51 : vector<1x512xf32> to vector<2x512xf32>
      %53 = arith.subf %45, %52 : vector<2x512xf32>
      %54 = vector.broadcast %51 : vector<1x512xf32> to vector<2x512xf32>
      %55 = arith.subf %45, %54 : vector<2x512xf32>
      %56 = arith.mulf %53, %55 : vector<2x512xf32>
      %cst_27 = arith.constant dense<0.000000e+00> : vector<512xf32>
      %57 = vector.multi_reduction <add>, %56, %cst_27 [0] : vector<2x512xf32> to vector<512xf32>
      %58 = vector.shape_cast %57 : vector<512xf32> to vector<1x512xf32>
      %cst_28 = arith.constant 2.000000e+00 : f32
      %59 = vector.broadcast %cst_28 : f32 to vector<1x512xf32>
      %60 = arith.divf %58, %59 : vector<1x512xf32>
      %61 = vector.broadcast %51 : vector<1x512xf32> to vector<2x512xf32>
      %62 = arith.subf %45, %61 : vector<2x512xf32>
      %cst_29 = arith.constant 9.99999974E-6 : f32
      %63 = vector.broadcast %cst_29 : f32 to vector<1x512xf32>
      %64 = arith.addf %60, %63 : vector<1x512xf32>
      %65 = math.rsqrt %64 : vector<1x512xf32>
      %66 = vector.broadcast %65 : vector<1x512xf32> to vector<2x512xf32>
      %67 = arith.mulf %62, %66 : vector<2x512xf32>
      %68 = vector.broadcast %46 : vector<1x512xf32> to vector<2x512xf32>
      %69 = arith.mulf %67, %68 : vector<2x512xf32>
      %70 = vector.broadcast %47 : vector<1x512xf32> to vector<2x512xf32>
      %71 = arith.addf %69, %70 : vector<2x512xf32>
      %cst_30 = arith.constant 0.000000e+00 : f32
      %72 = vector.broadcast %cst_30 : f32 to vector<2x512xf32>
      %73 = arith.maximumf %71, %72 : vector<2x512xf32>
      %c0_31 = arith.constant 0 : index
      %c0_32 = arith.constant 0 : index
      %74 = vector.load %arg6[%c0_31, %c0_32] : memref<512x128xf32, #tpu.memory_space<vmem>>, vector<512x128xf32>
      %cst_33 = arith.constant dense<0.000000e+00> : vector<2x128xf32>
      %75 = tpu.matmul %73, %74, %cst_33 {dimension_numbers = #tpu.dot_dimension_numbers<[1], [0], [0], [1], [0, 0, 1, 1], [], []>} : vector<2x512xf32>, vector<512x128xf32>, vector<2x128xf32> -> vector<2x128xf32>
      %c0_34 = arith.constant 0 : index
      %c0_35 = arith.constant 0 : index
      %76 = vector.load %arg7[%c0_34, %c0_35] : memref<2x128xf32, #tpu.memory_space<vmem>>, vector<1x128xf32>
      %c1_36 = arith.constant 1 : index
      %c0_37 = arith.constant 0 : index
      %77 = vector.load %arg7[%c1_36, %c0_37] : memref<2x128xf32, #tpu.memory_space<vmem>>, vector<1x128xf32>
      %cst_38 = arith.constant dense<0.000000e+00> : vector<128xf32>
      %78 = vector.multi_reduction <add>, %75, %cst_38 [0] : vector<2x128xf32> to vector<128xf32>
      %79 = vector.shape_cast %78 : vector<128xf32> to vector<1x128xf32>
      %cst_39 = arith.constant 2.000000e+00 : f32
      %80 = vector.broadcast %cst_39 : f32 to vector<1x128xf32>
      %81 = arith.divf %79, %80 : vector<1x128xf32>
      %82 = vector.broadcast %81 : vector<1x128xf32> to vector<2x128xf32>
      %83 = arith.subf %75, %82 : vector<2x128xf32>
      %84 = vector.broadcast %81 : vector<1x128xf32> to vector<2x128xf32>
      %85 = arith.subf %75, %84 : vector<2x128xf32>
      %86 = arith.mulf %83, %85 : vector<2x128xf32>
      %cst_40 = arith.constant dense<0.000000e+00> : vector<128xf32>
      %87 = vector.multi_reduction <add>, %86, %cst_40 [0] : vector<2x128xf32> to vector<128xf32>
      %88 = vector.shape_cast %87 : vector<128xf32> to vector<1x128xf32>
      %cst_41 = arith.constant 2.000000e+00 : f32
      %89 = vector.broadcast %cst_41 : f32 to vector<1x128xf32>
      %90 = arith.divf %88, %89 : vector<1x128xf32>
      %91 = vector.broadcast %81 : vector<1x128xf32> to vector<2x128xf32>
      %92 = arith.subf %75, %91 : vector<2x128xf32>
      %cst_42 = arith.constant 9.99999974E-6 : f32
      %93 = vector.broadcast %cst_42 : f32 to vector<1x128xf32>
      %94 = arith.addf %90, %93 : vector<1x128xf32>
      %95 = math.rsqrt %94 : vector<1x128xf32>
      %96 = vector.broadcast %95 : vector<1x128xf32> to vector<2x128xf32>
      %97 = arith.mulf %92, %96 : vector<2x128xf32>
      %98 = vector.broadcast %76 : vector<1x128xf32> to vector<2x128xf32>
      %99 = arith.mulf %97, %98 : vector<2x128xf32>
      %100 = vector.broadcast %77 : vector<1x128xf32> to vector<2x128xf32>
      %101 = arith.addf %99, %100 : vector<2x128xf32>
      %cst_43 = arith.constant 0.000000e+00 : f32
      %102 = vector.broadcast %cst_43 : f32 to vector<2x128xf32>
      %103 = arith.maximumf %101, %102 : vector<2x128xf32>
      %c0_44 = arith.constant 0 : index
      %c0_45 = arith.constant 0 : index
      %104 = vector.load %arg8[%c0_44, %c0_45] : memref<128x23xf32, #tpu.memory_space<vmem>>, vector<128x23xf32>
      %cst_46 = arith.constant dense<0.000000e+00> : vector<2x23xf32>
      %105 = tpu.matmul %103, %104, %cst_46 {dimension_numbers = #tpu.dot_dimension_numbers<[1], [0], [0], [1], [0, 0, 1, 1], [], []>} : vector<2x128xf32>, vector<128x23xf32>, vector<2x23xf32> -> vector<2x23xf32>
      %c0_47 = arith.constant 0 : index
      %c0_48 = arith.constant 0 : index
      %106 = vector.load %arg9[%c0_47, %c0_48] : memref<1x23xf32, #tpu.memory_space<vmem>>, vector<1x23xf32>
      %107 = vector.broadcast %106 : vector<1x23xf32> to vector<2x23xf32>
      %108 = arith.addf %105, %107 : vector<2x23xf32>
      %c0_49 = arith.constant 0 : index
      %c0_50 = arith.constant 0 : index
      %109 = vector.load %arg10[%c0_49, %c0_50] : memref<2x23xf32, #tpu.memory_space<vmem>>, vector<2x23xf32>
      tpu.vector_store %arg10[%c0_49, %c0_50], %108 {strides = array<i32>} : memref<2x23xf32, #tpu.memory_space<vmem>>, vector<2x23xf32>,
    } else {
    }
    return
  }
  func.func @transform_0(%arg0: i32) -> (i32, i32) {
    %c0_i32 = arith.constant 0 : i32
    %c0_i32_0 = arith.constant 0 : i32
    %c0_i32_1 = arith.constant 0 : i32
    return %c0_i32, %c0_i32_0 : i32, i32
  }
  func.func @transform_1(%arg0: i32) -> (i32, i32) {
    %c0_i32 = arith.constant 0 : i32
    %c0_i32_0 = arith.constant 0 : i32
    return %c0_i32, %arg0 : i32, i32
  }
  func.func @transform_2(%arg0: i32) -> (i32, i32, i32) {
    %c0_i32 = arith.constant 0 : i32
    %c0_i32_0 = arith.constant 0 : i32
    %c0_i32_1 = arith.constant 0 : i32
    %c0_i32_2 = arith.constant 0 : i32
    return %c0_i32, %c0_i32_0, %c0_i32_1 : i32, i32, i32
  }
  func.func @transform_3(%arg0: i32) -> (i32, i32) {
    %c0_i32 = arith.constant 0 : i32
    %c0_i32_0 = arith.constant 0 : i32
    return %arg0, %c0_i32 : i32, i32
  }
  func.func @transform_4(%arg0: i32) -> (i32, i32) {
    %c0_i32 = arith.constant 0 : i32
    %c0_i32_0 = arith.constant 0 : i32
    %c0_i32_1 = arith.constant 0 : i32
    return %c0_i32, %c0_i32_0 : i32, i32
  }
  func.func @transform_5(%arg0: i32) -> (i32, i32) {
    %c0_i32 = arith.constant 0 : i32
    %c0_i32_0 = arith.constant 0 : i32
    %c0_i32_1 = arith.constant 0 : i32
    return %c0_i32, %c0_i32_0 : i32, i32
  }
  func.func @transform_6(%arg0: i32) -> (i32, i32) {
    %c0_i32 = arith.constant 0 : i32
    %c0_i32_0 = arith.constant 0 : i32
    %c0_i32_1 = arith.constant 0 : i32
    return %c0_i32, %c0_i32_0 : i32, i32
  }
  func.func @transform_7(%arg0: i32) -> (i32, i32) {
    %c0_i32 = arith.constant 0 : i32
    %c0_i32_0 = arith.constant 0 : i32
    %c0_i32_1 = arith.constant 0 : i32
    return %c0_i32, %c0_i32_0 : i32, i32
  }
  func.func @transform_8(%arg0: i32) -> (i32, i32) {
    %c0_i32 = arith.constant 0 : i32
    %c0_i32_0 = arith.constant 0 : i32
    %c0_i32_1 = arith.constant 0 : i32
    return %c0_i32, %c0_i32_0 : i32, i32
  }
  func.func @transform_9(%arg0: i32) -> (i32, i32) {
    %c0_i32 = arith.constant 0 : i32
    %c0_i32_0 = arith.constant 0 : i32
    %c0_i32_1 = arith.constant 0 : i32
    return %c0_i32, %c0_i32_0 : i32, i32
  }
}

</mosaic_0001>

<llo_original>
// kernel: network_forward.1
$region0: #{network_forward.1}
  #allocation0 [shape = 'u32[]', space=smem, size = 0x4, offset = 0x4, fixed_abs, tag = 'smem constant byte address 0x4 - core index']
  #allocation1 [shape = 'u32[72,128]{1,0:T(1,128)}', space=vmem, size = 0x9000, scoped, tag = 'internal scratch']
  #allocation2 [shape = 'f32[2,512]{1,0:T(2,128)}', space=vmem, size = 0x1000, scoped, tag = 'scratch operand']
  %s0 = inlined_call_operand.vmem [shape: f32[2,1024], index: 0, kind: input, shape index: {}]
  %s1 = inlined_call_operand.hbm [shape: f32[1024,2048], index: 1, kind: input, shape index: {}]
  %s2 = inlined_call_operand.hbm [shape: f32[2,2,1024], index: 2, kind: input, shape index: {}]
  %s3 = inlined_call_operand.hbm [shape: f32[2048,512], index: 3, kind: input, shape index: {}]
  %s4 = inlined_call_operand.hbm [shape: f32[2,512], index: 4, kind: input, shape index: {}]
  %s5 = inlined_call_operand.hbm [shape: f32[512,128], index: 5, kind: input, shape index: {}]
  %s6 = inlined_call_operand.hbm [shape: f32[2,128], index: 6, kind: input, shape index: {}]
  %s7 = inlined_call_operand.vmem [shape: f32[128,23], index: 7, kind: input, shape index: {}]
  %s8 = inlined_call_operand.hbm [shape: f32[1,23], index: 8, kind: input, shape index: {}]
  %s9 = inlined_call_operand.hbm [shape: f32[2,23], index: 9, kind: output, shape index: {}]
  %s10 = sld [smem:[#allocation0]]
  $region105: #{network_forward.1} parent=0
    _
  %s12 = ssub.s32 1, %s10
  %s13 = scalar_select 0, %s12, %s10
  $region1: #{network_forward.1} parent=0
    #allocation3 [shape = 'u8[8388608]{0}', space=vmem, size = 0x800000, scoped, tag = 'input window, operand 1']
    #allocation4 [shape = 's32[2]{0}', space=sflag, size = 0x8, scoped, tag = 'scoped memory for network_forward.1']
    #allocation5 [shape = 's32[2]{0}', space=sflag, size = 0x8, scoped, tag = 'scoped memory for network_forward.1']
    #allocation6 [shape = 'u8[16384]{0}', space=vmem, size = 0x4000, scoped, tag = 'input window, operand 2, single buffered']
    #allocation7 [shape = 's32[1]{0}', space=sflag, size = 0x4, scoped, tag = 'scoped memory for network_forward.1']
    #allocation8 [shape = 'u8[4194304]{0}', space=vmem, size = 0x400000, scoped, tag = 'input window, operand 3']
    #allocation9 [shape = 'u8[4096]{0}', space=vmem, size = 0x1000, scoped, tag = 'input window, operand 4, single buffered']
    #allocation10 [shape = 'u8[262144]{0}', space=vmem, size = 0x40000, scoped, tag = 'input window, operand 5, single buffered']
    #allocation11 [shape = 's32[1]{0}', space=sflag, size = 0x4, scoped, tag = 'scoped memory for network_forward.1']
    #allocation12 [shape = 'u8[1024]{0}', space=vmem, size = 0x400, scoped, tag = 'input window, operand 6, single buffered']
    #allocation13 [shape = 'u8[512]{0}', space=vmem, size = 0x400, scoped, tag = 'input window, operand 8, single buffered']
    #allocation14 [shape = 's32[1]{0}', space=sflag, size = 0x4, scoped, tag = 'scoped memory for network_forward.1']
    #allocation15 [shape = 'u8[1024]{0}', space=vmem, size = 0x400, scoped, tag = 'output window, operand 0, single buffered']
    %14 = vsyncpa [#allocation4], 0
    %s15 = scalar_lea.sflag [#allocation4], 1
    %16 = vsyncpa %s15, 0
    %17 = vsyncpa [#allocation7], 0
    %18 = vsyncpa [#allocation11], 0
    %19 = vsyncpa [#allocation14], 0
    %20 = vsyncpa [#allocation5], 0
    loop: start=0, step=1, limit=4
    $region2: #{network_forward.1} parent=1 // loop_pre_header
      _
    $region3: #{network_forward.1} parent=1 // loop_header
      %s22 = sphi 0, %s26
      %p23 = scmp.ge.s32.totalorder %s22, 4
      %s30 = sphi 0, %s30
      %s32 = sphi 0, %s30
      %s33 = sphi 0, %s32
      %s47 = sphi 0, %s33
      %s53 = sphi 0, %s55
      %s56 = sphi 0, %s53
      %s57 = sphi 0, %s56
      %s73 = sphi 0, %s57
      %s77 = sphi 0, %s77
      %s79 = sphi 0, %s77
      %s80 = sphi 0, %s79
      %s94 = sphi 0, %s80
      %s100 = sphi 0, %s102
      %s103 = sphi 0, %s100
      %s104 = sphi 0, %s103
      %s120 = sphi 0, %s104
      %s124 = sphi 0, %s124
      %s126 = sphi 0, %s124
      %s127 = sphi 0, %s126
      %s141 = sphi 0, %s127
      %s145 = sphi 0, %s145
      %s147 = sphi 0, %s145
      %s148 = sphi 0, %s147
      %s162 = sphi 0, %s148
      %s166 = sphi 0, %s166
      %s168 = sphi 0, %s166
      %s169 = sphi 0, %s168
      %s183 = sphi 0, %s169
      %s187 = sphi 0, %s187
      %s189 = sphi 0, %s187
      %s190 = sphi 0, %s189
      %s204 = sphi 0, %s190
      %s208 = sphi 0, %s208
      %s210 = sphi 0, %s208
      %s211 = sphi 0, %s210
      %s225 = sphi 0, %s211
      %s229 = sphi 0, %s229
      %s231 = sphi 0, %s229
      %s232 = sphi 0, %s231
      %s246 = sphi 0, %s232
    $region4: #{network_forward.1} parent=1 // loop_header_branch
      %25 = sbr.rel (%p23) target = $region8
    $region5: #{network_forward.1} parent=1 // loop_body
      %s27 = ssub.s32 %s22, 1
      %s28 = ssub.s32 %s22, 2
      %s29 = sadd.s32 %s22, 1
      %s31 = sadd.s32 %s30, 1
      %p34 = scmp.eq.s32.totalorder %s22, 1
      %p35 = scmp.ne.s32.totalorder %s30, %s32
      %p36 = scmp.eq.s32.totalorder %s22, 0
      %p37 = por %p35, %p36
      %p38 = scmp.ne.s32.totalorder %s30, %s32
      %p39 = scmp.eq.s32.totalorder %s27, 1
      %p40 = por %p38, %p39
      %p41 = scmp.ne.s32.totalorder %s32, %s33
      %p42 = scmp.eq.s32.totalorder %s27, 0
      %p43 = por %p41, %p42
      %p44 = scmp.ne.s32.totalorder %s32, %s33
      %p45 = scmp.eq.s32.totalorder %s28, 1
      %p46 = por %p44, %p45
      %p48 = scmp.ne.s32.totalorder %s33, %s47
      %p49 = scmp.eq.s32.totalorder %s28, 0
      %p50 = por %p48, %p49
      %s51 = ssub.s32 %s22, %s29
      %p52 = scmp.eq.s32.totalorder %s51, 0
      %s54 = sadd.s32 %s53, 1
      %s55 = scalar_select %p52, %s53, %s54
      %p58 = pneg %p52
      %p59 = scmp.eq.s32.totalorder %s22, 1
      %p60 = por %p58, %p59
      %p61 = scmp.ne.s32.totalorder %s53, %s56
      %p62 = scmp.eq.s32.totalorder %s22, 0
      %p63 = por %p61, %p62
      %p64 = scmp.ne.s32.totalorder %s53, %s56
      %p65 = scmp.eq.s32.totalorder %s27, 1
      %p66 = por %p64, %p65
      %p67 = scmp.ne.s32.totalorder %s56, %s57
      %p68 = scmp.eq.s32.totalorder %s27, 0
      %p69 = por %p67, %p68
      %p70 = scmp.ne.s32.totalorder %s56, %s57
      %p71 = scmp.eq.s32.totalorder %s28, 1
      %p72 = por %p70, %p71
      %p74 = scmp.ne.s32.totalorder %s57, %s73
      %p75 = scmp.eq.s32.totalorder %s28, 0
      %p76 = por %p74, %p75
      %s78 = sadd.s32 %s77, 1
      %p81 = scmp.eq.s32.totalorder %s22, 1
      %p82 = scmp.ne.s32.totalorder %s77, %s79
      %p83 = scmp.eq.s32.totalorder %s22, 0
      %p84 = por %p82, %p83
      %p85 = scmp.ne.s32.totalorder %s77, %s79
      %p86 = scmp.eq.s32.totalorder %s27, 1
      %p87 = por %p85, %p86
      %p88 = scmp.ne.s32.totalorder %s79, %s80
      %p89 = scmp.eq.s32.totalorder %s27, 0
      %p90 = por %p88, %p89
      %p91 = scmp.ne.s32.totalorder %s79, %s80
      %p92 = scmp.eq.s32.totalorder %s28, 1
      %p93 = por %p91, %p92
      %p95 = scmp.ne.s32.totalorder %s80, %s94
      %p96 = scmp.eq.s32.totalorder %s28, 0
      %p97 = por %p95, %p96
      %s98 = ssub.s32 %s22, %s29
      %p99 = scmp.eq.s32.totalorder %s98, 0
      %s101 = sadd.s32 %s100, 1
      %s102 = scalar_select %p99, %s100, %s101
      %p105 = pneg %p99
      %p106 = scmp.eq.s32.totalorder %s22, 1
      %p107 = por %p105, %p106
      %p108 = scmp.ne.s32.totalorder %s100, %s103
      %p109 = scmp.eq.s32.totalorder %s22, 0
      %p110 = por %p108, %p109
      %p111 = scmp.ne.s32.totalorder %s100, %s103
      %p112 = scmp.eq.s32.totalorder %s27, 1
      %p113 = por %p111, %p112
      %p114 = scmp.ne.s32.totalorder %s103, %s104
      %p115 = scmp.eq.s32.totalorder %s27, 0
      %p116 = por %p114, %p115
      %p117 = scmp.ne.s32.totalorder %s103, %s104
      %p118 = scmp.eq.s32.totalorder %s28, 1
      %p119 = por %p117, %p118
      %p121 = scmp.ne.s32.totalorder %s104, %s120
      %p122 = scmp.eq.s32.totalorder %s28, 0
      %p123 = por %p121, %p122
      %s125 = sadd.s32 %s124, 1
      %p128 = scmp.eq.s32.totalorder %s22, 1
      %p129 = scmp.ne.s32.totalorder %s124, %s126
      %p130 = scmp.eq.s32.totalorder %s22, 0
      %p131 = por %p129, %p130
      %p132 = scmp.ne.s32.totalorder %s124, %s126
      %p133 = scmp.eq.s32.totalorder %s27, 1
      %p134 = por %p132, %p133
      %p135 = scmp.ne.s32.totalorder %s126, %s127
      %p136 = scmp.eq.s32.totalorder %s27, 0
      %p137 = por %p135, %p136
      %p138 = scmp.ne.s32.totalorder %s126, %s127
      %p139 = scmp.eq.s32.totalorder %s28, 1
      %p140 = por %p138, %p139
      %p142 = scmp.ne.s32.totalorder %s127, %s141
      %p143 = scmp.eq.s32.totalorder %s28, 0
      %p144 = por %p142, %p143
      %s146 = sadd.s32 %s145, 1
      %p149 = scmp.eq.s32.totalorder %s22, 1
      %p150 = scmp.ne.s32.totalorder %s145, %s147
      %p151 = scmp.eq.s32.totalorder %s22, 0
      %p152 = por %p150, %p151
      %p153 = scmp.ne.s32.totalorder %s145, %s147
      %p154 = scmp.eq.s32.totalorder %s27, 1
      %p155 = por %p153, %p154
      %p156 = scmp.ne.s32.totalorder %s147, %s148
      %p157 = scmp.eq.s32.totalorder %s27, 0
      %p158 = por %p156, %p157
      %p159 = scmp.ne.s32.totalorder %s147, %s148
      %p160 = scmp.eq.s32.totalorder %s28, 1
      %p161 = por %p159, %p160
      %p163 = scmp.ne.s32.totalorder %s148, %s162
      %p164 = scmp.eq.s32.totalorder %s28, 0
      %p165 = por %p163, %p164
      %s167 = sadd.s32 %s166, 1
      %p170 = scmp.eq.s32.totalorder %s22, 1
      %p171 = scmp.ne.s32.totalorder %s166, %s168
      %p172 = scmp.eq.s32.totalorder %s22, 0
      %p173 = por %p171, %p172
      %p174 = scmp.ne.s32.totalorder %s166, %s168
      %p175 = scmp.eq.s32.totalorder %s27, 1
      %p176 = por %p174, %p175
      %p177 = scmp.ne.s32.totalorder %s168, %s169
      %p178 = scmp.eq.s32.totalorder %s27, 0
      %p179 = por %p177, %p178
      %p180 = scmp.ne.s32.totalorder %s168, %s169
      %p181 = scmp.eq.s32.totalorder %s28, 1
      %p182 = por %p180, %p181
      %p184 = scmp.ne.s32.totalorder %s169, %s183
      %p185 = scmp.eq.s32.totalorder %s28, 0
      %p186 = por %p184, %p185
      %s188 = sadd.s32 %s187, 1
      %p191 = scmp.eq.s32.totalorder %s22, 1
      %p192 = scmp.ne.s32.totalorder %s187, %s189
      %p193 = scmp.eq.s32.totalorder %s22, 0
      %p194 = por %p192, %p193
      %p195 = scmp.ne.s32.totalorder %s187, %s189
      %p196 = scmp.eq.s32.totalorder %s27, 1
      %p197 = por %p195, %p196
      %p198 = scmp.ne.s32.totalorder %s189, %s190
      %p199 = scmp.eq.s32.totalorder %s27, 0
      %p200 = por %p198, %p199
      %p201 = scmp.ne.s32.totalorder %s189, %s190
      %p202 = scmp.eq.s32.totalorder %s28, 1
      %p203 = por %p201, %p202
      %p205 = scmp.ne.s32.totalorder %s190, %s204
      %p206 = scmp.eq.s32.totalorder %s28, 0
      %p207 = por %p205, %p206
      %s209 = sadd.s32 %s208, 1
      %p212 = scmp.eq.s32.totalorder %s22, 1
      %p213 = scmp.ne.s32.totalorder %s208, %s210
      %p214 = scmp.eq.s32.totalorder %s22, 0
      %p215 = por %p213, %p214
      %p216 = scmp.ne.s32.totalorder %s208, %s210
      %p217 = scmp.eq.s32.totalorder %s27, 1
      %p218 = por %p216, %p217
      %p219 = scmp.ne.s32.totalorder %s210, %s211
      %p220 = scmp.eq.s32.totalorder %s27, 0
      %p221 = por %p219, %p220
      %p222 = scmp.ne.s32.totalorder %s210, %s211
      %p223 = scmp.eq.s32.totalorder %s28, 1
      %p224 = por %p222, %p223
      %p226 = scmp.ne.s32.totalorder %s211, %s225
      %p227 = scmp.eq.s32.totalorder %s28, 0
      %p228 = por %p226, %p227
      %s230 = sadd.s32 %s229, 1
      %p233 = scmp.eq.s32.totalorder %s22, 1
      %p234 = scmp.ne.s32.totalorder %s229, %s231
      %p235 = scmp.eq.s32.totalorder %s22, 0
      %p236 = por %p234, %p235
      %p237 = scmp.ne.s32.totalorder %s229, %s231
      %p238 = scmp.eq.s32.totalorder %s27, 1
      %p239 = por %p237, %p238
      %p240 = scmp.ne.s32.totalorder %s231, %s232
      %p241 = scmp.eq.s32.totalorder %s27, 0
      %p242 = por %p240, %p241
      %p243 = scmp.ne.s32.totalorder %s231, %s232
      %p244 = scmp.eq.s32.totalorder %s28, 1
      %p245 = por %p243, %p244
      %p247 = scmp.ne.s32.totalorder %s232, %s246
      %p248 = scmp.eq.s32.totalorder %s28, 0
      %p249 = por %p247, %p248
      %p250 = scmp.le.s32.totalorder 1, %s22
      %p251 = scmp.lt.s32.totalorder %s22, 3
      %p252 = pnand %p250, %p251
      %p253 = pneg %p252
      // Predicated region
      $region9: #{network_forward.1} parent=5 // pred_check
        _
      $region10: #{network_forward.1} parent=5 // pred_check_branch
        %255 = sbr.rel (%p252) target = $region12
      $region11: #{network_forward.1} parent=5 // pred_region
        %s256 = ssub.s32 %s22, 1
        // Predicated region
        $region13: #{network_forward.1} parent=11 // pred_check
          %p257 = pneg %p43
        $region14: #{network_forward.1} parent=11 // pred_check_branch
          %259 = sbr.rel (%p257) target = $region16
        $region15: #{network_forward.1} parent=11 // pred_region
          _
        $region16: #{network_forward.1} parent=11 // pred_fallthru
          _
        // Predicated region
        $region17: #{network_forward.1} parent=11 // pred_check
          %p260 = pneg %p90
        $region18: #{network_forward.1} parent=11 // pred_check_branch
          %262 = sbr.rel (%p260) target = $region20
        $region19: #{network_forward.1} parent=11 // pred_region
          %264 = vsyncadd [#allocation7], 0
          %s265 = sshll.u32 %s2, 4
          %s266 = int_to_ptr.hbm [resolvable:$true] %s265
          %s267 = sshll.u32 [#allocation6], 4
          %s268 = int_to_ptr.vmem [resolvable:$true] %s267
          %273 = dma.hbm_to_vmem [thread:$0]  %s266, 512, %s268, [#allocation7], 256, 256, 16
        $region20: #{network_forward.1} parent=11 // pred_fallthru
          _
        // Predicated region
        $region21: #{network_forward.1} parent=11 // pred_check
          %p274 = pneg %p137
        $region22: #{network_forward.1} parent=11 // pred_check_branch
          %276 = sbr.rel (%p274) target = $region24
        $region23: #{network_forward.1} parent=11 // pred_region
          %278 = vsyncadd [#allocation7], 0
          %s280 = sshll.u32 %s4, 4
          %s281 = int_to_ptr.hbm [resolvable:$true] %s280
          %s282 = sshll.u32 [#allocation9], 4
          %s283 = int_to_ptr.vmem [resolvable:$true] %s282
          %285 = dma.hbm_to_vmem [thread:$0]  %s281, 128, %s283, [#allocation7]
        $region24: #{network_forward.1} parent=11 // pred_fallthru
          _
        // Predicated region
        $region25: #{network_forward.1} parent=11 // pred_check
          %p286 = pneg %p158
        $region26: #{network_forward.1} parent=11 // pred_check_branch
          %288 = sbr.rel (%p286) target = $region28
        $region27: #{network_forward.1} parent=11 // pred_region
          %290 = vsyncadd [#allocation11], 0
          %s291 = sshll.u32 %s5, 4
          %s292 = int_to_ptr.hbm [resolvable:$true] %s291
          %s293 = sshll.u32 [#allocation10], 4
          %s294 = int_to_ptr.vmem [resolvable:$true] %s293
          %299 = dma.hbm_to_vmem [thread:$0]  %s292, 8192, %s294, [#allocation11], 128, 128, 8
        $region28: #{network_forward.1} parent=11 // pred_fallthru
          _
        // Predicated region
        $region29: #{network_forward.1} parent=11 // pred_check
          %p300 = pneg %p179
        $region30: #{network_forward.1} parent=11 // pred_check_branch
          %302 = sbr.rel (%p300) target = $region32
        $region31: #{network_forward.1} parent=11 // pred_region
          %304 = vsyncadd [#allocation11], 0
          %s306 = sshll.u32 %s6, 4
          %s307 = int_to_ptr.hbm [resolvable:$true] %s306
          %s308 = sshll.u32 [#allocation12], 4
          %s309 = int_to_ptr.vmem [resolvable:$true] %s308
          %311 = dma.hbm_to_vmem [thread:$0]  %s307, 32, %s309, [#allocation11]
        $region32: #{network_forward.1} parent=11 // pred_fallthru
          _
        // Predicated region
        $region33: #{network_forward.1} parent=11 // pred_check
          %p312 = pneg %p200
        $region34: #{network_forward.1} parent=11 // pred_check_branch
          %314 = sbr.rel (%p312) target = $region36
        $region35: #{network_forward.1} parent=11 // pred_region
          _
        $region36: #{network_forward.1} parent=11 // pred_fallthru
          _
        // Predicated region
        $region37: #{network_forward.1} parent=11 // pred_check
          %p315 = pneg %p221
        $region38: #{network_forward.1} parent=11 // pred_check_branch
          %317 = sbr.rel (%p315) target = $region40
        $region39: #{network_forward.1} parent=11 // pred_region
          %319 = vsyncadd [#allocation14], 0
          %s321 = sshll.u32 %s8, 4
          %s322 = int_to_ptr.hbm [resolvable:$true] %s321
          %s323 = sshll.u32 [#allocation13], 4
          %s324 = int_to_ptr.vmem [resolvable:$true] %s323
          %326 = dma.hbm_to_vmem [thread:$0]  %s322, 16, %s324, [#allocation14]
        $region40: #{network_forward.1} parent=11 // pred_fallthru
          _
      $region12: #{network_forward.1} parent=5 // pred_fallthru
        _
      %p327 = scmp.lt.s32.totalorder %s22, 2
      // Predicated region
      $region41: #{network_forward.1} parent=5 // pred_check
        %p328 = pneg %p327
      $region42: #{network_forward.1} parent=5 // pred_check_branch
        %330 = sbr.rel (%p328) target = $region44
      $region43: #{network_forward.1} parent=5 // pred_region
        // Predicated region
        $region45: #{network_forward.1} parent=43 // pred_check
          %p331 = pneg %p63
        $region46: #{network_forward.1} parent=43 // pred_check_branch
          %333 = sbr.rel (%p331) target = $region48
        $region47: #{network_forward.1} parent=43 // pred_region
          %s334 = sand.u32 %s22, 1
          %s335 = scalar_lea.sflag [#allocation4], %s334
          %s336 = sand.u32 %s53, 1
          %s337 = smul.addr %s336, 8192
          %s338 = scalar_lea.vmem [#allocation3], %s337
          %s339 = smul.u32 8, %s22
          %341 = vsyncadd %s335, 0
          %s342 = smul.addr %s339, 8
          %s343 = scalar_lea.hbm %s1, %s342
          %s344 = sshll.u32 %s343, 4
          %s345 = int_to_ptr.hbm [resolvable:$true] %s344
          %s346 = sshll.u32 %s338, 4
          %s347 = int_to_ptr.vmem [resolvable:$true] %s346
          %352 = dma.hbm_to_vmem [thread:$0]  %s345, 131072, %s347, %s335, 2048, 1024, 64
        $region48: #{network_forward.1} parent=43 // pred_fallthru
          _
        // Predicated region
        $region49: #{network_forward.1} parent=43 // pred_check
          %p353 = pneg %p110
        $region50: #{network_forward.1} parent=43 // pred_check_branch
          %355 = sbr.rel (%p353) target = $region52
        $region51: #{network_forward.1} parent=43 // pred_region
          %s356 = sand.u32 %s22, 1
          %s357 = scalar_lea.sflag [#allocation4], %s356
          %s358 = sand.u32 %s100, 1
          %s359 = smul.addr %s358, 4096
          %s360 = scalar_lea.vmem [#allocation8], %s359
          %s361 = smul.u32 128, %s22
          %363 = vsyncadd %s357, 0
          %s364 = smul.addr %s361, 4
          %s365 = smul.addr %s364, 8
          %s366 = scalar_lea.hbm %s3, %s365
          %s367 = sshll.u32 %s366, 4
          %s368 = int_to_ptr.hbm [resolvable:$true] %s367
          %s369 = sshll.u32 %s360, 4
          %s370 = int_to_ptr.vmem [resolvable:$true] %s369
          %375 = dma.hbm_to_vmem [thread:$0]  %s368, 65536, %s370, %s357, 512, 512, 32
        $region52: #{network_forward.1} parent=43 // pred_fallthru
          _
      $region44: #{network_forward.1} parent=5 // pred_fallthru
        _
      %p376 = scmp.le.s32.totalorder 1, %s22
      %p377 = scmp.lt.s32.totalorder %s22, 3
      %p378 = pnand %p376, %p377
      %p379 = pneg %p378
      // Predicated region
      $region53: #{network_forward.1} parent=5 // pred_check
        _
      $region54: #{network_forward.1} parent=5 // pred_check_branch
        %381 = sbr.rel (%p378) target = $region56
      $region55: #{network_forward.1} parent=5 // pred_region
        %s382 = ssub.s32 %s22, 1
        %s383 = sand.u32 %s27, 1
        %s384 = scalar_lea.sflag [#allocation4], %s383
        %s385 = sand.u32 %s56, 1
        %s386 = smul.addr %s385, 8192
        %s387 = scalar_lea.vmem [#allocation3], %s386
        // Predicated region
        $region57: #{network_forward.1} parent=55 // pred_check
          %p388 = pneg %p69
        $region58: #{network_forward.1} parent=55 // pred_check_branch
          %390 = sbr.rel (%p388) target = $region60
        $region59: #{network_forward.1} parent=55 // pred_region
          %392 = dma.done %s384, 131072
        $region60: #{network_forward.1} parent=55 // pred_fallthru
          _
        // Predicated region
        $region61: #{network_forward.1} parent=55 // pred_check
          %p393 = pneg %p90
        $region62: #{network_forward.1} parent=55 // pred_check_branch
          %395 = sbr.rel (%p393) target = $region64
        $region63: #{network_forward.1} parent=55 // pred_region
          %397 = dma.done [#allocation7], 512
        $region64: #{network_forward.1} parent=55 // pred_fallthru
          _
        %s398 = sand.u32 %s27, 1
        %s399 = scalar_lea.sflag [#allocation4], %s398
        %s400 = sand.u32 %s103, 1
        %s401 = smul.addr %s400, 4096
        %s402 = scalar_lea.vmem [#allocation8], %s401
        // Predicated region
        $region65: #{network_forward.1} parent=55 // pred_check
          %p403 = pneg %p116
        $region66: #{network_forward.1} parent=55 // pred_check_branch
          %405 = sbr.rel (%p403) target = $region68
        $region67: #{network_forward.1} parent=55 // pred_region
          %407 = dma.done %s399, 65536
        $region68: #{network_forward.1} parent=55 // pred_fallthru
          _
        // Predicated region
        $region69: #{network_forward.1} parent=55 // pred_check
          %p408 = pneg %p137
        $region70: #{network_forward.1} parent=55 // pred_check_branch
          %410 = sbr.rel (%p408) target = $region72
        $region71: #{network_forward.1} parent=55 // pred_region
          %412 = dma.done [#allocation7], 128
        $region72: #{network_forward.1} parent=55 // pred_fallthru
          _
        // Predicated region
        $region73: #{network_forward.1} parent=55 // pred_check
          %p413 = pneg %p158
        $region74: #{network_forward.1} parent=55 // pred_check_branch
          %415 = sbr.rel (%p413) target = $region76
        $region75: #{network_forward.1} parent=55 // pred_region
          %417 = dma.done [#allocation11], 8192
        $region76: #{network_forward.1} parent=55 // pred_fallthru
          _
        // Predicated region
        $region77: #{network_forward.1} parent=55 // pred_check
          %p418 = pneg %p179
        $region78: #{network_forward.1} parent=55 // pred_check_branch
          %420 = sbr.rel (%p418) target = $region80
        $region79: #{network_forward.1} parent=55 // pred_region
          %422 = dma.done [#allocation11], 32
        $region80: #{network_forward.1} parent=55 // pred_fallthru
          _
        // Predicated region
        $region81: #{network_forward.1} parent=55 // pred_check
          %p423 = pneg %p221
        $region82: #{network_forward.1} parent=55 // pred_check_branch
          %425 = sbr.rel (%p423) target = $region84
        $region83: #{network_forward.1} parent=55 // pred_region
          %427 = dma.done [#allocation14], 16
        $region84: #{network_forward.1} parent=55 // pred_fallthru
          _
        %p428 = pneg %p43
        %p429 = pneg %p40
        %s430 = sand.u32 %s27, 1
        %s431 = scalar_lea.sflag [#allocation4], %s430
        %s432 = sand.u32 %s56, 1
        %s433 = smul.addr %s432, 8192
        %s434 = scalar_lea.vmem [#allocation3], %s433
        %p435 = pneg %p69
        %p436 = pneg %p66
        %p437 = pneg %p90
        %p438 = pneg %p87
        %s439 = sand.u32 %s27, 1
        %s440 = scalar_lea.sflag [#allocation4], %s439
        %s441 = sand.u32 %s103, 1
        %s442 = smul.addr %s441, 4096
        %s443 = scalar_lea.vmem [#allocation8], %s442
        %p444 = pneg %p116
        %p445 = pneg %p113
        %p446 = pneg %p137
        %p447 = pneg %p134
        %p448 = pneg %p158
        %p449 = pneg %p155
        %p450 = pneg %p179
        %p451 = pneg %p176
        %p452 = pneg %p200
        %p453 = pneg %p197
        %p454 = pneg %p221
        %p455 = pneg %p218
        %p456 = pneg %p242
        %p457 = pneg %p239
        %s458 = smul.u32 8, %s27
        %s459 = smul.u32 128, %s27
        %p460 = scmp.eq.s32.totalorder %s27, 0
        // Predicated region
        $region85: #{network_forward.1} parent=55 // pred_check
          %p461 = pneg %p460
        $region86: #{network_forward.1} parent=55 // pred_check_branch
          %463 = sbr.rel (%p461) target = $region88
        $region87: #{network_forward.1} parent=55 // pred_region
          %464 = vst [vmem:[#allocation2] sm:$0xff] 0.0
        $region88: #{network_forward.1} parent=55 // pred_fallthru
          _
        %v465 = vld [vmem:[%s0] sm:$0xff]
        %v466 = vld [vmem:[%s0 + $0x8] sm:$0xff]
        %v467 = vld [vmem:[%s387] sm:$0xff]
        %v468 = vld [vmem:[%s387 + $0x8] sm:$0xff]
        %v469 = vld [vmem:[%s387 + $0x10] sm:$0xff]
        %v470 = vld [vmem:[%s387 + $0x18] sm:$0xff]
        %v471 = vld [vmem:[%s387 + $0x20] sm:$0xff]
        %v472 = vld [vmem:[%s387 + $0x28] sm:$0xff]
        %v473 = vld [vmem:[%s387 + $0x30] sm:$0xff]
        %v474 = vld [vmem:[%s387 + $0x38] sm:$0xff]
        %v475 = vld [vmem:[%s387 + $0x40] sm:$0xff]
        %v476 = vld [vmem:[%s387 + $0x48] sm:$0xff]
        %v477 = vld [vmem:[%s387 + $0x50] sm:$0xff]
        %v478 = vld [vmem:[%s387 + $0x58] sm:$0xff]
        %v479 = vld [vmem:[%s387 + $0x60] sm:$0xff]
        %v480 = vld [vmem:[%s387 + $0x68] sm:$0xff]
        %v481 = vld [vmem:[%s387 + $0x70] sm:$0xff]
        %v482 = vld [vmem:[%s387 + $0x78] sm:$0xff]
        %v483 = vld [vmem:[%s387 + $0x80] sm:$0xff]
        %v484 = vld [vmem:[%s387 + $0x88] sm:$0xff]
        %v485 = vld [vmem:[%s387 + $0x90] sm:$0xff]
        %v486 = vld [vmem:[%s387 + $0x98] sm:$0xff]
        %v487 = vld [vmem:[%s387 + $0xa0] sm:$0xff]
        %v488 = vld [vmem:[%s387 + $0xa8] sm:$0xff]
        %v489 = vld [vmem:[%s387 + $0xb0] sm:$0xff]
        %v490 = vld [vmem:[%s387 + $0xb8] sm:$0xff]
        %v491 = vld [vmem:[%s387 + $0xc0] sm:$0xff]
        %v492 = vld [vmem:[%s387 + $0xc8] sm:$0xff]
        %v493 = vld [vmem:[%s387 + $0xd0] sm:$0xff]
        %v494 = vld [vmem:[%s387 + $0xd8] sm:$0xff]
        %v495 = vld [vmem:[%s387 + $0xe0] sm:$0xff]
        %v496 = vld [vmem:[%s387 + $0xe8] sm:$0xff]
        %v497 = vld [vmem:[%s387 + $0xf0] sm:$0xff]
        %v498 = vld [vmem:[%s387 + $0xf8] sm:$0xff]
        %v499 = vld [vmem:[%s387 + $0x100] sm:$0xff]
        %v500 = vld [vmem:[%s387 + $0x108] sm:$0xff]
        %v501 = vld [vmem:[%s387 + $0x110] sm:$0xff]
        %v502 = vld [vmem:[%s387 + $0x118] sm:$0xff]
        %v503 = vld [vmem:[%s387 + $0x120] sm:$0xff]
        %v504 = vld [vmem:[%s387 + $0x128] sm:$0xff]
        %v505 = vld [vmem:[%s387 + $0x130] sm:$0xff]
        %v506 = vld [vmem:[%s387 + $0x138] sm:$0xff]
        %v507 = vld [vmem:[%s387 + $0x140] sm:$0xff]
        %v508 = vld [vmem:[%s387 + $0x148] sm:$0xff]
        %v509 = vld [vmem:[%s387 + $0x150] sm:$0xff]
        %v510 = vld [vmem:[%s387 + $0x158] sm:$0xff]
        %v511 = vld [vmem:[%s387 + $0x160] sm:$0xff]
        %v512 = vld [vmem:[%s387 + $0x168] sm:$0xff]
        %v513 = vld [vmem:[%s387 + $0x170] sm:$0xff]
        %v514 = vld [vmem:[%s387 + $0x178] sm:$0xff]
        %v515 = vld [vmem:[%s387 + $0x180] sm:$0xff]
        %v516 = vld [vmem:[%s387 + $0x188] sm:$0xff]
        %v517 = vld [vmem:[%s387 + $0x190] sm:$0xff]
        %v518 = vld [vmem:[%s387 + $0x198] sm:$0xff]
        %v519 = vld [vmem:[%s387 + $0x1a0] sm:$0xff]
        %v520 = vld [vmem:[%s387 + $0x1a8] sm:$0xff]
        %v521 = vld [vmem:[%s387 + $0x1b0] sm:$0xff]
        %v522 = vld [vmem:[%s387 + $0x1b8] sm:$0xff]
        %v523 = vld [vmem:[%s387 + $0x1c0] sm:$0xff]
        %v524 = vld [vmem:[%s387 + $0x1c8] sm:$0xff]
        %v525 = vld [vmem:[%s387 + $0x1d0] sm:$0xff]
        %v526 = vld [vmem:[%s387 + $0x1d8] sm:$0xff]
        %v527 = vld [vmem:[%s387 + $0x1e0] sm:$0xff]
        %v528 = vld [vmem:[%s387 + $0x1e8] sm:$0xff]
        %v529 = vld [vmem:[%s387 + $0x1f0] sm:$0xff]
        %v530 = vld [vmem:[%s387 + $0x1f8] sm:$0xff]
        %v531 = vld [vmem:[%s387 + $0x200] sm:$0xff]
        %v532 = vld [vmem:[%s387 + $0x208] sm:$0xff]
        %v533 = vld [vmem:[%s387 + $0x210] sm:$0xff]
        %v534 = vld [vmem:[%s387 + $0x218] sm:$0xff]
        %v535 = vld [vmem:[%s387 + $0x220] sm:$0xff]
        %v536 = vld [vmem:[%s387 + $0x228] sm:$0xff]
        %v537 = vld [vmem:[%s387 + $0x230] sm:$0xff]
        %v538 = vld [vmem:[%s387 + $0x238] sm:$0xff]
        %v539 = vld [vmem:[%s387 + $0x240] sm:$0xff]
        %v540 = vld [vmem:[%s387 + $0x248] sm:$0xff]
        %v541 = vld [vmem:[%s387 + $0x250] sm:$0xff]
        %v542 = vld [vmem:[%s387 + $0x258] sm:$0xff]
        %v543 = vld [vmem:[%s387 + $0x260] sm:$0xff]
        %v544 = vld [vmem:[%s387 + $0x268] sm:$0xff]
        %v545 = vld [vmem:[%s387 + $0x270] sm:$0xff]
        %v546 = vld [vmem:[%s387 + $0x278] sm:$0xff]
        %v547 = vld [vmem:[%s387 + $0x280] sm:$0xff]
        %v548 = vld [vmem:[%s387 + $0x288] sm:$0xff]
        %v549 = vld [vmem:[%s387 + $0x290] sm:$0xff]
        %v550 = vld [vmem:[%s387 + $0x298] sm:$0xff]
        %v551 = vld [vmem:[%s387 + $0x2a0] sm:$0xff]
        %v552 = vld [vmem:[%s387 + $0x2a8] sm:$0xff]
        %v553 = vld [vmem:[%s387 + $0x2b0] sm:$0xff]
        %v554 = vld [vmem:[%s387 + $0x2b8] sm:$0xff]
        %v555 = vld [vmem:[%s387 + $0x2c0] sm:$0xff]
        %v556 = vld [vmem:[%s387 + $0x2c8] sm:$0xff]
        %v557 = vld [vmem:[%s387 + $0x2d0] sm:$0xff]
        %v558 = vld [vmem:[%s387 + $0x2d8] sm:$0xff]
        %v559 = vld [vmem:[%s387 + $0x2e0] sm:$0xff]
        %v560 = vld [vmem:[%s387 + $0x2e8] sm:$0xff]
        %v561 = vld [vmem:[%s387 + $0x2f0] sm:$0xff]
        %v562 = vld [vmem:[%s387 + $0x2f8] sm:$0xff]
        %v563 = vld [vmem:[%s387 + $0x300] sm:$0xff]
        %v564 = vld [vmem:[%s387 + $0x308] sm:$0xff]
        %v565 = vld [vmem:[%s387 + $0x310] sm:$0xff]
        %v566 = vld [vmem:[%s387 + $0x318] sm:$0xff]
        %v567 = vld [vmem:[%s387 + $0x320] sm:$0xff]
        %v568 = vld [vmem:[%s387 + $0x328] sm:$0xff]
        %v569 = vld [vmem:[%s387 + $0x330] sm:$0xff]
        %v570 = vld [vmem:[%s387 + $0x338] sm:$0xff]
        %v571 = vld [vmem:[%s387 + $0x340] sm:$0xff]
        %v572 = vld [vmem:[%s387 + $0x348] sm:$0xff]
        %v573 = vld [vmem:[%s387 + $0x350] sm:$0xff]
        %v574 = vld [vmem:[%s387 + $0x358] sm:$0xff]
        %v575 = vld [vmem:[%s387 + $0x360] sm:$0xff]
        %v576 = vld [vmem:[%s387 + $0x368] sm:$0xff]
        %v577 = vld [vmem:[%s387 + $0x370] sm:$0xff]
        %v578 = vld [vmem:[%s387 + $0x378] sm:$0xff]
        %v579 = vld [vmem:[%s387 + $0x380] sm:$0xff]
        %v580 = vld [vmem:[%s387 + $0x388] sm:$0xff]
        %v581 = vld [vmem:[%s387 + $0x390] sm:$0xff]
        %v582 = vld [vmem:[%s387 + $0x398] sm:$0xff]
        %v583 = vld [vmem:[%s387 + $0x3a0] sm:$0xff]
        %v584 = vld [vmem:[%s387 + $0x3a8] sm:$0xff]
        %v585 = vld [vmem:[%s387 + $0x3b0] sm:$0xff]
        %v586 = vld [vmem:[%s387 + $0x3b8] sm:$0xff]
        %v587 = vld [vmem:[%s387 + $0x3c0] sm:$0xff]
        %v588 = vld [vmem:[%s387 + $0x3c8] sm:$0xff]
        %v589 = vld [vmem:[%s387 + $0x3d0] sm:$0xff]
        %v590 = vld [vmem:[%s387 + $0x3d8] sm:$0xff]
        %v591 = vld [vmem:[%s387 + $0x3e0] sm:$0xff]
        %v592 = vld [vmem:[%s387 + $0x3e8] sm:$0xff]
        %v593 = vld [vmem:[%s387 + $0x3f0] sm:$0xff]
        %v594 = vld [vmem:[%s387 + $0x3f8] sm:$0xff]
        %v595 = vld [vmem:[%s387 + $0x400] sm:$0xff]
        %v596 = vld [vmem:[%s387 + $0x408] sm:$0xff]
        %v597 = vld [vmem:[%s387 + $0x410] sm:$0xff]
        %v598 = vld [vmem:[%s387 + $0x418] sm:$0xff]
        %v599 = vld [vmem:[%s387 + $0x420] sm:$0xff]
        %v600 = vld [vmem:[%s387 + $0x428] sm:$0xff]
        %v601 = vld [vmem:[%s387 + $0x430] sm:$0xff]
        %v602 = vld [vmem:[%s387 + $0x438] sm:$0xff]
        %v603 = vld [vmem:[%s387 + $0x440] sm:$0xff]
        %v604 = vld [vmem:[%s387 + $0x448] sm:$0xff]
        %v605 = vld [vmem:[%s387 + $0x450] sm:$0xff]
        %v606 = vld [vmem:[%s387 + $0x458] sm:$0xff]
        %v607 = vld [vmem:[%s387 + $0x460] sm:$0xff]
        %v608 = vld [vmem:[%s387 + $0x468] sm:$0xff]
        %v609 = vld [vmem:[%s387 + $0x470] sm:$0xff]
        %v610 = vld [vmem:[%s387 + $0x478] sm:$0xff]
        %v611 = vld [vmem:[%s387 + $0x480] sm:$0xff]
        %v612 = vld [vmem:[%s387 + $0x488] sm:$0xff]
        %v613 = vld [vmem:[%s387 + $0x490] sm:$0xff]
        %v614 = vld [vmem:[%s387 + $0x498] sm:$0xff]
        %v615 = vld [vmem:[%s387 + $0x4a0] sm:$0xff]
        %v616 = vld [vmem:[%s387 + $0x4a8] sm:$0xff]
        %v617 = vld [vmem:[%s387 + $0x4b0] sm:$0xff]
        %v618 = vld [vmem:[%s387 + $0x4b8] sm:$0xff]
        %v619 = vld [vmem:[%s387 + $0x4c0] sm:$0xff]
        %v620 = vld [vmem:[%s387 + $0x4c8] sm:$0xff]
        %v621 = vld [vmem:[%s387 + $0x4d0] sm:$0xff]
        %v622 = vld [vmem:[%s387 + $0x4d8] sm:$0xff]
        %v623 = vld [vmem:[%s387 + $0x4e0] sm:$0xff]
        %v624 = vld [vmem:[%s387 + $0x4e8] sm:$0xff]
        %v625 = vld [vmem:[%s387 + $0x4f0] sm:$0xff]
        %v626 = vld [vmem:[%s387 + $0x4f8] sm:$0xff]
        %v627 = vld [vmem:[%s387 + $0x500] sm:$0xff]
        %v628 = vld [vmem:[%s387 + $0x508] sm:$0xff]
        %v629 = vld [vmem:[%s387 + $0x510] sm:$0xff]
        %v630 = vld [vmem:[%s387 + $0x518] sm:$0xff]
        %v631 = vld [vmem:[%s387 + $0x520] sm:$0xff]
        %v632 = vld [vmem:[%s387 + $0x528] sm:$0xff]
        %v633 = vld [vmem:[%s387 + $0x530] sm:$0xff]
        %v634 = vld [vmem:[%s387 + $0x538] sm:$0xff]
        %v635 = vld [vmem:[%s387 + $0x540] sm:$0xff]
        %v636 = vld [vmem:[%s387 + $0x548] sm:$0xff]
        %v637 = vld [vmem:[%s387 + $0x550] sm:$0xff]
        %v638 = vld [vmem:[%s387 + $0x558] sm:$0xff]
        %v639 = vld [vmem:[%s387 + $0x560] sm:$0xff]
        %v640 = vld [vmem:[%s387 + $0x568] sm:$0xff]
        %v641 = vld [vmem:[%s387 + $0x570] sm:$0xff]
        %v642 = vld [vmem:[%s387 + $0x578] sm:$0xff]
        %v643 = vld [vmem:[%s387 + $0x580] sm:$0xff]
        %v644 = vld [vmem:[%s387 + $0x588] sm:$0xff]
        %v645 = vld [vmem:[%s387 + $0x590] sm:$0xff]
        %v646 = vld [vmem:[%s387 + $0x598] sm:$0xff]
        %v647 = vld [vmem:[%s387 + $0x5a0] sm:$0xff]
        %v648 = vld [vmem:[%s387 + $0x5a8] sm:$0xff]
        %v649 = vld [vmem:[%s387 + $0x5b0] sm:$0xff]
        %v650 = vld [vmem:[%s387 + $0x5b8] sm:$0xff]
        %v651 = vld [vmem:[%s387 + $0x5c0] sm:$0xff]
        %v652 = vld [vmem:[%s387 + $0x5c8] sm:$0xff]
        %v653 = vld [vmem:[%s387 + $0x5d0] sm:$0xff]
        %v654 = vld [vmem:[%s387 + $0x5d8] sm:$0xff]
        %v655 = vld [vmem:[%s387 + $0x5e0] sm:$0xff]
        %v656 = vld [vmem:[%s387 + $0x5e8] sm:$0xff]
        %v657 = vld [vmem:[%s387 + $0x5f0] sm:$0xff]
        %v658 = vld [vmem:[%s387 + $0x5f8] sm:$0xff]
        %v659 = vld [vmem:[%s387 + $0x600] sm:$0xff]
        %v660 = vld [vmem:[%s387 + $0x608] sm:$0xff]
        %v661 = vld [vmem:[%s387 + $0x610] sm:$0xff]
        %v662 = vld [vmem:[%s387 + $0x618] sm:$0xff]
        %v663 = vld [vmem:[%s387 + $0x620] sm:$0xff]
        %v664 = vld [vmem:[%s387 + $0x628] sm:$0xff]
        %v665 = vld [vmem:[%s387 + $0x630] sm:$0xff]
        %v666 = vld [vmem:[%s387 + $0x638] sm:$0xff]
        %v667 = vld [vmem:[%s387 + $0x640] sm:$0xff]
        %v668 = vld [vmem:[%s387 + $0x648] sm:$0xff]
        %v669 = vld [vmem:[%s387 + $0x650] sm:$0xff]
        %v670 = vld [vmem:[%s387 + $0x658] sm:$0xff]
        %v671 = vld [vmem:[%s387 + $0x660] sm:$0xff]
        %v672 = vld [vmem:[%s387 + $0x668] sm:$0xff]
        %v673 = vld [vmem:[%s387 + $0x670] sm:$0xff]
        %v674 = vld [vmem:[%s387 + $0x678] sm:$0xff]
        %v675 = vld [vmem:[%s387 + $0x680] sm:$0xff]
        %v676 = vld [vmem:[%s387 + $0x688] sm:$0xff]
        %v677 = vld [vmem:[%s387 + $0x690] sm:$0xff]
        %v678 = vld [vmem:[%s387 + $0x698] sm:$0xff]
        %v679 = vld [vmem:[%s387 + $0x6a0] sm:$0xff]
        %v680 = vld [vmem:[%s387 + $0x6a8] sm:$0xff]
        %v681 = vld [vmem:[%s387 + $0x6b0] sm:$0xff]
        %v682 = vld [vmem:[%s387 + $0x6b8] sm:$0xff]
        %v683 = vld [vmem:[%s387 + $0x6c0] sm:$0xff]
        %v684 = vld [vmem:[%s387 + $0x6c8] sm:$0xff]
        %v685 = vld [vmem:[%s387 + $0x6d0] sm:$0xff]
        %v686 = vld [vmem:[%s387 + $0x6d8] sm:$0xff]
        %v687 = vld [vmem:[%s387 + $0x6e0] sm:$0xff]
        %v688 = vld [vmem:[%s387 + $0x6e8] sm:$0xff]
        %v689 = vld [vmem:[%s387 + $0x6f0] sm:$0xff]
        %v690 = vld [vmem:[%s387 + $0x6f8] sm:$0xff]
        %v691 = vld [vmem:[%s387 + $0x700] sm:$0xff]
        %v692 = vld [vmem:[%s387 + $0x708] sm:$0xff]
        %v693 = vld [vmem:[%s387 + $0x710] sm:$0xff]
        %v694 = vld [vmem:[%s387 + $0x718] sm:$0xff]
        %v695 = vld [vmem:[%s387 + $0x720] sm:$0xff]
        %v696 = vld [vmem:[%s387 + $0x728] sm:$0xff]
        %v697 = vld [vmem:[%s387 + $0x730] sm:$0xff]
        %v698 = vld [vmem:[%s387 + $0x738] sm:$0xff]
        %v699 = vld [vmem:[%s387 + $0x740] sm:$0xff]
        %v700 = vld [vmem:[%s387 + $0x748] sm:$0xff]
        %v701 = vld [vmem:[%s387 + $0x750] sm:$0xff]
        %v702 = vld [vmem:[%s387 + $0x758] sm:$0xff]
        %v703 = vld [vmem:[%s387 + $0x760] sm:$0xff]
        %v704 = vld [vmem:[%s387 + $0x768] sm:$0xff]
        %v705 = vld [vmem:[%s387 + $0x770] sm:$0xff]
        %v706 = vld [vmem:[%s387 + $0x778] sm:$0xff]
        %v707 = vld [vmem:[%s387 + $0x780] sm:$0xff]
        %v708 = vld [vmem:[%s387 + $0x788] sm:$0xff]
        %v709 = vld [vmem:[%s387 + $0x790] sm:$0xff]
        %v710 = vld [vmem:[%s387 + $0x798] sm:$0xff]
        %v711 = vld [vmem:[%s387 + $0x7a0] sm:$0xff]
        %v712 = vld [vmem:[%s387 + $0x7a8] sm:$0xff]
        %v713 = vld [vmem:[%s387 + $0x7b0] sm:$0xff]
        %v714 = vld [vmem:[%s387 + $0x7b8] sm:$0xff]
        %v715 = vld [vmem:[%s387 + $0x7c0] sm:$0xff]
        %v716 = vld [vmem:[%s387 + $0x7c8] sm:$0xff]
        %v717 = vld [vmem:[%s387 + $0x7d0] sm:$0xff]
        %v718 = vld [vmem:[%s387 + $0x7d8] sm:$0xff]
        %v719 = vld [vmem:[%s387 + $0x7e0] sm:$0xff]
        %v720 = vld [vmem:[%s387 + $0x7e8] sm:$0xff]
        %v721 = vld [vmem:[%s387 + $0x7f0] sm:$0xff]
        %v722 = vld [vmem:[%s387 + $0x7f8] sm:$0xff]
        %v723 = vld [vmem:[%s387 + $0x800] sm:$0xff]
        %v724 = vld [vmem:[%s387 + $0x808] sm:$0xff]
        %v725 = vld [vmem:[%s387 + $0x810] sm:$0xff]
        %v726 = vld [vmem:[%s387 + $0x818] sm:$0xff]
        %v727 = vld [vmem:[%s387 + $0x820] sm:$0xff]
        %v728 = vld [vmem:[%s387 + $0x828] sm:$0xff]
        %v729 = vld [vmem:[%s387 + $0x830] sm:$0xff]
        %v730 = vld [vmem:[%s387 + $0x838] sm:$0xff]
        %v731 = vld [vmem:[%s387 + $0x840] sm:$0xff]
        %v732 = vld [vmem:[%s387 + $0x848] sm:$0xff]
        %v733 = vld [vmem:[%s387 + $0x850] sm:$0xff]
        %v734 = vld [vmem:[%s387 + $0x858] sm:$0xff]
        %v735 = vld [vmem:[%s387 + $0x860] sm:$0xff]
        %v736 = vld [vmem:[%s387 + $0x868] sm:$0xff]
        %v737 = vld [vmem:[%s387 + $0x870] sm:$0xff]
        %v738 = vld [vmem:[%s387 + $0x878] sm:$0xff]
        %v739 = vld [vmem:[%s387 + $0x880] sm:$0xff]
        %v740 = vld [vmem:[%s387 + $0x888] sm:$0xff]
        %v741 = vld [vmem:[%s387 + $0x890] sm:$0xff]
        %v742 = vld [vmem:[%s387 + $0x898] sm:$0xff]
        %v743 = vld [vmem:[%s387 + $0x8a0] sm:$0xff]
        %v744 = vld [vmem:[%s387 + $0x8a8] sm:$0xff]
        %v745 = vld [vmem:[%s387 + $0x8b0] sm:$0xff]
        %v746 = vld [vmem:[%s387 + $0x8b8] sm:$0xff]
        %v747 = vld [vmem:[%s387 + $0x8c0] sm:$0xff]
        %v748 = vld [vmem:[%s387 + $0x8c8] sm:$0xff]
        %v749 = vld [vmem:[%s387 + $0x8d0] sm:$0xff]
        %v750 = vld [vmem:[%s387 + $0x8d8] sm:$0xff]
        %v751 = vld [vmem:[%s387 + $0x8e0] sm:$0xff]
        %v752 = vld [vmem:[%s387 + $0x8e8] sm:$0xff]
        %v753 = vld [vmem:[%s387 + $0x8f0] sm:$0xff]
        %v754 = vld [vmem:[%s387 + $0x8f8] sm:$0xff]
        %v755 = vld [vmem:[%s387 + $0x900] sm:$0xff]
        %v756 = vld [vmem:[%s387 + $0x908] sm:$0xff]
        %v757 = vld [vmem:[%s387 + $0x910] sm:$0xff]
        %v758 = vld [vmem:[%s387 + $0x918] sm:$0xff]
        %v759 = vld [vmem:[%s387 + $0x920] sm:$0xff]
        %v760 = vld [vmem:[%s387 + $0x928] sm:$0xff]
        %v761 = vld [vmem:[%s387 + $0x930] sm:$0xff]
        %v762 = vld [vmem:[%s387 + $0x938] sm:$0xff]
        %v763 = vld [vmem:[%s387 + $0x940] sm:$0xff]
        %v764 = vld [vmem:[%s387 + $0x948] sm:$0xff]
        %v765 = vld [vmem:[%s387 + $0x950] sm:$0xff]
        %v766 = vld [vmem:[%s387 + $0x958] sm:$0xff]
        %v767 = vld [vmem:[%s387 + $0x960] sm:$0xff]
        %v768 = vld [vmem:[%s387 + $0x968] sm:$0xff]
        %v769 = vld [vmem:[%s387 + $0x970] sm:$0xff]
        %v770 = vld [vmem:[%s387 + $0x978] sm:$0xff]
        %v771 = vld [vmem:[%s387 + $0x980] sm:$0xff]
        %v772 = vld [vmem:[%s387 + $0x988] sm:$0xff]
        %v773 = vld [vmem:[%s387 + $0x990] sm:$0xff]
        %v774 = vld [vmem:[%s387 + $0x998] sm:$0xff]
        %v775 = vld [vmem:[%s387 + $0x9a0] sm:$0xff]
        %v776 = vld [vmem:[%s387 + $0x9a8] sm:$0xff]
        %v777 = vld [vmem:[%s387 + $0x9b0] sm:$0xff]
        %v778 = vld [vmem:[%s387 + $0x9b8] sm:$0xff]
        %v779 = vld [vmem:[%s387 + $0x9c0] sm:$0xff]
        %v780 = vld [vmem:[%s387 + $0x9c8] sm:$0xff]
        %v781 = vld [vmem:[%s387 + $0x9d0] sm:$0xff]
        %v782 = vld [vmem:[%s387 + $0x9d8] sm:$0xff]
        %v783 = vld [vmem:[%s387 + $0x9e0] sm:$0xff]
        %v784 = vld [vmem:[%s387 + $0x9e8] sm:$0xff]
        %v785 = vld [vmem:[%s387 + $0x9f0] sm:$0xff]
        %v786 = vld [vmem:[%s387 + $0x9f8] sm:$0xff]
        %v787 = vld [vmem:[%s387 + $0xa00] sm:$0xff]
        %v788 = vld [vmem:[%s387 + $0xa08] sm:$0xff]
        %v789 = vld [vmem:[%s387 + $0xa10] sm:$0xff]
        %v790 = vld [vmem:[%s387 + $0xa18] sm:$0xff]
        %v791 = vld [vmem:[%s387 + $0xa20] sm:$0xff]
        %v792 = vld [vmem:[%s387 + $0xa28] sm:$0xff]
        %v793 = vld [vmem:[%s387 + $0xa30] sm:$0xff]
        %v794 = vld [vmem:[%s387 + $0xa38] sm:$0xff]
        %v795 = vld [vmem:[%s387 + $0xa40] sm:$0xff]
        %v796 = vld [vmem:[%s387 + $0xa48] sm:$0xff]
        %v797 = vld [vmem:[%s387 + $0xa50] sm:$0xff]
        %v798 = vld [vmem:[%s387 + $0xa58] sm:$0xff]
        %v799 = vld [vmem:[%s387 + $0xa60] sm:$0xff]
        %v800 = vld [vmem:[%s387 + $0xa68] sm:$0xff]
        %v801 = vld [vmem:[%s387 + $0xa70] sm:$0xff]
        %v802 = vld [vmem:[%s387 + $0xa78] sm:$0xff]
        %v803 = vld [vmem:[%s387 + $0xa80] sm:$0xff]
        %v804 = vld [vmem:[%s387 + $0xa88] sm:$0xff]
        %v805 = vld [vmem:[%s387 + $0xa90] sm:$0xff]
        %v806 = vld [vmem:[%s387 + $0xa98] sm:$0xff]
        %v807 = vld [vmem:[%s387 + $0xaa0] sm:$0xff]
        %v808 = vld [vmem:[%s387 + $0xaa8] sm:$0xff]
        %v809 = vld [vmem:[%s387 + $0xab0] sm:$0xff]
        %v810 = vld [vmem:[%s387 + $0xab8] sm:$0xff]
        %v811 = vld [vmem:[%s387 + $0xac0] sm:$0xff]
        %v812 = vld [vmem:[%s387 + $0xac8] sm:$0xff]
        %v813 = vld [vmem:[%s387 + $0xad0] sm:$0xff]
        %v814 = vld [vmem:[%s387 + $0xad8] sm:$0xff]
        %v815 = vld [vmem:[%s387 + $0xae0] sm:$0xff]
        %v816 = vld [vmem:[%s387 + $0xae8] sm:$0xff]
        %v817 = vld [vmem:[%s387 + $0xaf0] sm:$0xff]
        %v818 = vld [vmem:[%s387 + $0xaf8] sm:$0xff]
        %v819 = vld [vmem:[%s387 + $0xb00] sm:$0xff]
        %v820 = vld [vmem:[%s387 + $0xb08] sm:$0xff]
        %v821 = vld [vmem:[%s387 + $0xb10] sm:$0xff]
        %v822 = vld [vmem:[%s387 + $0xb18] sm:$0xff]
        %v823 = vld [vmem:[%s387 + $0xb20] sm:$0xff]
        %v824 = vld [vmem:[%s387 + $0xb28] sm:$0xff]
        %v825 = vld [vmem:[%s387 + $0xb30] sm:$0xff]
        %v826 = vld [vmem:[%s387 + $0xb38] sm:$0xff]
        %v827 = vld [vmem:[%s387 + $0xb40] sm:$0xff]
        %v828 = vld [vmem:[%s387 + $0xb48] sm:$0xff]
        %v829 = vld [vmem:[%s387 + $0xb50] sm:$0xff]
        %v830 = vld [vmem:[%s387 + $0xb58] sm:$0xff]
        %v831 = vld [vmem:[%s387 + $0xb60] sm:$0xff]
        %v832 = vld [vmem:[%s387 + $0xb68] sm:$0xff]
        %v833 = vld [vmem:[%s387 + $0xb70] sm:$0xff]
        %v834 = vld [vmem:[%s387 + $0xb78] sm:$0xff]
        %v835 = vld [vmem:[%s387 + $0xb80] sm:$0xff]
        %v836 = vld [vmem:[%s387 + $0xb88] sm:$0xff]
        %v837 = vld [vmem:[%s387 + $0xb90] sm:$0xff]
        %v838 = vld [vmem:[%s387 + $0xb98] sm:$0xff]
        %v839 = vld [vmem:[%s387 + $0xba0] sm:$0xff]
        %v840 = vld [vmem:[%s387 + $0xba8] sm:$0xff]
        %v841 = vld [vmem:[%s387 + $0xbb0] sm:$0xff]
        %v842 = vld [vmem:[%s387 + $0xbb8] sm:$0xff]
        %v843 = vld [vmem:[%s387 + $0xbc0] sm:$0xff]
        %v844 = vld [vmem:[%s387 + $0xbc8] sm:$0xff]
        %v845 = vld [vmem:[%s387 + $0xbd0] sm:$0xff]
        %v846 = vld [vmem:[%s387 + $0xbd8] sm:$0xff]
        %v847 = vld [vmem:[%s387 + $0xbe0] sm:$0xff]
        %v848 = vld [vmem:[%s387 + $0xbe8] sm:$0xff]
        %v849 = vld [vmem:[%s387 + $0xbf0] sm:$0xff]
        %v850 = vld [vmem:[%s387 + $0xbf8] sm:$0xff]
        %v851 = vld [vmem:[%s387 + $0xc00] sm:$0xff]
        %v852 = vld [vmem:[%s387 + $0xc08] sm:$0xff]
        %v853 = vld [vmem:[%s387 + $0xc10] sm:$0xff]
        %v854 = vld [vmem:[%s387 + $0xc18] sm:$0xff]
        %v855 = vld [vmem:[%s387 + $0xc20] sm:$0xff]
        %v856 = vld [vmem:[%s387 + $0xc28] sm:$0xff]
        %v857 = vld [vmem:[%s387 + $0xc30] sm:$0xff]
        %v858 = vld [vmem:[%s387 + $0xc38] sm:$0xff]
        %v859 = vld [vmem:[%s387 + $0xc40] sm:$0xff]
        %v860 = vld [vmem:[%s387 + $0xc48] sm:$0xff]
        %v861 = vld [vmem:[%s387 + $0xc50] sm:$0xff]
        %v862 = vld [vmem:[%s387 + $0xc58] sm:$0xff]
        %v863 = vld [vmem:[%s387 + $0xc60] sm:$0xff]
        %v864 = vld [vmem:[%s387 + $0xc68] sm:$0xff]
        %v865 = vld [vmem:[%s387 + $0xc70] sm:$0xff]
        %v866 = vld [vmem:[%s387 + $0xc78] sm:$0xff]
        %v867 = vld [vmem:[%s387 + $0xc80] sm:$0xff]
        %v868 = vld [vmem:[%s387 + $0xc88] sm:$0xff]
        %v869 = vld [vmem:[%s387 + $0xc90] sm:$0xff]
        %v870 = vld [vmem:[%s387 + $0xc98] sm:$0xff]
        %v871 = vld [vmem:[%s387 + $0xca0] sm:$0xff]
        %v872 = vld [vmem:[%s387 + $0xca8] sm:$0xff]
        %v873 = vld [vmem:[%s387 + $0xcb0] sm:$0xff]
        %v874 = vld [vmem:[%s387 + $0xcb8] sm:$0xff]
        %v875 = vld [vmem:[%s387 + $0xcc0] sm:$0xff]
        %v876 = vld [vmem:[%s387 + $0xcc8] sm:$0xff]
        %v877 = vld [vmem:[%s387 + $0xcd0] sm:$0xff]
        %v878 = vld [vmem:[%s387 + $0xcd8] sm:$0xff]
        %v879 = vld [vmem:[%s387 + $0xce0] sm:$0xff]
        %v880 = vld [vmem:[%s387 + $0xce8] sm:$0xff]
        %v881 = vld [vmem:[%s387 + $0xcf0] sm:$0xff]
        %v882 = vld [vmem:[%s387 + $0xcf8] sm:$0xff]
        %v883 = vld [vmem:[%s387 + $0xd00] sm:$0xff]
        %v884 = vld [vmem:[%s387 + $0xd08] sm:$0xff]
        %v885 = vld [vmem:[%s387 + $0xd10] sm:$0xff]
        %v886 = vld [vmem:[%s387 + $0xd18] sm:$0xff]
        %v887 = vld [vmem:[%s387 + $0xd20] sm:$0xff]
        %v888 = vld [vmem:[%s387 + $0xd28] sm:$0xff]
        %v889 = vld [vmem:[%s387 + $0xd30] sm:$0xff]
        %v890 = vld [vmem:[%s387 + $0xd38] sm:$0xff]
        %v891 = vld [vmem:[%s387 + $0xd40] sm:$0xff]
        %v892 = vld [vmem:[%s387 + $0xd48] sm:$0xff]
        %v893 = vld [vmem:[%s387 + $0xd50] sm:$0xff]
        %v894 = vld [vmem:[%s387 + $0xd58] sm:$0xff]
        %v895 = vld [vmem:[%s387 + $0xd60] sm:$0xff]
        %v896 = vld [vmem:[%s387 + $0xd68] sm:$0xff]
        %v897 = vld [vmem:[%s387 + $0xd70] sm:$0xff]
        %v898 = vld [vmem:[%s387 + $0xd78] sm:$0xff]
        %v899 = vld [vmem:[%s387 + $0xd80] sm:$0xff]
        %v900 = vld [vmem:[%s387 + $0xd88] sm:$0xff]
        %v901 = vld [vmem:[%s387 + $0xd90] sm:$0xff]
        %v902 = vld [vmem:[%s387 + $0xd98] sm:$0xff]
        %v903 = vld [vmem:[%s387 + $0xda0] sm:$0xff]
        %v904 = vld [vmem:[%s387 + $0xda8] sm:$0xff]
        %v905 = vld [vmem:[%s387 + $0xdb0] sm:$0xff]
        %v906 = vld [vmem:[%s387 + $0xdb8] sm:$0xff]
        %v907 = vld [vmem:[%s387 + $0xdc0] sm:$0xff]
        %v908 = vld [vmem:[%s387 + $0xdc8] sm:$0xff]
        %v909 = vld [vmem:[%s387 + $0xdd0] sm:$0xff]
        %v910 = vld [vmem:[%s387 + $0xdd8] sm:$0xff]
        %v911 = vld [vmem:[%s387 + $0xde0] sm:$0xff]
        %v912 = vld [vmem:[%s387 + $0xde8] sm:$0xff]
        %v913 = vld [vmem:[%s387 + $0xdf0] sm:$0xff]
        %v914 = vld [vmem:[%s387 + $0xdf8] sm:$0xff]
        %v915 = vld [vmem:[%s387 + $0xe00] sm:$0xff]
        %v916 = vld [vmem:[%s387 + $0xe08] sm:$0xff]
        %v917 = vld [vmem:[%s387 + $0xe10] sm:$0xff]
        %v918 = vld [vmem:[%s387 + $0xe18] sm:$0xff]
        %v919 = vld [vmem:[%s387 + $0xe20] sm:$0xff]
        %v920 = vld [vmem:[%s387 + $0xe28] sm:$0xff]
        %v921 = vld [vmem:[%s387 + $0xe30] sm:$0xff]
        %v922 = vld [vmem:[%s387 + $0xe38] sm:$0xff]
        %v923 = vld [vmem:[%s387 + $0xe40] sm:$0xff]
        %v924 = vld [vmem:[%s387 + $0xe48] sm:$0xff]
        %v925 = vld [vmem:[%s387 + $0xe50] sm:$0xff]
        %v926 = vld [vmem:[%s387 + $0xe58] sm:$0xff]
        %v927 = vld [vmem:[%s387 + $0xe60] sm:$0xff]
        %v928 = vld [vmem:[%s387 + $0xe68] sm:$0xff]
        %v929 = vld [vmem:[%s387 + $0xe70] sm:$0xff]
        %v930 = vld [vmem:[%s387 + $0xe78] sm:$0xff]
        %v931 = vld [vmem:[%s387 + $0xe80] sm:$0xff]
        %v932 = vld [vmem:[%s387 + $0xe88] sm:$0xff]
        %v933 = vld [vmem:[%s387 + $0xe90] sm:$0xff]
        %v934 = vld [vmem:[%s387 + $0xe98] sm:$0xff]
        %v935 = vld [vmem:[%s387 + $0xea0] sm:$0xff]
        %v936 = vld [vmem:[%s387 + $0xea8] sm:$0xff]
        %v937 = vld [vmem:[%s387 + $0xeb0] sm:$0xff]
        %v938 = vld [vmem:[%s387 + $0xeb8] sm:$0xff]
        %v939 = vld [vmem:[%s387 + $0xec0] sm:$0xff]
        %v940 = vld [vmem:[%s387 + $0xec8] sm:$0xff]
        %v941 = vld [vmem:[%s387 + $0xed0] sm:$0xff]
        %v942 = vld [vmem:[%s387 + $0xed8] sm:$0xff]
        %v943 = vld [vmem:[%s387 + $0xee0] sm:$0xff]
        %v944 = vld [vmem:[%s387 + $0xee8] sm:$0xff]
        %v945 = vld [vmem:[%s387 + $0xef0] sm:$0xff]
        %v946 = vld [vmem:[%s387 + $0xef8] sm:$0xff]
        %v947 = vld [vmem:[%s387 + $0xf00] sm:$0xff]
        %v948 = vld [vmem:[%s387 + $0xf08] sm:$0xff]
        %v949 = vld [vmem:[%s387 + $0xf10] sm:$0xff]
        %v950 = vld [vmem:[%s387 + $0xf18] sm:$0xff]
        %v951 = vld [vmem:[%s387 + $0xf20] sm:$0xff]
        %v952 = vld [vmem:[%s387 + $0xf28] sm:$0xff]
        %v953 = vld [vmem:[%s387 + $0xf30] sm:$0xff]
        %v954 = vld [vmem:[%s387 + $0xf38] sm:$0xff]
        %v955 = vld [vmem:[%s387 + $0xf40] sm:$0xff]
        %v956 = vld [vmem:[%s387 + $0xf48] sm:$0xff]
        %v957 = vld [vmem:[%s387 + $0xf50] sm:$0xff]
        %v958 = vld [vmem:[%s387 + $0xf58] sm:$0xff]
        %v959 = vld [vmem:[%s387 + $0xf60] sm:$0xff]
        %v960 = vld [vmem:[%s387 + $0xf68] sm:$0xff]
        %v961 = vld [vmem:[%s387 + $0xf70] sm:$0xff]
        %v962 = vld [vmem:[%s387 + $0xf78] sm:$0xff]
        %v963 = vld [vmem:[%s387 + $0xf80] sm:$0xff]
        %v964 = vld [vmem:[%s387 + $0xf88] sm:$0xff]
        %v965 = vld [vmem:[%s387 + $0xf90] sm:$0xff]
        %v966 = vld [vmem:[%s387 + $0xf98] sm:$0xff]
        %v967 = vld [vmem:[%s387 + $0xfa0] sm:$0xff]
        %v968 = vld [vmem:[%s387 + $0xfa8] sm:$0xff]
        %v969 = vld [vmem:[%s387 + $0xfb0] sm:$0xff]
        %v970 = vld [vmem:[%s387 + $0xfb8] sm:$0xff]
        %v971 = vld [vmem:[%s387 + $0xfc0] sm:$0xff]
        %v972 = vld [vmem:[%s387 + $0xfc8] sm:$0xff]
        %v973 = vld [vmem:[%s387 + $0xfd0] sm:$0xff]
        %v974 = vld [vmem:[%s387 + $0xfd8] sm:$0xff]
        %v975 = vld [vmem:[%s387 + $0xfe0] sm:$0xff]
        %v976 = vld [vmem:[%s387 + $0xfe8] sm:$0xff]
        %v977 = vld [vmem:[%s387 + $0xff0] sm:$0xff]
        %v978 = vld [vmem:[%s387 + $0xff8] sm:$0xff]
        %v979 = vld [vmem:[%s387 + $0x1000] sm:$0xff]
        %v980 = vld [vmem:[%s387 + $0x1008] sm:$0xff]
        %v981 = vld [vmem:[%s387 + $0x1010] sm:$0xff]
        %v982 = vld [vmem:[%s387 + $0x1018] sm:$0xff]
        %v983 = vld [vmem:[%s387 + $0x1020] sm:$0xff]
        %v984 = vld [vmem:[%s387 + $0x1028] sm:$0xff]
        %v985 = vld [vmem:[%s387 + $0x1030] sm:$0xff]
        %v986 = vld [vmem:[%s387 + $0x1038] sm:$0xff]
        %v987 = vld [vmem:[%s387 + $0x1040] sm:$0xff]
        %v988 = vld [vmem:[%s387 + $0x1048] sm:$0xff]
        %v989 = vld [vmem:[%s387 + $0x1050] sm:$0xff]
        %v990 = vld [vmem:[%s387 + $0x1058] sm:$0xff]
        %v991 = vld [vmem:[%s387 + $0x1060] sm:$0xff]
        %v992 = vld [vmem:[%s387 + $0x1068] sm:$0xff]
        %v993 = vld [vmem:[%s387 + $0x1070] sm:$0xff]
        %v994 = vld [vmem:[%s387 + $0x1078] sm:$0xff]
        %v995 = vld [vmem:[%s387 + $0x1080] sm:$0xff]
        %v996 = vld [vmem:[%s387 + $0x1088] sm:$0xff]
        %v997 = vld [vmem:[%s387 + $0x1090] sm:$0xff]
        %v998 = vld [vmem:[%s387 + $0x1098] sm:$0xff]
        %v999 = vld [vmem:[%s387 + $0x10a0] sm:$0xff]
        %v1000 = vld [vmem:[%s387 + $0x10a8] sm:$0xff]
        %v1001 = vld [vmem:[%s387 + $0x10b0] sm:$0xff]
        %v1002 = vld [vmem:[%s387 + $0x10b8] sm:$0xff]
        %v1003 = vld [vmem:[%s387 + $0x10c0] sm:$0xff]
        %v1004 = vld [vmem:[%s387 + $0x10c8] sm:$0xff]
        %v1005 = vld [vmem:[%s387 + $0x10d0] sm:$0xff]
        %v1006 = vld [vmem:[%s387 + $0x10d8] sm:$0xff]
        %v1007 = vld [vmem:[%s387 + $0x10e0] sm:$0xff]
        %v1008 = vld [vmem:[%s387 + $0x10e8] sm:$0xff]
        %v1009 = vld [vmem:[%s387 + $0x10f0] sm:$0xff]
        %v1010 = vld [vmem:[%s387 + $0x10f8] sm:$0xff]
        %v1011 = vld [vmem:[%s387 + $0x1100] sm:$0xff]
        %v1012 = vld [vmem:[%s387 + $0x1108] sm:$0xff]
        %v1013 = vld [vmem:[%s387 + $0x1110] sm:$0xff]
        %v1014 = vld [vmem:[%s387 + $0x1118] sm:$0xff]
        %v1015 = vld [vmem:[%s387 + $0x1120] sm:$0xff]
        %v1016 = vld [vmem:[%s387 + $0x1128] sm:$0xff]
        %v1017 = vld [vmem:[%s387 + $0x1130] sm:$0xff]
        %v1018 = vld [vmem:[%s387 + $0x1138] sm:$0xff]
        %v1019 = vld [vmem:[%s387 + $0x1140] sm:$0xff]
        %v1020 = vld [vmem:[%s387 + $0x1148] sm:$0xff]
        %v1021 = vld [vmem:[%s387 + $0x1150] sm:$0xff]
        %v1022 = vld [vmem:[%s387 + $0x1158] sm:$0xff]
        %v1023 = vld [vmem:[%s387 + $0x1160] sm:$0xff]
        %v1024 = vld [vmem:[%s387 + $0x1168] sm:$0xff]
        %v1025 = vld [vmem:[%s387 + $0x1170] sm:$0xff]
        %v1026 = vld [vmem:[%s387 + $0x1178] sm:$0xff]
        %v1027 = vld [vmem:[%s387 + $0x1180] sm:$0xff]
        %v1028 = vld [vmem:[%s387 + $0x1188] sm:$0xff]
        %v1029 = vld [vmem:[%s387 + $0x1190] sm:$0xff]
        %v1030 = vld [vmem:[%s387 + $0x1198] sm:$0xff]
        %v1031 = vld [vmem:[%s387 + $0x11a0] sm:$0xff]
        %v1032 = vld [vmem:[%s387 + $0x11a8] sm:$0xff]
        %v1033 = vld [vmem:[%s387 + $0x11b0] sm:$0xff]
        %v1034 = vld [vmem:[%s387 + $0x11b8] sm:$0xff]
        %v1035 = vld [vmem:[%s387 + $0x11c0] sm:$0xff]
        %v1036 = vld [vmem:[%s387 + $0x11c8] sm:$0xff]
        %v1037 = vld [vmem:[%s387 + $0x11d0] sm:$0xff]
        %v1038 = vld [vmem:[%s387 + $0x11d8] sm:$0xff]
        %v1039 = vld [vmem:[%s387 + $0x11e0] sm:$0xff]
        %v1040 = vld [vmem:[%s387 + $0x11e8] sm:$0xff]
        %v1041 = vld [vmem:[%s387 + $0x11f0] sm:$0xff]
        %v1042 = vld [vmem:[%s387 + $0x11f8] sm:$0xff]
        %v1043 = vld [vmem:[%s387 + $0x1200] sm:$0xff]
        %v1044 = vld [vmem:[%s387 + $0x1208] sm:$0xff]
        %v1045 = vld [vmem:[%s387 + $0x1210] sm:$0xff]
        %v1046 = vld [vmem:[%s387 + $0x1218] sm:$0xff]
        %v1047 = vld [vmem:[%s387 + $0x1220] sm:$0xff]
        %v1048 = vld [vmem:[%s387 + $0x1228] sm:$0xff]
        %v1049 = vld [vmem:[%s387 + $0x1230] sm:$0xff]
        %v1050 = vld [vmem:[%s387 + $0x1238] sm:$0xff]
        %v1051 = vld [vmem:[%s387 + $0x1240] sm:$0xff]
        %v1052 = vld [vmem:[%s387 + $0x1248] sm:$0xff]
        %v1053 = vld [vmem:[%s387 + $0x1250] sm:$0xff]
        %v1054 = vld [vmem:[%s387 + $0x1258] sm:$0xff]
        %v1055 = vld [vmem:[%s387 + $0x1260] sm:$0xff]
        %v1056 = vld [vmem:[%s387 + $0x1268] sm:$0xff]
        %v1057 = vld [vmem:[%s387 + $0x1270] sm:$0xff]
        %v1058 = vld [vmem:[%s387 + $0x1278] sm:$0xff]
        %v1059 = vld [vmem:[%s387 + $0x1280] sm:$0xff]
        %v1060 = vld [vmem:[%s387 + $0x1288] sm:$0xff]
        %v1061 = vld [vmem:[%s387 + $0x1290] sm:$0xff]
        %v1062 = vld [vmem:[%s387 + $0x1298] sm:$0xff]
        %v1063 = vld [vmem:[%s387 + $0x12a0] sm:$0xff]
        %v1064 = vld [vmem:[%s387 + $0x12a8] sm:$0xff]
        %v1065 = vld [vmem:[%s387 + $0x12b0] sm:$0xff]
        %v1066 = vld [vmem:[%s387 + $0x12b8] sm:$0xff]
        %v1067 = vld [vmem:[%s387 + $0x12c0] sm:$0xff]
        %v1068 = vld [vmem:[%s387 + $0x12c8] sm:$0xff]
        %v1069 = vld [vmem:[%s387 + $0x12d0] sm:$0xff]
        %v1070 = vld [vmem:[%s387 + $0x12d8] sm:$0xff]
        %v1071 = vld [vmem:[%s387 + $0x12e0] sm:$0xff]
        %v1072 = vld [vmem:[%s387 + $0x12e8] sm:$0xff]
        %v1073 = vld [vmem:[%s387 + $0x12f0] sm:$0xff]
        %v1074 = vld [vmem:[%s387 + $0x12f8] sm:$0xff]
        %v1075 = vld [vmem:[%s387 + $0x1300] sm:$0xff]
        %v1076 = vld [vmem:[%s387 + $0x1308] sm:$0xff]
        %v1077 = vld [vmem:[%s387 + $0x1310] sm:$0xff]
        %v1078 = vld [vmem:[%s387 + $0x1318] sm:$0xff]
        %v1079 = vld [vmem:[%s387 + $0x1320] sm:$0xff]
        %v1080 = vld [vmem:[%s387 + $0x1328] sm:$0xff]
        %v1081 = vld [vmem:[%s387 + $0x1330] sm:$0xff]
        %v1082 = vld [vmem:[%s387 + $0x1338] sm:$0xff]
        %v1083 = vld [vmem:[%s387 + $0x1340] sm:$0xff]
        %v1084 = vld [vmem:[%s387 + $0x1348] sm:$0xff]
        %v1085 = vld [vmem:[%s387 + $0x1350] sm:$0xff]
        %v1086 = vld [vmem:[%s387 + $0x1358] sm:$0xff]
        %v1087 = vld [vmem:[%s387 + $0x1360] sm:$0xff]
        %v1088 = vld [vmem:[%s387 + $0x1368] sm:$0xff]
        %v1089 = vld [vmem:[%s387 + $0x1370] sm:$0xff]
        %v1090 = vld [vmem:[%s387 + $0x1378] sm:$0xff]
        %v1091 = vld [vmem:[%s387 + $0x1380] sm:$0xff]
        %v1092 = vld [vmem:[%s387 + $0x1388] sm:$0xff]
        %v1093 = vld [vmem:[%s387 + $0x1390] sm:$0xff]
        %v1094 = vld [vmem:[%s387 + $0x1398] sm:$0xff]
        %v1095 = vld [vmem:[%s387 + $0x13a0] sm:$0xff]
        %v1096 = vld [vmem:[%s387 + $0x13a8] sm:$0xff]
        %v1097 = vld [vmem:[%s387 + $0x13b0] sm:$0xff]
        %v1098 = vld [vmem:[%s387 + $0x13b8] sm:$0xff]
        %v1099 = vld [vmem:[%s387 + $0x13c0] sm:$0xff]
        %v1100 = vld [vmem:[%s387 + $0x13c8] sm:$0xff]
        %v1101 = vld [vmem:[%s387 + $0x13d0] sm:$0xff]
        %v1102 = vld [vmem:[%s387 + $0x13d8] sm:$0xff]
        %v1103 = vld [vmem:[%s387 + $0x13e0] sm:$0xff]
        %v1104 = vld [vmem:[%s387 + $0x13e8] sm:$0xff]
        %v1105 = vld [vmem:[%s387 + $0x13f0] sm:$0xff]
        %v1106 = vld [vmem:[%s387 + $0x13f8] sm:$0xff]
        %v1107 = vld [vmem:[%s387 + $0x1400] sm:$0xff]
        %v1108 = vld [vmem:[%s387 + $0x1408] sm:$0xff]
        %v1109 = vld [vmem:[%s387 + $0x1410] sm:$0xff]
        %v1110 = vld [vmem:[%s387 + $0x1418] sm:$0xff]
        %v1111 = vld [vmem:[%s387 + $0x1420] sm:$0xff]
        %v1112 = vld [vmem:[%s387 + $0x1428] sm:$0xff]
        %v1113 = vld [vmem:[%s387 + $0x1430] sm:$0xff]
        %v1114 = vld [vmem:[%s387 + $0x1438] sm:$0xff]
        %v1115 = vld [vmem:[%s387 + $0x1440] sm:$0xff]
        %v1116 = vld [vmem:[%s387 + $0x1448] sm:$0xff]
        %v1117 = vld [vmem:[%s387 + $0x1450] sm:$0xff]
        %v1118 = vld [vmem:[%s387 + $0x1458] sm:$0xff]
        %v1119 = vld [vmem:[%s387 + $0x1460] sm:$0xff]
        %v1120 = vld [vmem:[%s387 + $0x1468] sm:$0xff]
        %v1121 = vld [vmem:[%s387 + $0x1470] sm:$0xff]
        %v1122 = vld [vmem:[%s387 + $0x1478] sm:$0xff]
        %v1123 = vld [vmem:[%s387 + $0x1480] sm:$0xff]
        %v1124 = vld [vmem:[%s387 + $0x1488] sm:$0xff]
        %v1125 = vld [vmem:[%s387 + $0x1490] sm:$0xff]
        %v1126 = vld [vmem:[%s387 + $0x1498] sm:$0xff]
        %v1127 = vld [vmem:[%s387 + $0x14a0] sm:$0xff]
        %v1128 = vld [vmem:[%s387 + $0x14a8] sm:$0xff]
        %v1129 = vld [vmem:[%s387 + $0x14b0] sm:$0xff]
        %v1130 = vld [vmem:[%s387 + $0x14b8] sm:$0xff]
        %v1131 = vld [vmem:[%s387 + $0x14c0] sm:$0xff]
        %v1132 = vld [vmem:[%s387 + $0x14c8] sm:$0xff]
        %v1133 = vld [vmem:[%s387 + $0x14d0] sm:$0xff]
        %v1134 = vld [vmem:[%s387 + $0x14d8] sm:$0xff]
        %v1135 = vld [vmem:[%s387 + $0x14e0] sm:$0xff]
        %v1136 = vld [vmem:[%s387 + $0x14e8] sm:$0xff]
        %v1137 = vld [vmem:[%s387 + $0x14f0] sm:$0xff]
        %v1138 = vld [vmem:[%s387 + $0x14f8] sm:$0xff]
        %v1139 = vld [vmem:[%s387 + $0x1500] sm:$0xff]
        %v1140 = vld [vmem:[%s387 + $0x1508] sm:$0xff]
        %v1141 = vld [vmem:[%s387 + $0x1510] sm:$0xff]
        %v1142 = vld [vmem:[%s387 + $0x1518] sm:$0xff]
        %v1143 = vld [vmem:[%s387 + $0x1520] sm:$0xff]
        %v1144 = vld [vmem:[%s387 + $0x1528] sm:$0xff]
        %v1145 = vld [vmem:[%s387 + $0x1530] sm:$0xff]
        %v1146 = vld [vmem:[%s387 + $0x1538] sm:$0xff]
        %v1147 = vld [vmem:[%s387 + $0x1540] sm:$0xff]
        %v1148 = vld [vmem:[%s387 + $0x1548] sm:$0xff]
        %v1149 = vld [vmem:[%s387 + $0x1550] sm:$0xff]
        %v1150 = vld [vmem:[%s387 + $0x1558] sm:$0xff]
        %v1151 = vld [vmem:[%s387 + $0x1560] sm:$0xff]
        %v1152 = vld [vmem:[%s387 + $0x1568] sm:$0xff]
        %v1153 = vld [vmem:[%s387 + $0x1570] sm:$0xff]
        %v1154 = vld [vmem:[%s387 + $0x1578] sm:$0xff]
        %v1155 = vld [vmem:[%s387 + $0x1580] sm:$0xff]
        %v1156 = vld [vmem:[%s387 + $0x1588] sm:$0xff]
        %v1157 = vld [vmem:[%s387 + $0x1590] sm:$0xff]
        %v1158 = vld [vmem:[%s387 + $0x1598] sm:$0xff]
        %v1159 = vld [vmem:[%s387 + $0x15a0] sm:$0xff]
        %v1160 = vld [vmem:[%s387 + $0x15a8] sm:$0xff]
        %v1161 = vld [vmem:[%s387 + $0x15b0] sm:$0xff]
        %v1162 = vld [vmem:[%s387 + $0x15b8] sm:$0xff]
        %v1163 = vld [vmem:[%s387 + $0x15c0] sm:$0xff]
        %v1164 = vld [vmem:[%s387 + $0x15c8] sm:$0xff]
        %v1165 = vld [vmem:[%s387 + $0x15d0] sm:$0xff]
        %v1166 = vld [vmem:[%s387 + $0x15d8] sm:$0xff]
        %v1167 = vld [vmem:[%s387 + $0x15e0] sm:$0xff]
        %v1168 = vld [vmem:[%s387 + $0x15e8] sm:$0xff]
        %v1169 = vld [vmem:[%s387 + $0x15f0] sm:$0xff]
        %v1170 = vld [vmem:[%s387 + $0x15f8] sm:$0xff]
        %v1171 = vld [vmem:[%s387 + $0x1600] sm:$0xff]
        %v1172 = vld [vmem:[%s387 + $0x1608] sm:$0xff]
        %v1173 = vld [vmem:[%s387 + $0x1610] sm:$0xff]
        %v1174 = vld [vmem:[%s387 + $0x1618] sm:$0xff]
        %v1175 = vld [vmem:[%s387 + $0x1620] sm:$0xff]
        %v1176 = vld [vmem:[%s387 + $0x1628] sm:$0xff]
        %v1177 = vld [vmem:[%s387 + $0x1630] sm:$0xff]
        %v1178 = vld [vmem:[%s387 + $0x1638] sm:$0xff]
        %v1179 = vld [vmem:[%s387 + $0x1640] sm:$0xff]
        %v1180 = vld [vmem:[%s387 + $0x1648] sm:$0xff]
        %v1181 = vld [vmem:[%s387 + $0x1650] sm:$0xff]
        %v1182 = vld [vmem:[%s387 + $0x1658] sm:$0xff]
        %v1183 = vld [vmem:[%s387 + $0x1660] sm:$0xff]
        %v1184 = vld [vmem:[%s387 + $0x1668] sm:$0xff]
        %v1185 = vld [vmem:[%s387 + $0x1670] sm:$0xff]
        %v1186 = vld [vmem:[%s387 + $0x1678] sm:$0xff]
        %v1187 = vld [vmem:[%s387 + $0x1680] sm:$0xff]
        %v1188 = vld [vmem:[%s387 + $0x1688] sm:$0xff]
        %v1189 = vld [vmem:[%s387 + $0x1690] sm:$0xff]
        %v1190 = vld [vmem:[%s387 + $0x1698] sm:$0xff]
        %v1191 = vld [vmem:[%s387 + $0x16a0] sm:$0xff]
        %v1192 = vld [vmem:[%s387 + $0x16a8] sm:$0xff]
        %v1193 = vld [vmem:[%s387 + $0x16b0] sm:$0xff]
        %v1194 = vld [vmem:[%s387 + $0x16b8] sm:$0xff]
        %v1195 = vld [vmem:[%s387 + $0x16c0] sm:$0xff]
        %v1196 = vld [vmem:[%s387 + $0x16c8] sm:$0xff]
        %v1197 = vld [vmem:[%s387 + $0x16d0] sm:$0xff]
        %v1198 = vld [vmem:[%s387 + $0x16d8] sm:$0xff]
        %v1199 = vld [vmem:[%s387 + $0x16e0] sm:$0xff]
        %v1200 = vld [vmem:[%s387 + $0x16e8] sm:$0xff]
        %v1201 = vld [vmem:[%s387 + $0x16f0] sm:$0xff]
        %v1202 = vld [vmem:[%s387 + $0x16f8] sm:$0xff]
        %v1203 = vld [vmem:[%s387 + $0x1700] sm:$0xff]
        %v1204 = vld [vmem:[%s387 + $0x1708] sm:$0xff]
        %v1205 = vld [vmem:[%s387 + $0x1710] sm:$0xff]
        %v1206 = vld [vmem:[%s387 + $0x1718] sm:$0xff]
        %v1207 = vld [vmem:[%s387 + $0x1720] sm:$0xff]
        %v1208 = vld [vmem:[%s387 + $0x1728] sm:$0xff]
        %v1209 = vld [vmem:[%s387 + $0x1730] sm:$0xff]
        %v1210 = vld [vmem:[%s387 + $0x1738] sm:$0xff]
        %v1211 = vld [vmem:[%s387 + $0x1740] sm:$0xff]
        %v1212 = vld [vmem:[%s387 + $0x1748] sm:$0xff]
        %v1213 = vld [vmem:[%s387 + $0x1750] sm:$0xff]
        %v1214 = vld [vmem:[%s387 + $0x1758] sm:$0xff]
        %v1215 = vld [vmem:[%s387 + $0x1760] sm:$0xff]
        %v1216 = vld [vmem:[%s387 + $0x1768] sm:$0xff]
        %v1217 = vld [vmem:[%s387 + $0x1770] sm:$0xff]
        %v1218 = vld [vmem:[%s387 + $0x1778] sm:$0xff]
        %v1219 = vld [vmem:[%s387 + $0x1780] sm:$0xff]
        %v1220 = vld [vmem:[%s387 + $0x1788] sm:$0xff]
        %v1221 = vld [vmem:[%s387 + $0x1790] sm:$0xff]
        %v1222 = vld [vmem:[%s387 + $0x1798] sm:$0xff]
        %v1223 = vld [vmem:[%s387 + $0x17a0] sm:$0xff]
        %v1224 = vld [vmem:[%s387 + $0x17a8] sm:$0xff]
        %v1225 = vld [vmem:[%s387 + $0x17b0] sm:$0xff]
        %v1226 = vld [vmem:[%s387 + $0x17b8] sm:$0xff]
        %v1227 = vld [vmem:[%s387 + $0x17c0] sm:$0xff]
        %v1228 = vld [vmem:[%s387 + $0x17c8] sm:$0xff]
        %v1229 = vld [vmem:[%s387 + $0x17d0] sm:$0xff]
        %v1230 = vld [vmem:[%s387 + $0x17d8] sm:$0xff]
        %v1231 = vld [vmem:[%s387 + $0x17e0] sm:$0xff]
        %v1232 = vld [vmem:[%s387 + $0x17e8] sm:$0xff]
        %v1233 = vld [vmem:[%s387 + $0x17f0] sm:$0xff]
        %v1234 = vld [vmem:[%s387 + $0x17f8] sm:$0xff]
        %v1235 = vld [vmem:[%s387 + $0x1800] sm:$0xff]
        %v1236 = vld [vmem:[%s387 + $0x1808] sm:$0xff]
        %v1237 = vld [vmem:[%s387 + $0x1810] sm:$0xff]
        %v1238 = vld [vmem:[%s387 + $0x1818] sm:$0xff]
        %v1239 = vld [vmem:[%s387 + $0x1820] sm:$0xff]
        %v1240 = vld [vmem:[%s387 + $0x1828] sm:$0xff]
        %v1241 = vld [vmem:[%s387 + $0x1830] sm:$0xff]
        %v1242 = vld [vmem:[%s387 + $0x1838] sm:$0xff]
        %v1243 = vld [vmem:[%s387 + $0x1840] sm:$0xff]
        %v1244 = vld [vmem:[%s387 + $0x1848] sm:$0xff]
        %v1245 = vld [vmem:[%s387 + $0x1850] sm:$0xff]
        %v1246 = vld [vmem:[%s387 + $0x1858] sm:$0xff]
        %v1247 = vld [vmem:[%s387 + $0x1860] sm:$0xff]
        %v1248 = vld [vmem:[%s387 + $0x1868] sm:$0xff]
        %v1249 = vld [vmem:[%s387 + $0x1870] sm:$0xff]
        %v1250 = vld [vmem:[%s387 + $0x1878] sm:$0xff]
        %v1251 = vld [vmem:[%s387 + $0x1880] sm:$0xff]
        %v1252 = vld [vmem:[%s387 + $0x1888] sm:$0xff]
        %v1253 = vld [vmem:[%s387 + $0x1890] sm:$0xff]
        %v1254 = vld [vmem:[%s387 + $0x1898] sm:$0xff]
        %v1255 = vld [vmem:[%s387 + $0x18a0] sm:$0xff]
        %v1256 = vld [vmem:[%s387 + $0x18a8] sm:$0xff]
        %v1257 = vld [vmem:[%s387 + $0x18b0] sm:$0xff]
        %v1258 = vld [vmem:[%s387 + $0x18b8] sm:$0xff]
        %v1259 = vld [vmem:[%s387 + $0x18c0] sm:$0xff]
        %v1260 = vld [vmem:[%s387 + $0x18c8] sm:$0xff]
        %v1261 = vld [vmem:[%s387 + $0x18d0] sm:$0xff]
        %v1262 = vld [vmem:[%s387 + $0x18d8] sm:$0xff]
        %v1263 = vld [vmem:[%s387 + $0x18e0] sm:$0xff]
        %v1264 = vld [vmem:[%s387 + $0x18e8] sm:$0xff]
        %v1265 = vld [vmem:[%s387 + $0x18f0] sm:$0xff]
        %v1266 = vld [vmem:[%s387 + $0x18f8] sm:$0xff]
        %v1267 = vld [vmem:[%s387 + $0x1900] sm:$0xff]
        %v1268 = vld [vmem:[%s387 + $0x1908] sm:$0xff]
        %v1269 = vld [vmem:[%s387 + $0x1910] sm:$0xff]
        %v1270 = vld [vmem:[%s387 + $0x1918] sm:$0xff]
        %v1271 = vld [vmem:[%s387 + $0x1920] sm:$0xff]
        %v1272 = vld [vmem:[%s387 + $0x1928] sm:$0xff]
        %v1273 = vld [vmem:[%s387 + $0x1930] sm:$0xff]
        %v1274 = vld [vmem:[%s387 + $0x1938] sm:$0xff]
        %v1275 = vld [vmem:[%s387 + $0x1940] sm:$0xff]
        %v1276 = vld [vmem:[%s387 + $0x1948] sm:$0xff]
        %v1277 = vld [vmem:[%s387 + $0x1950] sm:$0xff]
        %v1278 = vld [vmem:[%s387 + $0x1958] sm:$0xff]
        %v1279 = vld [vmem:[%s387 + $0x1960] sm:$0xff]
        %v1280 = vld [vmem:[%s387 + $0x1968] sm:$0xff]
        %v1281 = vld [vmem:[%s387 + $0x1970] sm:$0xff]
        %v1282 = vld [vmem:[%s387 + $0x1978] sm:$0xff]
        %v1283 = vld [vmem:[%s387 + $0x1980] sm:$0xff]
        %v1284 = vld [vmem:[%s387 + $0x1988] sm:$0xff]
        %v1285 = vld [vmem:[%s387 + $0x1990] sm:$0xff]
        %v1286 = vld [vmem:[%s387 + $0x1998] sm:$0xff]
        %v1287 = vld [vmem:[%s387 + $0x19a0] sm:$0xff]
        %v1288 = vld [vmem:[%s387 + $0x19a8] sm:$0xff]
        %v1289 = vld [vmem:[%s387 + $0x19b0] sm:$0xff]
        %v1290 = vld [vmem:[%s387 + $0x19b8] sm:$0xff]
        %v1291 = vld [vmem:[%s387 + $0x19c0] sm:$0xff]
        %v1292 = vld [vmem:[%s387 + $0x19c8] sm:$0xff]
        %v1293 = vld [vmem:[%s387 + $0x19d0] sm:$0xff]
        %v1294 = vld [vmem:[%s387 + $0x19d8] sm:$0xff]
        %v1295 = vld [vmem:[%s387 + $0x19e0] sm:$0xff]
        %v1296 = vld [vmem:[%s387 + $0x19e8] sm:$0xff]
        %v1297 = vld [vmem:[%s387 + $0x19f0] sm:$0xff]
        %v1298 = vld [vmem:[%s387 + $0x19f8] sm:$0xff]
        %v1299 = vld [vmem:[%s387 + $0x1a00] sm:$0xff]
        %v1300 = vld [vmem:[%s387 + $0x1a08] sm:$0xff]
        %v1301 = vld [vmem:[%s387 + $0x1a10] sm:$0xff]
        %v1302 = vld [vmem:[%s387 + $0x1a18] sm:$0xff]
        %v1303 = vld [vmem:[%s387 + $0x1a20] sm:$0xff]
        %v1304 = vld [vmem:[%s387 + $0x1a28] sm:$0xff]
        %v1305 = vld [vmem:[%s387 + $0x1a30] sm:$0xff]
        %v1306 = vld [vmem:[%s387 + $0x1a38] sm:$0xff]
        %v1307 = vld [vmem:[%s387 + $0x1a40] sm:$0xff]
        %v1308 = vld [vmem:[%s387 + $0x1a48] sm:$0xff]
        %v1309 = vld [vmem:[%s387 + $0x1a50] sm:$0xff]
        %v1310 = vld [vmem:[%s387 + $0x1a58] sm:$0xff]
        %v1311 = vld [vmem:[%s387 + $0x1a60] sm:$0xff]
        %v1312 = vld [vmem:[%s387 + $0x1a68] sm:$0xff]
        %v1313 = vld [vmem:[%s387 + $0x1a70] sm:$0xff]
        %v1314 = vld [vmem:[%s387 + $0x1a78] sm:$0xff]
        %v1315 = vld [vmem:[%s387 + $0x1a80] sm:$0xff]
        %v1316 = vld [vmem:[%s387 + $0x1a88] sm:$0xff]
        %v1317 = vld [vmem:[%s387 + $0x1a90] sm:$0xff]
        %v1318 = vld [vmem:[%s387 + $0x1a98] sm:$0xff]
        %v1319 = vld [vmem:[%s387 + $0x1aa0] sm:$0xff]
        %v1320 = vld [vmem:[%s387 + $0x1aa8] sm:$0xff]
        %v1321 = vld [vmem:[%s387 + $0x1ab0] sm:$0xff]
        %v1322 = vld [vmem:[%s387 + $0x1ab8] sm:$0xff]
        %v1323 = vld [vmem:[%s387 + $0x1ac0] sm:$0xff]
        %v1324 = vld [vmem:[%s387 + $0x1ac8] sm:$0xff]
        %v1325 = vld [vmem:[%s387 + $0x1ad0] sm:$0xff]
        %v1326 = vld [vmem:[%s387 + $0x1ad8] sm:$0xff]
        %v1327 = vld [vmem:[%s387 + $0x1ae0] sm:$0xff]
        %v1328 = vld [vmem:[%s387 + $0x1ae8] sm:$0xff]
        %v1329 = vld [vmem:[%s387 + $0x1af0] sm:$0xff]
        %v1330 = vld [vmem:[%s387 + $0x1af8] sm:$0xff]
        %v1331 = vld [vmem:[%s387 + $0x1b00] sm:$0xff]
        %v1332 = vld [vmem:[%s387 + $0x1b08] sm:$0xff]
        %v1333 = vld [vmem:[%s387 + $0x1b10] sm:$0xff]
        %v1334 = vld [vmem:[%s387 + $0x1b18] sm:$0xff]
        %v1335 = vld [vmem:[%s387 + $0x1b20] sm:$0xff]
        %v1336 = vld [vmem:[%s387 + $0x1b28] sm:$0xff]
        %v1337 = vld [vmem:[%s387 + $0x1b30] sm:$0xff]
        %v1338 = vld [vmem:[%s387 + $0x1b38] sm:$0xff]
        %v1339 = vld [vmem:[%s387 + $0x1b40] sm:$0xff]
        %v1340 = vld [vmem:[%s387 + $0x1b48] sm:$0xff]
        %v1341 = vld [vmem:[%s387 + $0x1b50] sm:$0xff]
        %v1342 = vld [vmem:[%s387 + $0x1b58] sm:$0xff]
        %v1343 = vld [vmem:[%s387 + $0x1b60] sm:$0xff]
        %v1344 = vld [vmem:[%s387 + $0x1b68] sm:$0xff]
        %v1345 = vld [vmem:[%s387 + $0x1b70] sm:$0xff]
        %v1346 = vld [vmem:[%s387 + $0x1b78] sm:$0xff]
        %v1347 = vld [vmem:[%s387 + $0x1b80] sm:$0xff]
        %v1348 = vld [vmem:[%s387 + $0x1b88] sm:$0xff]
        %v1349 = vld [vmem:[%s387 + $0x1b90] sm:$0xff]
        %v1350 = vld [vmem:[%s387 + $0x1b98] sm:$0xff]
        %v1351 = vld [vmem:[%s387 + $0x1ba0] sm:$0xff]
        %v1352 = vld [vmem:[%s387 + $0x1ba8] sm:$0xff]
        %v1353 = vld [vmem:[%s387 + $0x1bb0] sm:$0xff]
        %v1354 = vld [vmem:[%s387 + $0x1bb8] sm:$0xff]
        %v1355 = vld [vmem:[%s387 + $0x1bc0] sm:$0xff]
        %v1356 = vld [vmem:[%s387 + $0x1bc8] sm:$0xff]
        %v1357 = vld [vmem:[%s387 + $0x1bd0] sm:$0xff]
        %v1358 = vld [vmem:[%s387 + $0x1bd8] sm:$0xff]
        %v1359 = vld [vmem:[%s387 + $0x1be0] sm:$0xff]
        %v1360 = vld [vmem:[%s387 + $0x1be8] sm:$0xff]
        %v1361 = vld [vmem:[%s387 + $0x1bf0] sm:$0xff]
        %v1362 = vld [vmem:[%s387 + $0x1bf8] sm:$0xff]
        %v1363 = vld [vmem:[%s387 + $0x1c00] sm:$0xff]
        %v1364 = vld [vmem:[%s387 + $0x1c08] sm:$0xff]
        %v1365 = vld [vmem:[%s387 + $0x1c10] sm:$0xff]
        %v1366 = vld [vmem:[%s387 + $0x1c18] sm:$0xff]
        %v1367 = vld [vmem:[%s387 + $0x1c20] sm:$0xff]
        %v1368 = vld [vmem:[%s387 + $0x1c28] sm:$0xff]
        %v1369 = vld [vmem:[%s387 + $0x1c30] sm:$0xff]
        %v1370 = vld [vmem:[%s387 + $0x1c38] sm:$0xff]
        %v1371 = vld [vmem:[%s387 + $0x1c40] sm:$0xff]
        %v1372 = vld [vmem:[%s387 + $0x1c48] sm:$0xff]
        %v1373 = vld [vmem:[%s387 + $0x1c50] sm:$0xff]
        %v1374 = vld [vmem:[%s387 + $0x1c58] sm:$0xff]
        %v1375 = vld [vmem:[%s387 + $0x1c60] sm:$0xff]
        %v1376 = vld [vmem:[%s387 + $0x1c68] sm:$0xff]
        %v1377 = vld [vmem:[%s387 + $0x1c70] sm:$0xff]
        %v1378 = vld [vmem:[%s387 + $0x1c78] sm:$0xff]
        %v1379 = vld [vmem:[%s387 + $0x1c80] sm:$0xff]
        %v1380 = vld [vmem:[%s387 + $0x1c88] sm:$0xff]
        %v1381 = vld [vmem:[%s387 + $0x1c90] sm:$0xff]
        %v1382 = vld [vmem:[%s387 + $0x1c98] sm:$0xff]
        %v1383 = vld [vmem:[%s387 + $0x1ca0] sm:$0xff]
        %v1384 = vld [vmem:[%s387 + $0x1ca8] sm:$0xff]
        %v1385 = vld [vmem:[%s387 + $0x1cb0] sm:$0xff]
        %v1386 = vld [vmem:[%s387 + $0x1cb8] sm:$0xff]
        %v1387 = vld [vmem:[%s387 + $0x1cc0] sm:$0xff]
        %v1388 = vld [vmem:[%s387 + $0x1cc8] sm:$0xff]
        %v1389 = vld [vmem:[%s387 + $0x1cd0] sm:$0xff]
        %v1390 = vld [vmem:[%s387 + $0x1cd8] sm:$0xff]
        %v1391 = vld [vmem:[%s387 + $0x1ce0] sm:$0xff]
        %v1392 = vld [vmem:[%s387 + $0x1ce8] sm:$0xff]
        %v1393 = vld [vmem:[%s387 + $0x1cf0] sm:$0xff]
        %v1394 = vld [vmem:[%s387 + $0x1cf8] sm:$0xff]
        %v1395 = vld [vmem:[%s387 + $0x1d00] sm:$0xff]
        %v1396 = vld [vmem:[%s387 + $0x1d08] sm:$0xff]
        %v1397 = vld [vmem:[%s387 + $0x1d10] sm:$0xff]
        %v1398 = vld [vmem:[%s387 + $0x1d18] sm:$0xff]
        %v1399 = vld [vmem:[%s387 + $0x1d20] sm:$0xff]
        %v1400 = vld [vmem:[%s387 + $0x1d28] sm:$0xff]
        %v1401 = vld [vmem:[%s387 + $0x1d30] sm:$0xff]
        %v1402 = vld [vmem:[%s387 + $0x1d38] sm:$0xff]
        %v1403 = vld [vmem:[%s387 + $0x1d40] sm:$0xff]
        %v1404 = vld [vmem:[%s387 + $0x1d48] sm:$0xff]
        %v1405 = vld [vmem:[%s387 + $0x1d50] sm:$0xff]
        %v1406 = vld [vmem:[%s387 + $0x1d58] sm:$0xff]
        %v1407 = vld [vmem:[%s387 + $0x1d60] sm:$0xff]
        %v1408 = vld [vmem:[%s387 + $0x1d68] sm:$0xff]
        %v1409 = vld [vmem:[%s387 + $0x1d70] sm:$0xff]
        %v1410 = vld [vmem:[%s387 + $0x1d78] sm:$0xff]
        %v1411 = vld [vmem:[%s387 + $0x1d80] sm:$0xff]
        %v1412 = vld [vmem:[%s387 + $0x1d88] sm:$0xff]
        %v1413 = vld [vmem:[%s387 + $0x1d90] sm:$0xff]
        %v1414 = vld [vmem:[%s387 + $0x1d98] sm:$0xff]
        %v1415 = vld [vmem:[%s387 + $0x1da0] sm:$0xff]
        %v1416 = vld [vmem:[%s387 + $0x1da8] sm:$0xff]
        %v1417 = vld [vmem:[%s387 + $0x1db0] sm:$0xff]
        %v1418 = vld [vmem:[%s387 + $0x1db8] sm:$0xff]
        %v1419 = vld [vmem:[%s387 + $0x1dc0] sm:$0xff]
        %v1420 = vld [vmem:[%s387 + $0x1dc8] sm:$0xff]
        %v1421 = vld [vmem:[%s387 + $0x1dd0] sm:$0xff]
        %v1422 = vld [vmem:[%s387 + $0x1dd8] sm:$0xff]
        %v1423 = vld [vmem:[%s387 + $0x1de0] sm:$0xff]
        %v1424 = vld [vmem:[%s387 + $0x1de8] sm:$0xff]
        %v1425 = vld [vmem:[%s387 + $0x1df0] sm:$0xff]
        %v1426 = vld [vmem:[%s387 + $0x1df8] sm:$0xff]
        %v1427 = vld [vmem:[%s387 + $0x1e00] sm:$0xff]
        %v1428 = vld [vmem:[%s387 + $0x1e08] sm:$0xff]
        %v1429 = vld [vmem:[%s387 + $0x1e10] sm:$0xff]
        %v1430 = vld [vmem:[%s387 + $0x1e18] sm:$0xff]
        %v1431 = vld [vmem:[%s387 + $0x1e20] sm:$0xff]
        %v1432 = vld [vmem:[%s387 + $0x1e28] sm:$0xff]
        %v1433 = vld [vmem:[%s387 + $0x1e30] sm:$0xff]
        %v1434 = vld [vmem:[%s387 + $0x1e38] sm:$0xff]
        %v1435 = vld [vmem:[%s387 + $0x1e40] sm:$0xff]
        %v1436 = vld [vmem:[%s387 + $0x1e48] sm:$0xff]
        %v1437 = vld [vmem:[%s387 + $0x1e50] sm:$0xff]
        %v1438 = vld [vmem:[%s387 + $0x1e58] sm:$0xff]
        %v1439 = vld [vmem:[%s387 + $0x1e60] sm:$0xff]
        %v1440 = vld [vmem:[%s387 + $0x1e68] sm:$0xff]
        %v1441 = vld [vmem:[%s387 + $0x1e70] sm:$0xff]
        %v1442 = vld [vmem:[%s387 + $0x1e78] sm:$0xff]
        %v1443 = vld [vmem:[%s387 + $0x1e80] sm:$0xff]
        %v1444 = vld [vmem:[%s387 + $0x1e88] sm:$0xff]
        %v1445 = vld [vmem:[%s387 + $0x1e90] sm:$0xff]
        %v1446 = vld [vmem:[%s387 + $0x1e98] sm:$0xff]
        %v1447 = vld [vmem:[%s387 + $0x1ea0] sm:$0xff]
        %v1448 = vld [vmem:[%s387 + $0x1ea8] sm:$0xff]
        %v1449 = vld [vmem:[%s387 + $0x1eb0] sm:$0xff]
        %v1450 = vld [vmem:[%s387 + $0x1eb8] sm:$0xff]
        %v1451 = vld [vmem:[%s387 + $0x1ec0] sm:$0xff]
        %v1452 = vld [vmem:[%s387 + $0x1ec8] sm:$0xff]
        %v1453 = vld [vmem:[%s387 + $0x1ed0] sm:$0xff]
        %v1454 = vld [vmem:[%s387 + $0x1ed8] sm:$0xff]
        %v1455 = vld [vmem:[%s387 + $0x1ee0] sm:$0xff]
        %v1456 = vld [vmem:[%s387 + $0x1ee8] sm:$0xff]
        %v1457 = vld [vmem:[%s387 + $0x1ef0] sm:$0xff]
        %v1458 = vld [vmem:[%s387 + $0x1ef8] sm:$0xff]
        %v1459 = vld [vmem:[%s387 + $0x1f00] sm:$0xff]
        %v1460 = vld [vmem:[%s387 + $0x1f08] sm:$0xff]
        %v1461 = vld [vmem:[%s387 + $0x1f10] sm:$0xff]
        %v1462 = vld [vmem:[%s387 + $0x1f18] sm:$0xff]
        %v1463 = vld [vmem:[%s387 + $0x1f20] sm:$0xff]
        %v1464 = vld [vmem:[%s387 + $0x1f28] sm:$0xff]
        %v1465 = vld [vmem:[%s387 + $0x1f30] sm:$0xff]
        %v1466 = vld [vmem:[%s387 + $0x1f38] sm:$0xff]
        %v1467 = vld [vmem:[%s387 + $0x1f40] sm:$0xff]
        %v1468 = vld [vmem:[%s387 + $0x1f48] sm:$0xff]
        %v1469 = vld [vmem:[%s387 + $0x1f50] sm:$0xff]
        %v1470 = vld [vmem:[%s387 + $0x1f58] sm:$0xff]
        %v1471 = vld [vmem:[%s387 + $0x1f60] sm:$0xff]
        %v1472 = vld [vmem:[%s387 + $0x1f68] sm:$0xff]
        %v1473 = vld [vmem:[%s387 + $0x1f70] sm:$0xff]
        %v1474 = vld [vmem:[%s387 + $0x1f78] sm:$0xff]
        %v1475 = vld [vmem:[%s387 + $0x1f80] sm:$0xff]
        %v1476 = vld [vmem:[%s387 + $0x1f88] sm:$0xff]
        %v1477 = vld [vmem:[%s387 + $0x1f90] sm:$0xff]
        %v1478 = vld [vmem:[%s387 + $0x1f98] sm:$0xff]
        %v1479 = vld [vmem:[%s387 + $0x1fa0] sm:$0xff]
        %v1480 = vld [vmem:[%s387 + $0x1fa8] sm:$0xff]
        %v1481 = vld [vmem:[%s387 + $0x1fb0] sm:$0xff]
        %v1482 = vld [vmem:[%s387 + $0x1fb8] sm:$0xff]
        %v1483 = vld [vmem:[%s387 + $0x1fc0] sm:$0xff]
        %v1484 = vld [vmem:[%s387 + $0x1fc8] sm:$0xff]
        %v1485 = vld [vmem:[%s387 + $0x1fd0] sm:$0xff]
        %v1486 = vld [vmem:[%s387 + $0x1fd8] sm:$0xff]
        %v1487 = vld [vmem:[%s387 + $0x1fe0] sm:$0xff]
        %v1488 = vld [vmem:[%s387 + $0x1fe8] sm:$0xff]
        %v1489 = vld [vmem:[%s387 + $0x1ff0] sm:$0xff]
        %v1490 = vld [vmem:[%s387 + $0x1ff8] sm:$0xff]
        %1493 = vst [vmem:[#allocation1] ss:$4 sm:$0xff] %v465
        %s1494 = scalar_lea.vmem [#allocation1], 32
        %1495 = vst [vmem:[%s1494] ss:$4 sm:$0xff] %v466
        %v1496 = vld.sshfl [vmem:[#allocation1] sm:$0xff pattern:$0x73625140]
        %v1497 = vld.sshfl [vmem:[#allocation1 + $0x8] sm:$0xff pattern:$0x73625140]
        %v1498 = vld.sshfl [vmem:[#allocation1 + $0x10] sm:$0xff pattern:$0x73625140]
        %v1499 = vld.sshfl [vmem:[#allocation1 + $0x18] sm:$0xff pattern:$0x73625140]
        %v1500 = vld.sshfl [vmem:[#allocation1 + $0x20] sm:$0xff pattern:$0x73625140]
        %v1501 = vld.sshfl [vmem:[#allocation1 + $0x28] sm:$0xff pattern:$0x73625140]
        %v1502 = vld.sshfl [vmem:[#allocation1 + $0x30] sm:$0xff pattern:$0x73625140]
        %v1503 = vld.sshfl [vmem:[#allocation1 + $0x38] sm:$0xff pattern:$0x73625140]
        %1512 = vmatpush.msra.mxu0 %v587
        %1513 = vmatpush.msra.mxu0 %v579
        %1514 = vmatpush.msra.mxu0 %v571
        %1515 = vmatpush.msra.mxu0 %v563
        %1516 = vmatpush.msra.mxu0 %v555
        %1517 = vmatpush.msra.mxu0 %v547
        %1518 = vmatpush.msra.mxu0 %v539
        %1519 = vmatpush.msra.mxu0 %v531
        %1520 = vmatpush.msra.mxu0 %v523
        %1521 = vmatpush.msra.mxu0 %v515
        %1522 = vmatpush.msra.mxu0 %v507
        %1523 = vmatpush.msra.mxu0 %v499
        %1524 = vmatpush.msra.mxu0 %v491
        %1525 = vmatpush.msra.mxu0 %v483
        %1526 = vmatpush.msra.mxu0 %v475
        %1527 = vmatpush.msra.mxu0 %v467
        %1528 = vmatmul.f32.gmra.mxu0 %v1496
        %v1529 = vpop.f32.mrf.mxu0
        %v1530 = vadd.f32 0.0, %v1529
        %1531 = vdwg.mxu0
        %1532 = vmatpush.msra.mxu0 %v715
        %1533 = vmatpush.msra.mxu0 %v707
        %1534 = vmatpush.msra.mxu0 %v699
        %1535 = vmatpush.msra.mxu0 %v691
        %1536 = vmatpush.msra.mxu0 %v683
        %1537 = vmatpush.msra.mxu0 %v675
        %1538 = vmatpush.msra.mxu0 %v667
        %1539 = vmatpush.msra.mxu0 %v659
        %1540 = vmatpush.msra.mxu0 %v651
        %1541 = vmatpush.msra.mxu0 %v643
        %1542 = vmatpush.msra.mxu0 %v635
        %1543 = vmatpush.msra.mxu0 %v627
        %1544 = vmatpush.msra.mxu0 %v619
        %1545 = vmatpush.msra.mxu0 %v611
        %1546 = vmatpush.msra.mxu0 %v603
        %1547 = vmatpush.msra.mxu0 %v595
        %1548 = vmatmul.f32.gmra.mxu0 %v1497
        %v1549 = vpop.f32.mrf.mxu0
        %v1550 = vadd.f32 %v1530, %v1549
        %1551 = vdwg.mxu0
        %1552 = vmatpush.msra.mxu0 %v843
        %1553 = vmatpush.msra.mxu0 %v835
        %1554 = vmatpush.msra.mxu0 %v827
        %1555 = vmatpush.msra.mxu0 %v819
        %1556 = vmatpush.msra.mxu0 %v811
        %1557 = vmatpush.msra.mxu0 %v803
        %1558 = vmatpush.msra.mxu0 %v795
        %1559 = vmatpush.msra.mxu0 %v787
        %1560 = vmatpush.msra.mxu0 %v779
        %1561 = vmatpush.msra.mxu0 %v771
        %1562 = vmatpush.msra.mxu0 %v763
        %1563 = vmatpush.msra.mxu0 %v755
        %1564 = vmatpush.msra.mxu0 %v747
        %1565 = vmatpush.msra.mxu0 %v739
        %1566 = vmatpush.msra.mxu0 %v731
        %1567 = vmatpush.msra.mxu0 %v723
        %1568 = vmatmul.f32.gmra.mxu0 %v1498
        %v1569 = vpop.f32.mrf.mxu0
        %v1570 = vadd.f32 %v1550, %v1569
        %1571 = vdwg.mxu0
        %1572 = vmatpush.msra.mxu0 %v971
        %1573 = vmatpush.msra.mxu0 %v963
        %1574 = vmatpush.msra.mxu0 %v955
        %1575 = vmatpush.msra.mxu0 %v947
        %1576 = vmatpush.msra.mxu0 %v939
        %1577 = vmatpush.msra.mxu0 %v931
        %1578 = vmatpush.msra.mxu0 %v923
        %1579 = vmatpush.msra.mxu0 %v915
        %1580 = vmatpush.msra.mxu0 %v907
        %1581 = vmatpush.msra.mxu0 %v899
        %1582 = vmatpush.msra.mxu0 %v891
        %1583 = vmatpush.msra.mxu0 %v883
        %1584 = vmatpush.msra.mxu0 %v875
        %1585 = vmatpush.msra.mxu0 %v867
        %1586 = vmatpush.msra.mxu0 %v859
        %1587 = vmatpush.msra.mxu0 %v851
        %1588 = vmatmul.f32.gmra.mxu0 %v1499
        %v1589 = vpop.f32.mrf.mxu0
        %v1590 = vadd.f32 %v1570, %v1589
        %1591 = vdwg.mxu0
        %1592 = vmatpush.msra.mxu0 %v1099
        %1593 = vmatpush.msra.mxu0 %v1091
        %1594 = vmatpush.msra.mxu0 %v1083
        %1595 = vmatpush.msra.mxu0 %v1075
        %1596 = vmatpush.msra.mxu0 %v1067
        %1597 = vmatpush.msra.mxu0 %v1059
        %1598 = vmatpush.msra.mxu0 %v1051
        %1599 = vmatpush.msra.mxu0 %v1043
        %1600 = vmatpush.msra.mxu0 %v1035
        %1601 = vmatpush.msra.mxu0 %v1027
        %1602 = vmatpush.msra.mxu0 %v1019
        %1603 = vmatpush.msra.mxu0 %v1011
        %1604 = vmatpush.msra.mxu0 %v1003
        %1605 = vmatpush.msra.mxu0 %v995
        %1606 = vmatpush.msra.mxu0 %v987
        %1607 = vmatpush.msra.mxu0 %v979
        %1608 = vmatmul.f32.gmra.mxu0 %v1500
        %v1609 = vpop.f32.mrf.mxu0
        %v1610 = vadd.f32 %v1590, %v1609
        %1611 = vdwg.mxu0
        %1612 = vmatpush.msra.mxu0 %v1227
        %1613 = vmatpush.msra.mxu0 %v1219
        %1614 = vmatpush.msra.mxu0 %v1211
        %1615 = vmatpush.msra.mxu0 %v1203
        %1616 = vmatpush.msra.mxu0 %v1195
        %1617 = vmatpush.msra.mxu0 %v1187
        %1618 = vmatpush.msra.mxu0 %v1179
        %1619 = vmatpush.msra.mxu0 %v1171
        %1620 = vmatpush.msra.mxu0 %v1163
        %1621 = vmatpush.msra.mxu0 %v1155
        %1622 = vmatpush.msra.mxu0 %v1147
        %1623 = vmatpush.msra.mxu0 %v1139
        %1624 = vmatpush.msra.mxu0 %v1131
        %1625 = vmatpush.msra.mxu0 %v1123
        %1626 = vmatpush.msra.mxu0 %v1115
        %1627 = vmatpush.msra.mxu0 %v1107
        %1628 = vmatmul.f32.gmra.mxu0 %v1501
        %v1629 = vpop.f32.mrf.mxu0
        %v1630 = vadd.f32 %v1610, %v1629
        %1631 = vdwg.mxu0
        %1632 = vmatpush.msra.mxu0 %v1355
        %1633 = vmatpush.msra.mxu0 %v1347
        %1634 = vmatpush.msra.mxu0 %v1339
        %1635 = vmatpush.msra.mxu0 %v1331
        %1636 = vmatpush.msra.mxu0 %v1323
        %1637 = vmatpush.msra.mxu0 %v1315
        %1638 = vmatpush.msra.mxu0 %v1307
        %1639 = vmatpush.msra.mxu0 %v1299
        %1640 = vmatpush.msra.mxu0 %v1291
        %1641 = vmatpush.msra.mxu0 %v1283
        %1642 = vmatpush.msra.mxu0 %v1275
        %1643 = vmatpush.msra.mxu0 %v1267
        %1644 = vmatpush.msra.mxu0 %v1259
        %1645 = vmatpush.msra.mxu0 %v1251
        %1646 = vmatpush.msra.mxu0 %v1243
        %1647 = vmatpush.msra.mxu0 %v1235
        %1648 = vmatmul.f32.gmra.mxu0 %v1502
        %v1649 = vpop.f32.mrf.mxu0
        %v1650 = vadd.f32 %v1630, %v1649
        %1651 = vdwg.mxu0
        %1652 = vmatpush.msra.mxu0 %v1483
        %1653 = vmatpush.msra.mxu0 %v1475
        %1654 = vmatpush.msra.mxu0 %v1467
        %1655 = vmatpush.msra.mxu0 %v1459
        %1656 = vmatpush.msra.mxu0 %v1451
        %1657 = vmatpush.msra.mxu0 %v1443
        %1658 = vmatpush.msra.mxu0 %v1435
        %1659 = vmatpush.msra.mxu0 %v1427
        %1660 = vmatpush.msra.mxu0 %v1419
        %1661 = vmatpush.msra.mxu0 %v1411
        %1662 = vmatpush.msra.mxu0 %v1403
        %1663 = vmatpush.msra.mxu0 %v1395
        %1664 = vmatpush.msra.mxu0 %v1387
        %1665 = vmatpush.msra.mxu0 %v1379
        %1666 = vmatpush.msra.mxu0 %v1371
        %1667 = vmatpush.msra.mxu0 %v1363
        %1668 = vmatmul.f32.gmra.mxu0 %v1503
        %v1669 = vpop.f32.mrf.mxu0
        %v1670 = vadd.f32 %v1650, %v1669
        %1671 = vdwg.mxu0
        %1672 = vmatpush.msra.mxu0 %v588
        %1673 = vmatpush.msra.mxu0 %v580
        %1674 = vmatpush.msra.mxu0 %v572
        %1675 = vmatpush.msra.mxu0 %v564
        %1676 = vmatpush.msra.mxu0 %v556
        %1677 = vmatpush.msra.mxu0 %v548
        %1678 = vmatpush.msra.mxu0 %v540
        %1679 = vmatpush.msra.mxu0 %v532
        %1680 = vmatpush.msra.mxu0 %v524
        %1681 = vmatpush.msra.mxu0 %v516
        %1682 = vmatpush.msra.mxu0 %v508
        %1683 = vmatpush.msra.mxu0 %v500
        %1684 = vmatpush.msra.mxu0 %v492
        %1685 = vmatpush.msra.mxu0 %v484
        %1686 = vmatpush.msra.mxu0 %v476
        %1687 = vmatpush.msra.mxu0 %v468
        %1688 = vmatmul.f32.gmra.mxu0 %v1496
        %v1689 = vpop.f32.mrf.mxu0
        %v1690 = vadd.f32 0.0, %v1689
        %1691 = vdwg.mxu0
        %1692 = vmatpush.msra.mxu0 %v716
        %1693 = vmatpush.msra.mxu0 %v708
        %1694 = vmatpush.msra.mxu0 %v700
        %1695 = vmatpush.msra.mxu0 %v692
        %1696 = vmatpush.msra.mxu0 %v684
        %1697 = vmatpush.msra.mxu0 %v676
        %1698 = vmatpush.msra.mxu0 %v668
        %1699 = vmatpush.msra.mxu0 %v660
        %1700 = vmatpush.msra.mxu0 %v652
        %1701 = vmatpush.msra.mxu0 %v644
        %1702 = vmatpush.msra.mxu0 %v636
        %1703 = vmatpush.msra.mxu0 %v628
        %1704 = vmatpush.msra.mxu0 %v620
        %1705 = vmatpush.msra.mxu0 %v612
        %1706 = vmatpush.msra.mxu0 %v604
        %1707 = vmatpush.msra.mxu0 %v596
        %1708 = vmatmul.f32.gmra.mxu0 %v1497
        %v1709 = vpop.f32.mrf.mxu0
        %v1710 = vadd.f32 %v1690, %v1709
        %1711 = vdwg.mxu0
        %1712 = vmatpush.msra.mxu0 %v844
        %1713 = vmatpush.msra.mxu0 %v836
        %1714 = vmatpush.msra.mxu0 %v828
        %1715 = vmatpush.msra.mxu0 %v820
        %1716 = vmatpush.msra.mxu0 %v812
        %1717 = vmatpush.msra.mxu0 %v804
        %1718 = vmatpush.msra.mxu0 %v796
        %1719 = vmatpush.msra.mxu0 %v788
        %1720 = vmatpush.msra.mxu0 %v780
        %1721 = vmatpush.msra.mxu0 %v772
        %1722 = vmatpush.msra.mxu0 %v764
        %1723 = vmatpush.msra.mxu0 %v756
        %1724 = vmatpush.msra.mxu0 %v748
        %1725 = vmatpush.msra.mxu0 %v740
        %1726 = vmatpush.msra.mxu0 %v732
        %1727 = vmatpush.msra.mxu0 %v724
        %1728 = vmatmul.f32.gmra.mxu0 %v1498
        %v1729 = vpop.f32.mrf.mxu0
        %v1730 = vadd.f32 %v1710, %v1729
        %1731 = vdwg.mxu0
        %1732 = vmatpush.msra.mxu0 %v972
        %1733 = vmatpush.msra.mxu0 %v964
        %1734 = vmatpush.msra.mxu0 %v956
        %1735 = vmatpush.msra.mxu0 %v948
        %1736 = vmatpush.msra.mxu0 %v940
        %1737 = vmatpush.msra.mxu0 %v932
        %1738 = vmatpush.msra.mxu0 %v924
        %1739 = vmatpush.msra.mxu0 %v916
        %1740 = vmatpush.msra.mxu0 %v908
        %1741 = vmatpush.msra.mxu0 %v900
        %1742 = vmatpush.msra.mxu0 %v892
        %1743 = vmatpush.msra.mxu0 %v884
        %1744 = vmatpush.msra.mxu0 %v876
        %1745 = vmatpush.msra.mxu0 %v868
        %1746 = vmatpush.msra.mxu0 %v860
        %1747 = vmatpush.msra.mxu0 %v852
        %1748 = vmatmul.f32.gmra.mxu0 %v1499
        %v1749 = vpop.f32.mrf.mxu0
        %v1750 = vadd.f32 %v1730, %v1749
        %1751 = vdwg.mxu0
        %1752 = vmatpush.msra.mxu0 %v1100
        %1753 = vmatpush.msra.mxu0 %v1092
        %1754 = vmatpush.msra.mxu0 %v1084
        %1755 = vmatpush.msra.mxu0 %v1076
        %1756 = vmatpush.msra.mxu0 %v1068
        %1757 = vmatpush.msra.mxu0 %v1060
        %1758 = vmatpush.msra.mxu0 %v1052
        %1759 = vmatpush.msra.mxu0 %v1044
        %1760 = vmatpush.msra.mxu0 %v1036
        %1761 = vmatpush.msra.mxu0 %v1028
        %1762 = vmatpush.msra.mxu0 %v1020
        %1763 = vmatpush.msra.mxu0 %v1012
        %1764 = vmatpush.msra.mxu0 %v1004
        %1765 = vmatpush.msra.mxu0 %v996
        %1766 = vmatpush.msra.mxu0 %v988
        %1767 = vmatpush.msra.mxu0 %v980
        %1768 = vmatmul.f32.gmra.mxu0 %v1500
        %v1769 = vpop.f32.mrf.mxu0
        %v1770 = vadd.f32 %v1750, %v1769
        %1771 = vdwg.mxu0
        %1772 = vmatpush.msra.mxu0 %v1228
        %1773 = vmatpush.msra.mxu0 %v1220
        %1774 = vmatpush.msra.mxu0 %v1212
        %1775 = vmatpush.msra.mxu0 %v1204
        %1776 = vmatpush.msra.mxu0 %v1196
        %1777 = vmatpush.msra.mxu0 %v1188
        %1778 = vmatpush.msra.mxu0 %v1180
        %1779 = vmatpush.msra.mxu0 %v1172
        %1780 = vmatpush.msra.mxu0 %v1164
        %1781 = vmatpush.msra.mxu0 %v1156
        %1782 = vmatpush.msra.mxu0 %v1148
        %1783 = vmatpush.msra.mxu0 %v1140
        %1784 = vmatpush.msra.mxu0 %v1132
        %1785 = vmatpush.msra.mxu0 %v1124
        %1786 = vmatpush.msra.mxu0 %v1116
        %1787 = vmatpush.msra.mxu0 %v1108
        %1788 = vmatmul.f32.gmra.mxu0 %v1501
        %v1789 = vpop.f32.mrf.mxu0
        %v1790 = vadd.f32 %v1770, %v1789
        %1791 = vdwg.mxu0
        %1792 = vmatpush.msra.mxu0 %v1356
        %1793 = vmatpush.msra.mxu0 %v1348
        %1794 = vmatpush.msra.mxu0 %v1340
        %1795 = vmatpush.msra.mxu0 %v1332
        %1796 = vmatpush.msra.mxu0 %v1324
        %1797 = vmatpush.msra.mxu0 %v1316
        %1798 = vmatpush.msra.mxu0 %v1308
        %1799 = vmatpush.msra.mxu0 %v1300
        %1800 = vmatpush.msra.mxu0 %v1292
        %1801 = vmatpush.msra.mxu0 %v1284
        %1802 = vmatpush.msra.mxu0 %v1276
        %1803 = vmatpush.msra.mxu0 %v1268
        %1804 = vmatpush.msra.mxu0 %v1260
        %1805 = vmatpush.msra.mxu0 %v1252
        %1806 = vmatpush.msra.mxu0 %v1244
        %1807 = vmatpush.msra.mxu0 %v1236
        %1808 = vmatmul.f32.gmra.mxu0 %v1502
        %v1809 = vpop.f32.mrf.mxu0
        %v1810 = vadd.f32 %v1790, %v1809
        %1811 = vdwg.mxu0
        %1812 = vmatpush.msra.mxu0 %v1484
        %1813 = vmatpush.msra.mxu0 %v1476
        %1814 = vmatpush.msra.mxu0 %v1468
        %1815 = vmatpush.msra.mxu0 %v1460
        %1816 = vmatpush.msra.mxu0 %v1452
        %1817 = vmatpush.msra.mxu0 %v1444
        %1818 = vmatpush.msra.mxu0 %v1436
        %1819 = vmatpush.msra.mxu0 %v1428
        %1820 = vmatpush.msra.mxu0 %v1420
        %1821 = vmatpush.msra.mxu0 %v1412
        %1822 = vmatpush.msra.mxu0 %v1404
        %1823 = vmatpush.msra.mxu0 %v1396
        %1824 = vmatpush.msra.mxu0 %v1388
        %1825 = vmatpush.msra.mxu0 %v1380
        %1826 = vmatpush.msra.mxu0 %v1372
        %1827 = vmatpush.msra.mxu0 %v1364
        %1828 = vmatmul.f32.gmra.mxu0 %v1503
        %v1829 = vpop.f32.mrf.mxu0
        %v1830 = vadd.f32 %v1810, %v1829
        %1831 = vdwg.mxu0
        %1832 = vmatpush.msra.mxu0 %v589
        %1833 = vmatpush.msra.mxu0 %v581
        %1834 = vmatpush.msra.mxu0 %v573
        %1835 = vmatpush.msra.mxu0 %v565
        %1836 = vmatpush.msra.mxu0 %v557
        %1837 = vmatpush.msra.mxu0 %v549
        %1838 = vmatpush.msra.mxu0 %v541
        %1839 = vmatpush.msra.mxu0 %v533
        %1840 = vmatpush.msra.mxu0 %v525
        %1841 = vmatpush.msra.mxu0 %v517
        %1842 = vmatpush.msra.mxu0 %v509
        %1843 = vmatpush.msra.mxu0 %v501
        %1844 = vmatpush.msra.mxu0 %v493
        %1845 = vmatpush.msra.mxu0 %v485
        %1846 = vmatpush.msra.mxu0 %v477
        %1847 = vmatpush.msra.mxu0 %v469
        %1848 = vmatmul.f32.gmra.mxu0 %v1496
        %v1849 = vpop.f32.mrf.mxu0
        %v1850 = vadd.f32 0.0, %v1849
        %1851 = vdwg.mxu0
        %1852 = vmatpush.msra.mxu0 %v717
        %1853 = vmatpush.msra.mxu0 %v709
        %1854 = vmatpush.msra.mxu0 %v701
        %1855 = vmatpush.msra.mxu0 %v693
        %1856 = vmatpush.msra.mxu0 %v685
        %1857 = vmatpush.msra.mxu0 %v677
        %1858 = vmatpush.msra.mxu0 %v669
        %1859 = vmatpush.msra.mxu0 %v661
        %1860 = vmatpush.msra.mxu0 %v653
        %1861 = vmatpush.msra.mxu0 %v645
        %1862 = vmatpush.msra.mxu0 %v637
        %1863 = vmatpush.msra.mxu0 %v629
        %1864 = vmatpush.msra.mxu0 %v621
        %1865 = vmatpush.msra.mxu0 %v613
        %1866 = vmatpush.msra.mxu0 %v605
        %1867 = vmatpush.msra.mxu0 %v597
        %1868 = vmatmul.f32.gmra.mxu0 %v1497
        %v1869 = vpop.f32.mrf.mxu0
        %v1870 = vadd.f32 %v1850, %v1869
        %1871 = vdwg.mxu0
        %1872 = vmatpush.msra.mxu0 %v845
        %1873 = vmatpush.msra.mxu0 %v837
        %1874 = vmatpush.msra.mxu0 %v829
        %1875 = vmatpush.msra.mxu0 %v821
        %1876 = vmatpush.msra.mxu0 %v813
        %1877 = vmatpush.msra.mxu0 %v805
        %1878 = vmatpush.msra.mxu0 %v797
        %1879 = vmatpush.msra.mxu0 %v789
        %1880 = vmatpush.msra.mxu0 %v781
        %1881 = vmatpush.msra.mxu0 %v773
        %1882 = vmatpush.msra.mxu0 %v765
        %1883 = vmatpush.msra.mxu0 %v757
        %1884 = vmatpush.msra.mxu0 %v749
        %1885 = vmatpush.msra.mxu0 %v741
        %1886 = vmatpush.msra.mxu0 %v733
        %1887 = vmatpush.msra.mxu0 %v725
        %1888 = vmatmul.f32.gmra.mxu0 %v1498
        %v1889 = vpop.f32.mrf.mxu0
        %v1890 = vadd.f32 %v1870, %v1889
        %1891 = vdwg.mxu0
        %1892 = vmatpush.msra.mxu0 %v973
        %1893 = vmatpush.msra.mxu0 %v965
        %1894 = vmatpush.msra.mxu0 %v957
        %1895 = vmatpush.msra.mxu0 %v949
        %1896 = vmatpush.msra.mxu0 %v941
        %1897 = vmatpush.msra.mxu0 %v933
        %1898 = vmatpush.msra.mxu0 %v925
        %1899 = vmatpush.msra.mxu0 %v917
        %1900 = vmatpush.msra.mxu0 %v909
        %1901 = vmatpush.msra.mxu0 %v901
        %1902 = vmatpush.msra.mxu0 %v893
        %1903 = vmatpush.msra.mxu0 %v885
        %1904 = vmatpush.msra.mxu0 %v877
        %1905 = vmatpush.msra.mxu0 %v869
        %1906 = vmatpush.msra.mxu0 %v861
        %1907 = vmatpush.msra.mxu0 %v853
        %1908 = vmatmul.f32.gmra.mxu0 %v1499
        %v1909 = vpop.f32.mrf.mxu0
        %v1910 = vadd.f32 %v1890, %v1909
        %1911 = vdwg.mxu0
        %1912 = vmatpush.msra.mxu0 %v1101
        %1913 = vmatpush.msra.mxu0 %v1093
        %1914 = vmatpush.msra.mxu0 %v1085
        %1915 = vmatpush.msra.mxu0 %v1077
        %1916 = vmatpush.msra.mxu0 %v1069
        %1917 = vmatpush.msra.mxu0 %v1061
        %1918 = vmatpush.msra.mxu0 %v1053
        %1919 = vmatpush.msra.mxu0 %v1045
        %1920 = vmatpush.msra.mxu0 %v1037
        %1921 = vmatpush.msra.mxu0 %v1029
        %1922 = vmatpush.msra.mxu0 %v1021
        %1923 = vmatpush.msra.mxu0 %v1013
        %1924 = vmatpush.msra.mxu0 %v1005
        %1925 = vmatpush.msra.mxu0 %v997
        %1926 = vmatpush.msra.mxu0 %v989
        %1927 = vmatpush.msra.mxu0 %v981
        %1928 = vmatmul.f32.gmra.mxu0 %v1500
        %v1929 = vpop.f32.mrf.mxu0
        %v1930 = vadd.f32 %v1910, %v1929
        %1931 = vdwg.mxu0
        %1932 = vmatpush.msra.mxu0 %v1229
        %1933 = vmatpush.msra.mxu0 %v1221
        %1934 = vmatpush.msra.mxu0 %v1213
        %1935 = vmatpush.msra.mxu0 %v1205
        %1936 = vmatpush.msra.mxu0 %v1197
        %1937 = vmatpush.msra.mxu0 %v1189
        %1938 = vmatpush.msra.mxu0 %v1181
        %1939 = vmatpush.msra.mxu0 %v1173
        %1940 = vmatpush.msra.mxu0 %v1165
        %1941 = vmatpush.msra.mxu0 %v1157
        %1942 = vmatpush.msra.mxu0 %v1149
        %1943 = vmatpush.msra.mxu0 %v1141
        %1944 = vmatpush.msra.mxu0 %v1133
        %1945 = vmatpush.msra.mxu0 %v1125
        %1946 = vmatpush.msra.mxu0 %v1117
        %1947 = vmatpush.msra.mxu0 %v1109
        %1948 = vmatmul.f32.gmra.mxu0 %v1501
        %v1949 = vpop.f32.mrf.mxu0
        %v1950 = vadd.f32 %v1930, %v1949
        %1951 = vdwg.mxu0
        %1952 = vmatpush.msra.mxu0 %v1357
        %1953 = vmatpush.msra.mxu0 %v1349
        %1954 = vmatpush.msra.mxu0 %v1341
        %1955 = vmatpush.msra.mxu0 %v1333
        %1956 = vmatpush.msra.mxu0 %v1325
        %1957 = vmatpush.msra.mxu0 %v1317
        %1958 = vmatpush.msra.mxu0 %v1309
        %1959 = vmatpush.msra.mxu0 %v1301
        %1960 = vmatpush.msra.mxu0 %v1293
        %1961 = vmatpush.msra.mxu0 %v1285
        %1962 = vmatpush.msra.mxu0 %v1277
        %1963 = vmatpush.msra.mxu0 %v1269
        %1964 = vmatpush.msra.mxu0 %v1261
        %1965 = vmatpush.msra.mxu0 %v1253
        %1966 = vmatpush.msra.mxu0 %v1245
        %1967 = vmatpush.msra.mxu0 %v1237
        %1968 = vmatmul.f32.gmra.mxu0 %v1502
        %v1969 = vpop.f32.mrf.mxu0
        %v1970 = vadd.f32 %v1950, %v1969
        %1971 = vdwg.mxu0
        %1972 = vmatpush.msra.mxu0 %v1485
        %1973 = vmatpush.msra.mxu0 %v1477
        %1974 = vmatpush.msra.mxu0 %v1469
        %1975 = vmatpush.msra.mxu0 %v1461
        %1976 = vmatpush.msra.mxu0 %v1453
        %1977 = vmatpush.msra.mxu0 %v1445
        %1978 = vmatpush.msra.mxu0 %v1437
        %1979 = vmatpush.msra.mxu0 %v1429
        %1980 = vmatpush.msra.mxu0 %v1421
        %1981 = vmatpush.msra.mxu0 %v1413
        %1982 = vmatpush.msra.mxu0 %v1405
        %1983 = vmatpush.msra.mxu0 %v1397
        %1984 = vmatpush.msra.mxu0 %v1389
        %1985 = vmatpush.msra.mxu0 %v1381
        %1986 = vmatpush.msra.mxu0 %v1373
        %1987 = vmatpush.msra.mxu0 %v1365
        %1988 = vmatmul.f32.gmra.mxu0 %v1503
        %v1989 = vpop.f32.mrf.mxu0
        %v1990 = vadd.f32 %v1970, %v1989
        %1991 = vdwg.mxu0
        %1992 = vmatpush.msra.mxu0 %v590
        %1993 = vmatpush.msra.mxu0 %v582
        %1994 = vmatpush.msra.mxu0 %v574
        %1995 = vmatpush.msra.mxu0 %v566
        %1996 = vmatpush.msra.mxu0 %v558
        %1997 = vmatpush.msra.mxu0 %v550
        %1998 = vmatpush.msra.mxu0 %v542
        %1999 = vmatpush.msra.mxu0 %v534
        %2000 = vmatpush.msra.mxu0 %v526
        %2001 = vmatpush.msra.mxu0 %v518
        %2002 = vmatpush.msra.mxu0 %v510
        %2003 = vmatpush.msra.mxu0 %v502
        %2004 = vmatpush.msra.mxu0 %v494
        %2005 = vmatpush.msra.mxu0 %v486
        %2006 = vmatpush.msra.mxu0 %v478
        %2007 = vmatpush.msra.mxu0 %v470
        %2008 = vmatmul.f32.gmra.mxu0 %v1496
        %v2009 = vpop.f32.mrf.mxu0
        %v2010 = vadd.f32 0.0, %v2009
        %2011 = vdwg.mxu0
        %2012 = vmatpush.msra.mxu0 %v718
        %2013 = vmatpush.msra.mxu0 %v710
        %2014 = vmatpush.msra.mxu0 %v702
        %2015 = vmatpush.msra.mxu0 %v694
        %2016 = vmatpush.msra.mxu0 %v686
        %2017 = vmatpush.msra.mxu0 %v678
        %2018 = vmatpush.msra.mxu0 %v670
        %2019 = vmatpush.msra.mxu0 %v662
        %2020 = vmatpush.msra.mxu0 %v654
        %2021 = vmatpush.msra.mxu0 %v646
        %2022 = vmatpush.msra.mxu0 %v638
        %2023 = vmatpush.msra.mxu0 %v630
        %2024 = vmatpush.msra.mxu0 %v622
        %2025 = vmatpush.msra.mxu0 %v614
        %2026 = vmatpush.msra.mxu0 %v606
        %2027 = vmatpush.msra.mxu0 %v598
        %2028 = vmatmul.f32.gmra.mxu0 %v1497
        %v2029 = vpop.f32.mrf.mxu0
        %v2030 = vadd.f32 %v2010, %v2029
        %2031 = vdwg.mxu0
        %2032 = vmatpush.msra.mxu0 %v846
        %2033 = vmatpush.msra.mxu0 %v838
        %2034 = vmatpush.msra.mxu0 %v830
        %2035 = vmatpush.msra.mxu0 %v822
        %2036 = vmatpush.msra.mxu0 %v814
        %2037 = vmatpush.msra.mxu0 %v806
        %2038 = vmatpush.msra.mxu0 %v798
        %2039 = vmatpush.msra.mxu0 %v790
        %2040 = vmatpush.msra.mxu0 %v782
        %2041 = vmatpush.msra.mxu0 %v774
        %2042 = vmatpush.msra.mxu0 %v766
        %2043 = vmatpush.msra.mxu0 %v758
        %2044 = vmatpush.msra.mxu0 %v750
        %2045 = vmatpush.msra.mxu0 %v742
        %2046 = vmatpush.msra.mxu0 %v734
        %2047 = vmatpush.msra.mxu0 %v726
        %2048 = vmatmul.f32.gmra.mxu0 %v1498
        %v2049 = vpop.f32.mrf.mxu0
        %v2050 = vadd.f32 %v2030, %v2049
        %2051 = vdwg.mxu0
        %2052 = vmatpush.msra.mxu0 %v974
        %2053 = vmatpush.msra.mxu0 %v966
        %2054 = vmatpush.msra.mxu0 %v958
        %2055 = vmatpush.msra.mxu0 %v950
        %2056 = vmatpush.msra.mxu0 %v942
        %2057 = vmatpush.msra.mxu0 %v934
        %2058 = vmatpush.msra.mxu0 %v926
        %2059 = vmatpush.msra.mxu0 %v918
        %2060 = vmatpush.msra.mxu0 %v910
        %2061 = vmatpush.msra.mxu0 %v902
        %2062 = vmatpush.msra.mxu0 %v894
        %2063 = vmatpush.msra.mxu0 %v886
        %2064 = vmatpush.msra.mxu0 %v878
        %2065 = vmatpush.msra.mxu0 %v870
        %2066 = vmatpush.msra.mxu0 %v862
        %2067 = vmatpush.msra.mxu0 %v854
        %2068 = vmatmul.f32.gmra.mxu0 %v1499
        %v2069 = vpop.f32.mrf.mxu0
        %v2070 = vadd.f32 %v2050, %v2069
        %2071 = vdwg.mxu0
        %2072 = vmatpush.msra.mxu0 %v1102
        %2073 = vmatpush.msra.mxu0 %v1094
        %2074 = vmatpush.msra.mxu0 %v1086
        %2075 = vmatpush.msra.mxu0 %v1078
        %2076 = vmatpush.msra.mxu0 %v1070
        %2077 = vmatpush.msra.mxu0 %v1062
        %2078 = vmatpush.msra.mxu0 %v1054
        %2079 = vmatpush.msra.mxu0 %v1046
        %2080 = vmatpush.msra.mxu0 %v1038
        %2081 = vmatpush.msra.mxu0 %v1030
        %2082 = vmatpush.msra.mxu0 %v1022
        %2083 = vmatpush.msra.mxu0 %v1014
        %2084 = vmatpush.msra.mxu0 %v1006
        %2085 = vmatpush.msra.mxu0 %v998
        %2086 = vmatpush.msra.mxu0 %v990
        %2087 = vmatpush.msra.mxu0 %v982
        %2088 = vmatmul.f32.gmra.mxu0 %v1500
        %v2089 = vpop.f32.mrf.mxu0
        %v2090 = vadd.f32 %v2070, %v2089
        %2091 = vdwg.mxu0
        %2092 = vmatpush.msra.mxu0 %v1230
        %2093 = vmatpush.msra.mxu0 %v1222
        %2094 = vmatpush.msra.mxu0 %v1214
        %2095 = vmatpush.msra.mxu0 %v1206
        %2096 = vmatpush.msra.mxu0 %v1198
        %2097 = vmatpush.msra.mxu0 %v1190
        %2098 = vmatpush.msra.mxu0 %v1182
        %2099 = vmatpush.msra.mxu0 %v1174
        %2100 = vmatpush.msra.mxu0 %v1166
        %2101 = vmatpush.msra.mxu0 %v1158
        %2102 = vmatpush.msra.mxu0 %v1150
        %2103 = vmatpush.msra.mxu0 %v1142
        %2104 = vmatpush.msra.mxu0 %v1134
        %2105 = vmatpush.msra.mxu0 %v1126
        %2106 = vmatpush.msra.mxu0 %v1118
        %2107 = vmatpush.msra.mxu0 %v1110
        %2108 = vmatmul.f32.gmra.mxu0 %v1501
        %v2109 = vpop.f32.mrf.mxu0
        %v2110 = vadd.f32 %v2090, %v2109
        %2111 = vdwg.mxu0
        %2112 = vmatpush.msra.mxu0 %v1358
        %2113 = vmatpush.msra.mxu0 %v1350
        %2114 = vmatpush.msra.mxu0 %v1342
        %2115 = vmatpush.msra.mxu0 %v1334
        %2116 = vmatpush.msra.mxu0 %v1326
        %2117 = vmatpush.msra.mxu0 %v1318
        %2118 = vmatpush.msra.mxu0 %v1310
        %2119 = vmatpush.msra.mxu0 %v1302
        %2120 = vmatpush.msra.mxu0 %v1294
        %2121 = vmatpush.msra.mxu0 %v1286
        %2122 = vmatpush.msra.mxu0 %v1278
        %2123 = vmatpush.msra.mxu0 %v1270
        %2124 = vmatpush.msra.mxu0 %v1262
        %2125 = vmatpush.msra.mxu0 %v1254
        %2126 = vmatpush.msra.mxu0 %v1246
        %2127 = vmatpush.msra.mxu0 %v1238
        %2128 = vmatmul.f32.gmra.mxu0 %v1502
        %v2129 = vpop.f32.mrf.mxu0
        %v2130 = vadd.f32 %v2110, %v2129
        %2131 = vdwg.mxu0
        %2132 = vmatpush.msra.mxu0 %v1486
        %2133 = vmatpush.msra.mxu0 %v1478
        %2134 = vmatpush.msra.mxu0 %v1470
        %2135 = vmatpush.msra.mxu0 %v1462
        %2136 = vmatpush.msra.mxu0 %v1454
        %2137 = vmatpush.msra.mxu0 %v1446
        %2138 = vmatpush.msra.mxu0 %v1438
        %2139 = vmatpush.msra.mxu0 %v1430
        %2140 = vmatpush.msra.mxu0 %v1422
        %2141 = vmatpush.msra.mxu0 %v1414
        %2142 = vmatpush.msra.mxu0 %v1406
        %2143 = vmatpush.msra.mxu0 %v1398
        %2144 = vmatpush.msra.mxu0 %v1390
        %2145 = vmatpush.msra.mxu0 %v1382
        %2146 = vmatpush.msra.mxu0 %v1374
        %2147 = vmatpush.msra.mxu0 %v1366
        %2148 = vmatmul.f32.gmra.mxu0 %v1503
        %v2149 = vpop.f32.mrf.mxu0
        %v2150 = vadd.f32 %v2130, %v2149
        %2151 = vdwg.mxu0
        %2152 = vmatpush.msra.mxu0 %v591
        %2153 = vmatpush.msra.mxu0 %v583
        %2154 = vmatpush.msra.mxu0 %v575
        %2155 = vmatpush.msra.mxu0 %v567
        %2156 = vmatpush.msra.mxu0 %v559
        %2157 = vmatpush.msra.mxu0 %v551
        %2158 = vmatpush.msra.mxu0 %v543
        %2159 = vmatpush.msra.mxu0 %v535
        %2160 = vmatpush.msra.mxu0 %v527
        %2161 = vmatpush.msra.mxu0 %v519
        %2162 = vmatpush.msra.mxu0 %v511
        %2163 = vmatpush.msra.mxu0 %v503
        %2164 = vmatpush.msra.mxu0 %v495
        %2165 = vmatpush.msra.mxu0 %v487
        %2166 = vmatpush.msra.mxu0 %v479
        %2167 = vmatpush.msra.mxu0 %v471
        %2168 = vmatmul.f32.gmra.mxu0 %v1496
        %v2169 = vpop.f32.mrf.mxu0
        %v2170 = vadd.f32 0.0, %v2169
        %2171 = vdwg.mxu0
        %2172 = vmatpush.msra.mxu0 %v719
        %2173 = vmatpush.msra.mxu0 %v711
        %2174 = vmatpush.msra.mxu0 %v703
        %2175 = vmatpush.msra.mxu0 %v695
        %2176 = vmatpush.msra.mxu0 %v687
        %2177 = vmatpush.msra.mxu0 %v679
        %2178 = vmatpush.msra.mxu0 %v671
        %2179 = vmatpush.msra.mxu0 %v663
        %2180 = vmatpush.msra.mxu0 %v655
        %2181 = vmatpush.msra.mxu0 %v647
        %2182 = vmatpush.msra.mxu0 %v639
        %2183 = vmatpush.msra.mxu0 %v631
        %2184 = vmatpush.msra.mxu0 %v623
        %2185 = vmatpush.msra.mxu0 %v615
        %2186 = vmatpush.msra.mxu0 %v607
        %2187 = vmatpush.msra.mxu0 %v599
        %2188 = vmatmul.f32.gmra.mxu0 %v1497
        %v2189 = vpop.f32.mrf.mxu0
        %v2190 = vadd.f32 %v2170, %v2189
        %2191 = vdwg.mxu0
        %2192 = vmatpush.msra.mxu0 %v847
        %2193 = vmatpush.msra.mxu0 %v839
        %2194 = vmatpush.msra.mxu0 %v831
        %2195 = vmatpush.msra.mxu0 %v823
        %2196 = vmatpush.msra.mxu0 %v815
        %2197 = vmatpush.msra.mxu0 %v807
        %2198 = vmatpush.msra.mxu0 %v799
        %2199 = vmatpush.msra.mxu0 %v791
        %2200 = vmatpush.msra.mxu0 %v783
        %2201 = vmatpush.msra.mxu0 %v775
        %2202 = vmatpush.msra.mxu0 %v767
        %2203 = vmatpush.msra.mxu0 %v759
        %2204 = vmatpush.msra.mxu0 %v751
        %2205 = vmatpush.msra.mxu0 %v743
        %2206 = vmatpush.msra.mxu0 %v735
        %2207 = vmatpush.msra.mxu0 %v727
        %2208 = vmatmul.f32.gmra.mxu0 %v1498
        %v2209 = vpop.f32.mrf.mxu0
        %v2210 = vadd.f32 %v2190, %v2209
        %2211 = vdwg.mxu0
        %2212 = vmatpush.msra.mxu0 %v975
        %2213 = vmatpush.msra.mxu0 %v967
        %2214 = vmatpush.msra.mxu0 %v959
        %2215 = vmatpush.msra.mxu0 %v951
        %2216 = vmatpush.msra.mxu0 %v943
        %2217 = vmatpush.msra.mxu0 %v935
        %2218 = vmatpush.msra.mxu0 %v927
        %2219 = vmatpush.msra.mxu0 %v919
        %2220 = vmatpush.msra.mxu0 %v911
        %2221 = vmatpush.msra.mxu0 %v903
        %2222 = vmatpush.msra.mxu0 %v895
        %2223 = vmatpush.msra.mxu0 %v887
        %2224 = vmatpush.msra.mxu0 %v879
        %2225 = vmatpush.msra.mxu0 %v871
        %2226 = vmatpush.msra.mxu0 %v863
        %2227 = vmatpush.msra.mxu0 %v855
        %2228 = vmatmul.f32.gmra.mxu0 %v1499
        %v2229 = vpop.f32.mrf.mxu0
        %v2230 = vadd.f32 %v2210, %v2229
        %2231 = vdwg.mxu0
        %2232 = vmatpush.msra.mxu0 %v1103
        %2233 = vmatpush.msra.mxu0 %v1095
        %2234 = vmatpush.msra.mxu0 %v1087
        %2235 = vmatpush.msra.mxu0 %v1079
        %2236 = vmatpush.msra.mxu0 %v1071
        %2237 = vmatpush.msra.mxu0 %v1063
        %2238 = vmatpush.msra.mxu0 %v1055
        %2239 = vmatpush.msra.mxu0 %v1047
        %2240 = vmatpush.msra.mxu0 %v1039
        %2241 = vmatpush.msra.mxu0 %v1031
        %2242 = vmatpush.msra.mxu0 %v1023
        %2243 = vmatpush.msra.mxu0 %v1015
        %2244 = vmatpush.msra.mxu0 %v1007
        %2245 = vmatpush.msra.mxu0 %v999
        %2246 = vmatpush.msra.mxu0 %v991
        %2247 = vmatpush.msra.mxu0 %v983
        %2248 = vmatmul.f32.gmra.mxu0 %v1500
        %v2249 = vpop.f32.mrf.mxu0
        %v2250 = vadd.f32 %v2230, %v2249
        %2251 = vdwg.mxu0
        %2252 = vmatpush.msra.mxu0 %v1231
        %2253 = vmatpush.msra.mxu0 %v1223
        %2254 = vmatpush.msra.mxu0 %v1215
        %2255 = vmatpush.msra.mxu0 %v1207
        %2256 = vmatpush.msra.mxu0 %v1199
        %2257 = vmatpush.msra.mxu0 %v1191
        %2258 = vmatpush.msra.mxu0 %v1183
        %2259 = vmatpush.msra.mxu0 %v1175
        %2260 = vmatpush.msra.mxu0 %v1167
        %2261 = vmatpush.msra.mxu0 %v1159
        %2262 = vmatpush.msra.mxu0 %v1151
        %2263 = vmatpush.msra.mxu0 %v1143
        %2264 = vmatpush.msra.mxu0 %v1135
        %2265 = vmatpush.msra.mxu0 %v1127
        %2266 = vmatpush.msra.mxu0 %v1119
        %2267 = vmatpush.msra.mxu0 %v1111
        %2268 = vmatmul.f32.gmra.mxu0 %v1501
        %v2269 = vpop.f32.mrf.mxu0
        %v2270 = vadd.f32 %v2250, %v2269
        %2271 = vdwg.mxu0
        %2272 = vmatpush.msra.mxu0 %v1359
        %2273 = vmatpush.msra.mxu0 %v1351
        %2274 = vmatpush.msra.mxu0 %v1343
        %2275 = vmatpush.msra.mxu0 %v1335
        %2276 = vmatpush.msra.mxu0 %v1327
        %2277 = vmatpush.msra.mxu0 %v1319
        %2278 = vmatpush.msra.mxu0 %v1311
        %2279 = vmatpush.msra.mxu0 %v1303
        %2280 = vmatpush.msra.mxu0 %v1295
        %2281 = vmatpush.msra.mxu0 %v1287
        %2282 = vmatpush.msra.mxu0 %v1279
        %2283 = vmatpush.msra.mxu0 %v1271
        %2284 = vmatpush.msra.mxu0 %v1263
        %2285 = vmatpush.msra.mxu0 %v1255
        %2286 = vmatpush.msra.mxu0 %v1247
        %2287 = vmatpush.msra.mxu0 %v1239
        %2288 = vmatmul.f32.gmra.mxu0 %v1502
        %v2289 = vpop.f32.mrf.mxu0
        %v2290 = vadd.f32 %v2270, %v2289
        %2291 = vdwg.mxu0
        %2292 = vmatpush.msra.mxu0 %v1487
        %2293 = vmatpush.msra.mxu0 %v1479
        %2294 = vmatpush.msra.mxu0 %v1471
        %2295 = vmatpush.msra.mxu0 %v1463
        %2296 = vmatpush.msra.mxu0 %v1455
        %2297 = vmatpush.msra.mxu0 %v1447
        %2298 = vmatpush.msra.mxu0 %v1439
        %2299 = vmatpush.msra.mxu0 %v1431
        %2300 = vmatpush.msra.mxu0 %v1423
        %2301 = vmatpush.msra.mxu0 %v1415
        %2302 = vmatpush.msra.mxu0 %v1407
        %2303 = vmatpush.msra.mxu0 %v1399
        %2304 = vmatpush.msra.mxu0 %v1391
        %2305 = vmatpush.msra.mxu0 %v1383
        %2306 = vmatpush.msra.mxu0 %v1375
        %2307 = vmatpush.msra.mxu0 %v1367
        %2308 = vmatmul.f32.gmra.mxu0 %v1503
        %v2309 = vpop.f32.mrf.mxu0
        %v2310 = vadd.f32 %v2290, %v2309
        %2311 = vdwg.mxu0
        %2312 = vmatpush.msra.mxu0 %v592
        %2313 = vmatpush.msra.mxu0 %v584
        %2314 = vmatpush.msra.mxu0 %v576
        %2315 = vmatpush.msra.mxu0 %v568
        %2316 = vmatpush.msra.mxu0 %v560
        %2317 = vmatpush.msra.mxu0 %v552
        %2318 = vmatpush.msra.mxu0 %v544
        %2319 = vmatpush.msra.mxu0 %v536
        %2320 = vmatpush.msra.mxu0 %v528
        %2321 = vmatpush.msra.mxu0 %v520
        %2322 = vmatpush.msra.mxu0 %v512
        %2323 = vmatpush.msra.mxu0 %v504
        %2324 = vmatpush.msra.mxu0 %v496
        %2325 = vmatpush.msra.mxu0 %v488
        %2326 = vmatpush.msra.mxu0 %v480
        %2327 = vmatpush.msra.mxu0 %v472
        %2328 = vmatmul.f32.gmra.mxu0 %v1496
        %v2329 = vpop.f32.mrf.mxu0
        %v2330 = vadd.f32 0.0, %v2329
        %2331 = vdwg.mxu0
        %2332 = vmatpush.msra.mxu0 %v720
        %2333 = vmatpush.msra.mxu0 %v712
        %2334 = vmatpush.msra.mxu0 %v704
        %2335 = vmatpush.msra.mxu0 %v696
        %2336 = vmatpush.msra.mxu0 %v688
        %2337 = vmatpush.msra.mxu0 %v680
        %2338 = vmatpush.msra.mxu0 %v672
        %2339 = vmatpush.msra.mxu0 %v664
        %2340 = vmatpush.msra.mxu0 %v656
        %2341 = vmatpush.msra.mxu0 %v648
        %2342 = vmatpush.msra.mxu0 %v640
        %2343 = vmatpush.msra.mxu0 %v632
        %2344 = vmatpush.msra.mxu0 %v624
        %2345 = vmatpush.msra.mxu0 %v616
        %2346 = vmatpush.msra.mxu0 %v608
        %2347 = vmatpush.msra.mxu0 %v600
        %2348 = vmatmul.f32.gmra.mxu0 %v1497
        %v2349 = vpop.f32.mrf.mxu0
        %v2350 = vadd.f32 %v2330, %v2349
        %2351 = vdwg.mxu0
        %2352 = vmatpush.msra.mxu0 %v848
        %2353 = vmatpush.msra.mxu0 %v840
        %2354 = vmatpush.msra.mxu0 %v832
        %2355 = vmatpush.msra.mxu0 %v824
        %2356 = vmatpush.msra.mxu0 %v816
        %2357 = vmatpush.msra.mxu0 %v808
        %2358 = vmatpush.msra.mxu0 %v800
        %2359 = vmatpush.msra.mxu0 %v792
        %2360 = vmatpush.msra.mxu0 %v784
        %2361 = vmatpush.msra.mxu0 %v776
        %2362 = vmatpush.msra.mxu0 %v768
        %2363 = vmatpush.msra.mxu0 %v760
        %2364 = vmatpush.msra.mxu0 %v752
        %2365 = vmatpush.msra.mxu0 %v744
        %2366 = vmatpush.msra.mxu0 %v736
        %2367 = vmatpush.msra.mxu0 %v728
        %2368 = vmatmul.f32.gmra.mxu0 %v1498
        %v2369 = vpop.f32.mrf.mxu0
        %v2370 = vadd.f32 %v2350, %v2369
        %2371 = vdwg.mxu0
        %2372 = vmatpush.msra.mxu0 %v976
        %2373 = vmatpush.msra.mxu0 %v968
        %2374 = vmatpush.msra.mxu0 %v960
        %2375 = vmatpush.msra.mxu0 %v952
        %2376 = vmatpush.msra.mxu0 %v944
        %2377 = vmatpush.msra.mxu0 %v936
        %2378 = vmatpush.msra.mxu0 %v928
        %2379 = vmatpush.msra.mxu0 %v920
        %2380 = vmatpush.msra.mxu0 %v912
        %2381 = vmatpush.msra.mxu0 %v904
        %2382 = vmatpush.msra.mxu0 %v896
        %2383 = vmatpush.msra.mxu0 %v888
        %2384 = vmatpush.msra.mxu0 %v880
        %2385 = vmatpush.msra.mxu0 %v872
        %2386 = vmatpush.msra.mxu0 %v864
        %2387 = vmatpush.msra.mxu0 %v856
        %2388 = vmatmul.f32.gmra.mxu0 %v1499
        %v2389 = vpop.f32.mrf.mxu0
        %v2390 = vadd.f32 %v2370, %v2389
        %2391 = vdwg.mxu0
        %2392 = vmatpush.msra.mxu0 %v1104
        %2393 = vmatpush.msra.mxu0 %v1096
        %2394 = vmatpush.msra.mxu0 %v1088
        %2395 = vmatpush.msra.mxu0 %v1080
        %2396 = vmatpush.msra.mxu0 %v1072
        %2397 = vmatpush.msra.mxu0 %v1064
        %2398 = vmatpush.msra.mxu0 %v1056
        %2399 = vmatpush.msra.mxu0 %v1048
        %2400 = vmatpush.msra.mxu0 %v1040
        %2401 = vmatpush.msra.mxu0 %v1032
        %2402 = vmatpush.msra.mxu0 %v1024
        %2403 = vmatpush.msra.mxu0 %v1016
        %2404 = vmatpush.msra.mxu0 %v1008
        %2405 = vmatpush.msra.mxu0 %v1000
        %2406 = vmatpush.msra.mxu0 %v992
        %2407 = vmatpush.msra.mxu0 %v984
        %2408 = vmatmul.f32.gmra.mxu0 %v1500
        %v2409 = vpop.f32.mrf.mxu0
        %v2410 = vadd.f32 %v2390, %v2409
        %2411 = vdwg.mxu0
        %2412 = vmatpush.msra.mxu0 %v1232
        %2413 = vmatpush.msra.mxu0 %v1224
        %2414 = vmatpush.msra.mxu0 %v1216
        %2415 = vmatpush.msra.mxu0 %v1208
        %2416 = vmatpush.msra.mxu0 %v1200
        %2417 = vmatpush.msra.mxu0 %v1192
        %2418 = vmatpush.msra.mxu0 %v1184
        %2419 = vmatpush.msra.mxu0 %v1176
        %2420 = vmatpush.msra.mxu0 %v1168
        %2421 = vmatpush.msra.mxu0 %v1160
        %2422 = vmatpush.msra.mxu0 %v1152
        %2423 = vmatpush.msra.mxu0 %v1144
        %2424 = vmatpush.msra.mxu0 %v1136
        %2425 = vmatpush.msra.mxu0 %v1128
        %2426 = vmatpush.msra.mxu0 %v1120
        %2427 = vmatpush.msra.mxu0 %v1112
        %2428 = vmatmul.f32.gmra.mxu0 %v1501
        %v2429 = vpop.f32.mrf.mxu0
        %v2430 = vadd.f32 %v2410, %v2429
        %2431 = vdwg.mxu0
        %2432 = vmatpush.msra.mxu0 %v1360
        %2433 = vmatpush.msra.mxu0 %v1352
        %2434 = vmatpush.msra.mxu0 %v1344
        %2435 = vmatpush.msra.mxu0 %v1336
        %2436 = vmatpush.msra.mxu0 %v1328
        %2437 = vmatpush.msra.mxu0 %v1320
        %2438 = vmatpush.msra.mxu0 %v1312
        %2439 = vmatpush.msra.mxu0 %v1304
        %2440 = vmatpush.msra.mxu0 %v1296
        %2441 = vmatpush.msra.mxu0 %v1288
        %2442 = vmatpush.msra.mxu0 %v1280
        %2443 = vmatpush.msra.mxu0 %v1272
        %2444 = vmatpush.msra.mxu0 %v1264
        %2445 = vmatpush.msra.mxu0 %v1256
        %2446 = vmatpush.msra.mxu0 %v1248
        %2447 = vmatpush.msra.mxu0 %v1240
        %2448 = vmatmul.f32.gmra.mxu0 %v1502
        %v2449 = vpop.f32.mrf.mxu0
        %v2450 = vadd.f32 %v2430, %v2449
        %2451 = vdwg.mxu0
        %2452 = vmatpush.msra.mxu0 %v1488
        %2453 = vmatpush.msra.mxu0 %v1480
        %2454 = vmatpush.msra.mxu0 %v1472
        %2455 = vmatpush.msra.mxu0 %v1464
        %2456 = vmatpush.msra.mxu0 %v1456
        %2457 = vmatpush.msra.mxu0 %v1448
        %2458 = vmatpush.msra.mxu0 %v1440
        %2459 = vmatpush.msra.mxu0 %v1432
        %2460 = vmatpush.msra.mxu0 %v1424
        %2461 = vmatpush.msra.mxu0 %v1416
        %2462 = vmatpush.msra.mxu0 %v1408
        %2463 = vmatpush.msra.mxu0 %v1400
        %2464 = vmatpush.msra.mxu0 %v1392
        %2465 = vmatpush.msra.mxu0 %v1384
        %2466 = vmatpush.msra.mxu0 %v1376
        %2467 = vmatpush.msra.mxu0 %v1368
        %2468 = vmatmul.f32.gmra.mxu0 %v1503
        %v2469 = vpop.f32.mrf.mxu0
        %v2470 = vadd.f32 %v2450, %v2469
        %2471 = vdwg.mxu0
        %2472 = vmatpush.msra.mxu0 %v593
        %2473 = vmatpush.msra.mxu0 %v585
        %2474 = vmatpush.msra.mxu0 %v577
        %2475 = vmatpush.msra.mxu0 %v569
        %2476 = vmatpush.msra.mxu0 %v561
        %2477 = vmatpush.msra.mxu0 %v553
        %2478 = vmatpush.msra.mxu0 %v545
        %2479 = vmatpush.msra.mxu0 %v537
        %2480 = vmatpush.msra.mxu0 %v529
        %2481 = vmatpush.msra.mxu0 %v521
        %2482 = vmatpush.msra.mxu0 %v513
        %2483 = vmatpush.msra.mxu0 %v505
        %2484 = vmatpush.msra.mxu0 %v497
        %2485 = vmatpush.msra.mxu0 %v489
        %2486 = vmatpush.msra.mxu0 %v481
        %2487 = vmatpush.msra.mxu0 %v473
        %2488 = vmatmul.f32.gmra.mxu0 %v1496
        %v2489 = vpop.f32.mrf.mxu0
        %v2490 = vadd.f32 0.0, %v2489
        %2491 = vdwg.mxu0
        %2492 = vmatpush.msra.mxu0 %v721
        %2493 = vmatpush.msra.mxu0 %v713
        %2494 = vmatpush.msra.mxu0 %v705
        %2495 = vmatpush.msra.mxu0 %v697
        %2496 = vmatpush.msra.mxu0 %v689
        %2497 = vmatpush.msra.mxu0 %v681
        %2498 = vmatpush.msra.mxu0 %v673
        %2499 = vmatpush.msra.mxu0 %v665
        %2500 = vmatpush.msra.mxu0 %v657
        %2501 = vmatpush.msra.mxu0 %v649
        %2502 = vmatpush.msra.mxu0 %v641
        %2503 = vmatpush.msra.mxu0 %v633
        %2504 = vmatpush.msra.mxu0 %v625
        %2505 = vmatpush.msra.mxu0 %v617
        %2506 = vmatpush.msra.mxu0 %v609
        %2507 = vmatpush.msra.mxu0 %v601
        %2508 = vmatmul.f32.gmra.mxu0 %v1497
        %v2509 = vpop.f32.mrf.mxu0
        %v2510 = vadd.f32 %v2490, %v2509
        %2511 = vdwg.mxu0
        %2512 = vmatpush.msra.mxu0 %v849
        %2513 = vmatpush.msra.mxu0 %v841
        %2514 = vmatpush.msra.mxu0 %v833
        %2515 = vmatpush.msra.mxu0 %v825
        %2516 = vmatpush.msra.mxu0 %v817
        %2517 = vmatpush.msra.mxu0 %v809
        %2518 = vmatpush.msra.mxu0 %v801
        %2519 = vmatpush.msra.mxu0 %v793
        %2520 = vmatpush.msra.mxu0 %v785
        %2521 = vmatpush.msra.mxu0 %v777
        %2522 = vmatpush.msra.mxu0 %v769
        %2523 = vmatpush.msra.mxu0 %v761
        %2524 = vmatpush.msra.mxu0 %v753
        %2525 = vmatpush.msra.mxu0 %v745
        %2526 = vmatpush.msra.mxu0 %v737
        %2527 = vmatpush.msra.mxu0 %v729
        %2528 = vmatmul.f32.gmra.mxu0 %v1498
        %v2529 = vpop.f32.mrf.mxu0
        %v2530 = vadd.f32 %v2510, %v2529
        %2531 = vdwg.mxu0
        %2532 = vmatpush.msra.mxu0 %v977
        %2533 = vmatpush.msra.mxu0 %v969
        %2534 = vmatpush.msra.mxu0 %v961
        %2535 = vmatpush.msra.mxu0 %v953
        %2536 = vmatpush.msra.mxu0 %v945
        %2537 = vmatpush.msra.mxu0 %v937
        %2538 = vmatpush.msra.mxu0 %v929
        %2539 = vmatpush.msra.mxu0 %v921
        %2540 = vmatpush.msra.mxu0 %v913
        %2541 = vmatpush.msra.mxu0 %v905
        %2542 = vmatpush.msra.mxu0 %v897
        %2543 = vmatpush.msra.mxu0 %v889
        %2544 = vmatpush.msra.mxu0 %v881
        %2545 = vmatpush.msra.mxu0 %v873
        %2546 = vmatpush.msra.mxu0 %v865
        %2547 = vmatpush.msra.mxu0 %v857
        %2548 = vmatmul.f32.gmra.mxu0 %v1499
        %v2549 = vpop.f32.mrf.mxu0
        %v2550 = vadd.f32 %v2530, %v2549
        %2551 = vdwg.mxu0
        %2552 = vmatpush.msra.mxu0 %v1105
        %2553 = vmatpush.msra.mxu0 %v1097
        %2554 = vmatpush.msra.mxu0 %v1089
        %2555 = vmatpush.msra.mxu0 %v1081
        %2556 = vmatpush.msra.mxu0 %v1073
        %2557 = vmatpush.msra.mxu0 %v1065
        %2558 = vmatpush.msra.mxu0 %v1057
        %2559 = vmatpush.msra.mxu0 %v1049
        %2560 = vmatpush.msra.mxu0 %v1041
        %2561 = vmatpush.msra.mxu0 %v1033
        %2562 = vmatpush.msra.mxu0 %v1025
        %2563 = vmatpush.msra.mxu0 %v1017
        %2564 = vmatpush.msra.mxu0 %v1009
        %2565 = vmatpush.msra.mxu0 %v1001
        %2566 = vmatpush.msra.mxu0 %v993
        %2567 = vmatpush.msra.mxu0 %v985
        %2568 = vmatmul.f32.gmra.mxu0 %v1500
        %v2569 = vpop.f32.mrf.mxu0
        %v2570 = vadd.f32 %v2550, %v2569
        %2571 = vdwg.mxu0
        %2572 = vmatpush.msra.mxu0 %v1233
        %2573 = vmatpush.msra.mxu0 %v1225
        %2574 = vmatpush.msra.mxu0 %v1217
        %2575 = vmatpush.msra.mxu0 %v1209
        %2576 = vmatpush.msra.mxu0 %v1201
        %2577 = vmatpush.msra.mxu0 %v1193
        %2578 = vmatpush.msra.mxu0 %v1185
        %2579 = vmatpush.msra.mxu0 %v1177
        %2580 = vmatpush.msra.mxu0 %v1169
        %2581 = vmatpush.msra.mxu0 %v1161
        %2582 = vmatpush.msra.mxu0 %v1153
        %2583 = vmatpush.msra.mxu0 %v1145
        %2584 = vmatpush.msra.mxu0 %v1137
        %2585 = vmatpush.msra.mxu0 %v1129
        %2586 = vmatpush.msra.mxu0 %v1121
        %2587 = vmatpush.msra.mxu0 %v1113
        %2588 = vmatmul.f32.gmra.mxu0 %v1501
        %v2589 = vpop.f32.mrf.mxu0
        %v2590 = vadd.f32 %v2570, %v2589
        %2591 = vdwg.mxu0
        %2592 = vmatpush.msra.mxu0 %v1361
        %2593 = vmatpush.msra.mxu0 %v1353
        %2594 = vmatpush.msra.mxu0 %v1345
        %2595 = vmatpush.msra.mxu0 %v1337
        %2596 = vmatpush.msra.mxu0 %v1329
        %2597 = vmatpush.msra.mxu0 %v1321
        %2598 = vmatpush.msra.mxu0 %v1313
        %2599 = vmatpush.msra.mxu0 %v1305
        %2600 = vmatpush.msra.mxu0 %v1297
        %2601 = vmatpush.msra.mxu0 %v1289
        %2602 = vmatpush.msra.mxu0 %v1281
        %2603 = vmatpush.msra.mxu0 %v1273
        %2604 = vmatpush.msra.mxu0 %v1265
        %2605 = vmatpush.msra.mxu0 %v1257
        %2606 = vmatpush.msra.mxu0 %v1249
        %2607 = vmatpush.msra.mxu0 %v1241
        %2608 = vmatmul.f32.gmra.mxu0 %v1502
        %v2609 = vpop.f32.mrf.mxu0
        %v2610 = vadd.f32 %v2590, %v2609
        %2611 = vdwg.mxu0
        %2612 = vmatpush.msra.mxu0 %v1489
        %2613 = vmatpush.msra.mxu0 %v1481
        %2614 = vmatpush.msra.mxu0 %v1473
        %2615 = vmatpush.msra.mxu0 %v1465
        %2616 = vmatpush.msra.mxu0 %v1457
        %2617 = vmatpush.msra.mxu0 %v1449
        %2618 = vmatpush.msra.mxu0 %v1441
        %2619 = vmatpush.msra.mxu0 %v1433
        %2620 = vmatpush.msra.mxu0 %v1425
        %2621 = vmatpush.msra.mxu0 %v1417
        %2622 = vmatpush.msra.mxu0 %v1409
        %2623 = vmatpush.msra.mxu0 %v1401
        %2624 = vmatpush.msra.mxu0 %v1393
        %2625 = vmatpush.msra.mxu0 %v1385
        %2626 = vmatpush.msra.mxu0 %v1377
        %2627 = vmatpush.msra.mxu0 %v1369
        %2628 = vmatmul.f32.gmra.mxu0 %v1503
        %v2629 = vpop.f32.mrf.mxu0
        %v2630 = vadd.f32 %v2610, %v2629
        %2631 = vdwg.mxu0
        %2632 = vmatpush.msra.mxu0 %v594
        %2633 = vmatpush.msra.mxu0 %v586
        %2634 = vmatpush.msra.mxu0 %v578
        %2635 = vmatpush.msra.mxu0 %v570
        %2636 = vmatpush.msra.mxu0 %v562
        %2637 = vmatpush.msra.mxu0 %v554
        %2638 = vmatpush.msra.mxu0 %v546
        %2639 = vmatpush.msra.mxu0 %v538
        %2640 = vmatpush.msra.mxu0 %v530
        %2641 = vmatpush.msra.mxu0 %v522
        %2642 = vmatpush.msra.mxu0 %v514
        %2643 = vmatpush.msra.mxu0 %v506
        %2644 = vmatpush.msra.mxu0 %v498
        %2645 = vmatpush.msra.mxu0 %v490
        %2646 = vmatpush.msra.mxu0 %v482
        %2647 = vmatpush.msra.mxu0 %v474
        %2648 = vmatmul.f32.gmra.mxu0 %v1496
        %v2649 = vpop.f32.mrf.mxu0
        %v2650 = vadd.f32 0.0, %v2649
        %2651 = vdwg.mxu0
        %2652 = vmatpush.msra.mxu0 %v722
        %2653 = vmatpush.msra.mxu0 %v714
        %2654 = vmatpush.msra.mxu0 %v706
        %2655 = vmatpush.msra.mxu0 %v698
        %2656 = vmatpush.msra.mxu0 %v690
        %2657 = vmatpush.msra.mxu0 %v682
        %2658 = vmatpush.msra.mxu0 %v674
        %2659 = vmatpush.msra.mxu0 %v666
        %2660 = vmatpush.msra.mxu0 %v658
        %2661 = vmatpush.msra.mxu0 %v650
        %2662 = vmatpush.msra.mxu0 %v642
        %2663 = vmatpush.msra.mxu0 %v634
        %2664 = vmatpush.msra.mxu0 %v626
        %2665 = vmatpush.msra.mxu0 %v618
        %2666 = vmatpush.msra.mxu0 %v610
        %2667 = vmatpush.msra.mxu0 %v602
        %2668 = vmatmul.f32.gmra.mxu0 %v1497
        %v2669 = vpop.f32.mrf.mxu0
        %v2670 = vadd.f32 %v2650, %v2669
        %2671 = vdwg.mxu0
        %2672 = vmatpush.msra.mxu0 %v850
        %2673 = vmatpush.msra.mxu0 %v842
        %2674 = vmatpush.msra.mxu0 %v834
        %2675 = vmatpush.msra.mxu0 %v826
        %2676 = vmatpush.msra.mxu0 %v818
        %2677 = vmatpush.msra.mxu0 %v810
        %2678 = vmatpush.msra.mxu0 %v802
        %2679 = vmatpush.msra.mxu0 %v794
        %2680 = vmatpush.msra.mxu0 %v786
        %2681 = vmatpush.msra.mxu0 %v778
        %2682 = vmatpush.msra.mxu0 %v770
        %2683 = vmatpush.msra.mxu0 %v762
        %2684 = vmatpush.msra.mxu0 %v754
        %2685 = vmatpush.msra.mxu0 %v746
        %2686 = vmatpush.msra.mxu0 %v738
        %2687 = vmatpush.msra.mxu0 %v730
        %2688 = vmatmul.f32.gmra.mxu0 %v1498
        %v2689 = vpop.f32.mrf.mxu0
        %v2690 = vadd.f32 %v2670, %v2689
        %2691 = vdwg.mxu0
        %2692 = vmatpush.msra.mxu0 %v978
        %2693 = vmatpush.msra.mxu0 %v970
        %2694 = vmatpush.msra.mxu0 %v962
        %2695 = vmatpush.msra.mxu0 %v954
        %2696 = vmatpush.msra.mxu0 %v946
        %2697 = vmatpush.msra.mxu0 %v938
        %2698 = vmatpush.msra.mxu0 %v930
        %2699 = vmatpush.msra.mxu0 %v922
        %2700 = vmatpush.msra.mxu0 %v914
        %2701 = vmatpush.msra.mxu0 %v906
        %2702 = vmatpush.msra.mxu0 %v898
        %2703 = vmatpush.msra.mxu0 %v890
        %2704 = vmatpush.msra.mxu0 %v882
        %2705 = vmatpush.msra.mxu0 %v874
        %2706 = vmatpush.msra.mxu0 %v866
        %2707 = vmatpush.msra.mxu0 %v858
        %2708 = vmatmul.f32.gmra.mxu0 %v1499
        %v2709 = vpop.f32.mrf.mxu0
        %v2710 = vadd.f32 %v2690, %v2709
        %2711 = vdwg.mxu0
        %2712 = vmatpush.msra.mxu0 %v1106
        %2713 = vmatpush.msra.mxu0 %v1098
        %2714 = vmatpush.msra.mxu0 %v1090
        %2715 = vmatpush.msra.mxu0 %v1082
        %2716 = vmatpush.msra.mxu0 %v1074
        %2717 = vmatpush.msra.mxu0 %v1066
        %2718 = vmatpush.msra.mxu0 %v1058
        %2719 = vmatpush.msra.mxu0 %v1050
        %2720 = vmatpush.msra.mxu0 %v1042
        %2721 = vmatpush.msra.mxu0 %v1034
        %2722 = vmatpush.msra.mxu0 %v1026
        %2723 = vmatpush.msra.mxu0 %v1018
        %2724 = vmatpush.msra.mxu0 %v1010
        %2725 = vmatpush.msra.mxu0 %v1002
        %2726 = vmatpush.msra.mxu0 %v994
        %2727 = vmatpush.msra.mxu0 %v986
        %2728 = vmatmul.f32.gmra.mxu0 %v1500
        %v2729 = vpop.f32.mrf.mxu0
        %v2730 = vadd.f32 %v2710, %v2729
        %2731 = vdwg.mxu0
        %2732 = vmatpush.msra.mxu0 %v1234
        %2733 = vmatpush.msra.mxu0 %v1226
        %2734 = vmatpush.msra.mxu0 %v1218
        %2735 = vmatpush.msra.mxu0 %v1210
        %2736 = vmatpush.msra.mxu0 %v1202
        %2737 = vmatpush.msra.mxu0 %v1194
        %2738 = vmatpush.msra.mxu0 %v1186
        %2739 = vmatpush.msra.mxu0 %v1178
        %2740 = vmatpush.msra.mxu0 %v1170
        %2741 = vmatpush.msra.mxu0 %v1162
        %2742 = vmatpush.msra.mxu0 %v1154
        %2743 = vmatpush.msra.mxu0 %v1146
        %2744 = vmatpush.msra.mxu0 %v1138
        %2745 = vmatpush.msra.mxu0 %v1130
        %2746 = vmatpush.msra.mxu0 %v1122
        %2747 = vmatpush.msra.mxu0 %v1114
        %2748 = vmatmul.f32.gmra.mxu0 %v1501
        %v2749 = vpop.f32.mrf.mxu0
        %v2750 = vadd.f32 %v2730, %v2749
        %2751 = vdwg.mxu0
        %2752 = vmatpush.msra.mxu0 %v1362
        %2753 = vmatpush.msra.mxu0 %v1354
        %2754 = vmatpush.msra.mxu0 %v1346
        %2755 = vmatpush.msra.mxu0 %v1338
        %2756 = vmatpush.msra.mxu0 %v1330
        %2757 = vmatpush.msra.mxu0 %v1322
        %2758 = vmatpush.msra.mxu0 %v1314
        %2759 = vmatpush.msra.mxu0 %v1306
        %2760 = vmatpush.msra.mxu0 %v1298
        %2761 = vmatpush.msra.mxu0 %v1290
        %2762 = vmatpush.msra.mxu0 %v1282
        %2763 = vmatpush.msra.mxu0 %v1274
        %2764 = vmatpush.msra.mxu0 %v1266
        %2765 = vmatpush.msra.mxu0 %v1258
        %2766 = vmatpush.msra.mxu0 %v1250
        %2767 = vmatpush.msra.mxu0 %v1242
        %2768 = vmatmul.f32.gmra.mxu0 %v1502
        %v2769 = vpop.f32.mrf.mxu0
        %v2770 = vadd.f32 %v2750, %v2769
        %2771 = vdwg.mxu0
        %2772 = vmatpush.msra.mxu0 %v1490
        %2773 = vmatpush.msra.mxu0 %v1482
        %2774 = vmatpush.msra.mxu0 %v1474
        %2775 = vmatpush.msra.mxu0 %v1466
        %2776 = vmatpush.msra.mxu0 %v1458
        %2777 = vmatpush.msra.mxu0 %v1450
        %2778 = vmatpush.msra.mxu0 %v1442
        %2779 = vmatpush.msra.mxu0 %v1434
        %2780 = vmatpush.msra.mxu0 %v1426
        %2781 = vmatpush.msra.mxu0 %v1418
        %2782 = vmatpush.msra.mxu0 %v1410
        %2783 = vmatpush.msra.mxu0 %v1402
        %2784 = vmatpush.msra.mxu0 %v1394
        %2785 = vmatpush.msra.mxu0 %v1386
        %2786 = vmatpush.msra.mxu0 %v1378
        %2787 = vmatpush.msra.mxu0 %v1370
        %2788 = vmatmul.f32.gmra.mxu0 %v1503
        %v2789 = vpop.f32.mrf.mxu0
        %v2790 = vadd.f32 %v2770, %v2789
        %2791 = vdwg.mxu0
        %s2792 = smul.u32 %s27, 8
        %s2793 = smul.addr %s2792, 2
        %s2794 = scalar_lea.vmem [#allocation6], %s2793
        %v2795 = vld [vmem:[%s2794] sm:$0xff]
        %v2796 = vld [vmem:[%s2794 + $0x8] sm:$0xff]
        %vm2797 = vcmask 1041408
        %v2798 = vsel %vm2797, %v1670, 0.0
        %v2799 = vrot.slane %v2798, 4
        %v2800 = vadd.f32 %v2798, %v2799
        %v2801 = vrot.slane %v2800, 2
        %v2802 = vadd.f32 %v2800, %v2801
        %v2803 = vrot.slane %v2802, 1
        %v2804 = vadd.f32 %v2802, %v2803
        %v2805 = vsel %vm2797, %v1830, 0.0
        %v2806 = vrot.slane %v2805, 4
        %v2807 = vadd.f32 %v2805, %v2806
        %v2808 = vrot.slane %v2807, 2
        %v2809 = vadd.f32 %v2807, %v2808
        %v2810 = vrot.slane %v2809, 1
        %v2811 = vadd.f32 %v2809, %v2810
        %v2812 = vsel %vm2797, %v1990, 0.0
        %v2813 = vrot.slane %v2812, 4
        %v2814 = vadd.f32 %v2812, %v2813
        %v2815 = vrot.slane %v2814, 2
        %v2816 = vadd.f32 %v2814, %v2815
        %v2817 = vrot.slane %v2816, 1
        %v2818 = vadd.f32 %v2816, %v2817
        %v2819 = vsel %vm2797, %v2150, 0.0
        %v2820 = vrot.slane %v2819, 4
        %v2821 = vadd.f32 %v2819, %v2820
        %v2822 = vrot.slane %v2821, 2
        %v2823 = vadd.f32 %v2821, %v2822
        %v2824 = vrot.slane %v2823, 1
        %v2825 = vadd.f32 %v2823, %v2824
        %v2826 = vsel %vm2797, %v2310, 0.0
        %v2827 = vrot.slane %v2826, 4
        %v2828 = vadd.f32 %v2826, %v2827
        %v2829 = vrot.slane %v2828, 2
        %v2830 = vadd.f32 %v2828, %v2829
        %v2831 = vrot.slane %v2830, 1
        %v2832 = vadd.f32 %v2830, %v2831
        %v2833 = vsel %vm2797, %v2470, 0.0
        %v2834 = vrot.slane %v2833, 4
        %v2835 = vadd.f32 %v2833, %v2834
        %v2836 = vrot.slane %v2835, 2
        %v2837 = vadd.f32 %v2835, %v2836
        %v2838 = vrot.slane %v2837, 1
        %v2839 = vadd.f32 %v2837, %v2838
        %v2840 = vsel %vm2797, %v2630, 0.0
        %v2841 = vrot.slane %v2840, 4
        %v2842 = vadd.f32 %v2840, %v2841
        %v2843 = vrot.slane %v2842, 2
        %v2844 = vadd.f32 %v2842, %v2843
        %v2845 = vrot.slane %v2844, 1
        %v2846 = vadd.f32 %v2844, %v2845
        %v2847 = vsel %vm2797, %v2790, 0.0
        %v2848 = vrot.slane %v2847, 4
        %v2849 = vadd.f32 %v2847, %v2848
        %v2850 = vrot.slane %v2849, 2
        %v2851 = vadd.f32 %v2849, %v2850
        %v2852 = vrot.slane %v2851, 1
        %v2853 = vadd.f32 %v2851, %v2852
        %v2854 = vrcp.pop 2.0
        %v2855 = vmul.f32 2.0, %v2854
        %v2856 = vsub.f32 1.0, %v2855
        %v2857 = vmul.f32 %v2854, %v2856
        %v2858 = vadd.f32 %v2854, %v2857
        %vm2859 = vweird.f32 %v2854
        %v2860 = vsel %vm2859, %v2854, %v2858
        %v2861 = vmul.f32 %v2804, %v2860
        %v2862 = vmul.f32 %v2811, %v2860
        %v2863 = vmul.f32 %v2818, %v2860
        %v2864 = vmul.f32 %v2825, %v2860
        %v2865 = vmul.f32 %v2832, %v2860
        %v2866 = vmul.f32 %v2839, %v2860
        %v2867 = vmul.f32 %v2846, %v2860
        %v2868 = vmul.f32 %v2853, %v2860
        %v2869 = vsub.f32 %v1670, %v2861
        %v2870 = vsub.f32 %v1830, %v2862
        %v2871 = vsub.f32 %v1990, %v2863
        %v2872 = vsub.f32 %v2150, %v2864
        %v2873 = vsub.f32 %v2310, %v2865
        %v2874 = vsub.f32 %v2470, %v2866
        %v2875 = vsub.f32 %v2630, %v2867
        %v2876 = vsub.f32 %v2790, %v2868
        %v2877 = vmul.f32 %v2869, %v2869
        %v2878 = vmul.f32 %v2870, %v2870
        %v2879 = vmul.f32 %v2871, %v2871
        %v2880 = vmul.f32 %v2872, %v2872
        %v2881 = vmul.f32 %v2873, %v2873
        %v2882 = vmul.f32 %v2874, %v2874
        %v2883 = vmul.f32 %v2875, %v2875
        %v2884 = vmul.f32 %v2876, %v2876
        %v2885 = vsel %vm2797, %v2877, 0.0
        %v2886 = vrot.slane %v2885, 4
        %v2887 = vadd.f32 %v2885, %v2886
        %v2888 = vrot.slane %v2887, 2
        %v2889 = vadd.f32 %v2887, %v2888
        %v2890 = vrot.slane %v2889, 1
        %v2891 = vadd.f32 %v2889, %v2890
        %v2892 = vsel %vm2797, %v2878, 0.0
        %v2893 = vrot.slane %v2892, 4
        %v2894 = vadd.f32 %v2892, %v2893
        %v2895 = vrot.slane %v2894, 2
        %v2896 = vadd.f32 %v2894, %v2895
        %v2897 = vrot.slane %v2896, 1
        %v2898 = vadd.f32 %v2896, %v2897
        %v2899 = vsel %vm2797, %v2879, 0.0
        %v2900 = vrot.slane %v2899, 4
        %v2901 = vadd.f32 %v2899, %v2900
        %v2902 = vrot.slane %v2901, 2
        %v2903 = vadd.f32 %v2901, %v2902
        %v2904 = vrot.slane %v2903, 1
        %v2905 = vadd.f32 %v2903, %v2904
        %v2906 = vsel %vm2797, %v2880, 0.0
        %v2907 = vrot.slane %v2906, 4
        %v2908 = vadd.f32 %v2906, %v2907
        %v2909 = vrot.slane %v2908, 2
        %v2910 = vadd.f32 %v2908, %v2909
        %v2911 = vrot.slane %v2910, 1
        %v2912 = vadd.f32 %v2910, %v2911
        %v2913 = vsel %vm2797, %v2881, 0.0
        %v2914 = vrot.slane %v2913, 4
        %v2915 = vadd.f32 %v2913, %v2914
        %v2916 = vrot.slane %v2915, 2
        %v2917 = vadd.f32 %v2915, %v2916
        %v2918 = vrot.slane %v2917, 1
        %v2919 = vadd.f32 %v2917, %v2918
        %v2920 = vsel %vm2797, %v2882, 0.0
        %v2921 = vrot.slane %v2920, 4
        %v2922 = vadd.f32 %v2920, %v2921
        %v2923 = vrot.slane %v2922, 2
        %v2924 = vadd.f32 %v2922, %v2923
        %v2925 = vrot.slane %v2924, 1
        %v2926 = vadd.f32 %v2924, %v2925
        %v2927 = vsel %vm2797, %v2883, 0.0
        %v2928 = vrot.slane %v2927, 4
        %v2929 = vadd.f32 %v2927, %v2928
        %v2930 = vrot.slane %v2929, 2
        %v2931 = vadd.f32 %v2929, %v2930
        %v2932 = vrot.slane %v2931, 1
        %v2933 = vadd.f32 %v2931, %v2932
        %v2934 = vsel %vm2797, %v2884, 0.0
        %v2935 = vrot.slane %v2934, 4
        %v2936 = vadd.f32 %v2934, %v2935
        %v2937 = vrot.slane %v2936, 2
        %v2938 = vadd.f32 %v2936, %v2937
        %v2939 = vrot.slane %v2938, 1
        %v2940 = vadd.f32 %v2938, %v2939
        %v2941 = vmul.f32 %v2891, %v2860
        %v2942 = vmul.f32 %v2898, %v2860
        %v2943 = vmul.f32 %v2905, %v2860
        %v2944 = vmul.f32 %v2912, %v2860
        %v2945 = vmul.f32 %v2919, %v2860
        %v2946 = vmul.f32 %v2926, %v2860
        %v2947 = vmul.f32 %v2933, %v2860
        %v2948 = vmul.f32 %v2940, %v2860
        %v2949 = vadd.f32 %v2941, 1e-05
        %v2950 = vadd.f32 %v2942, 1e-05
        %v2951 = vadd.f32 %v2943, 1e-05
        %v2952 = vadd.f32 %v2944, 1e-05
        %v2953 = vadd.f32 %v2945, 1e-05
        %v2954 = vadd.f32 %v2946, 1e-05
        %v2955 = vadd.f32 %v2947, 1e-05
        %v2956 = vadd.f32 %v2948, 1e-05
        %v2957 = vrsqrt.pop %v2949
        %v2958 = vmul.f32 %v2957, %v2949
        %v2959 = vmul.f32 %v2958, %v2957
        %v2960 = vmul.f32 0.5, %v2959
        %v2961 = vsub.f32 1.5, %v2960
        %v2962 = vmul.f32 %v2957, %v2961
        %vm2963 = vweird.f32 %v2949
        %vm2964 = vweird.f32 %v2957
        %vm2965 = vmor %vm2963, %vm2964
        %v2966 = vsel %vm2965, %v2957, %v2962
        %v2967 = vrsqrt.pop %v2950
        %v2968 = vmul.f32 %v2967, %v2950
        %v2969 = vmul.f32 %v2968, %v2967
        %v2970 = vmul.f32 0.5, %v2969
        %v2971 = vsub.f32 1.5, %v2970
        %v2972 = vmul.f32 %v2967, %v2971
        %vm2973 = vweird.f32 %v2950
        %vm2974 = vweird.f32 %v2967
        %vm2975 = vmor %vm2973, %vm2974
        %v2976 = vsel %vm2975, %v2967, %v2972
        %v2977 = vrsqrt.pop %v2951
        %v2978 = vmul.f32 %v2977, %v2951
        %v2979 = vmul.f32 %v2978, %v2977
        %v2980 = vmul.f32 0.5, %v2979
        %v2981 = vsub.f32 1.5, %v2980
        %v2982 = vmul.f32 %v2977, %v2981
        %vm2983 = vweird.f32 %v2951
        %vm2984 = vweird.f32 %v2977
        %vm2985 = vmor %vm2983, %vm2984
        %v2986 = vsel %vm2985, %v2977, %v2982
        %v2987 = vrsqrt.pop %v2952
        %v2988 = vmul.f32 %v2987, %v2952
        %v2989 = vmul.f32 %v2988, %v2987
        %v2990 = vmul.f32 0.5, %v2989
        %v2991 = vsub.f32 1.5, %v2990
        %v2992 = vmul.f32 %v2987, %v2991
        %vm2993 = vweird.f32 %v2952
        %vm2994 = vweird.f32 %v2987
        %vm2995 = vmor %vm2993, %vm2994
        %v2996 = vsel %vm2995, %v2987, %v2992
        %v2997 = vrsqrt.pop %v2953
        %v2998 = vmul.f32 %v2997, %v2953
        %v2999 = vmul.f32 %v2998, %v2997
        %v3000 = vmul.f32 0.5, %v2999
        %v3001 = vsub.f32 1.5, %v3000
        %v3002 = vmul.f32 %v2997, %v3001
        %vm3003 = vweird.f32 %v2953
        %vm3004 = vweird.f32 %v2997
        %vm3005 = vmor %vm3003, %vm3004
        %v3006 = vsel %vm3005, %v2997, %v3002
        %v3007 = vrsqrt.pop %v2954
        %v3008 = vmul.f32 %v3007, %v2954
        %v3009 = vmul.f32 %v3008, %v3007
        %v3010 = vmul.f32 0.5, %v3009
        %v3011 = vsub.f32 1.5, %v3010
        %v3012 = vmul.f32 %v3007, %v3011
        %vm3013 = vweird.f32 %v2954
        %vm3014 = vweird.f32 %v3007
        %vm3015 = vmor %vm3013, %vm3014
        %v3016 = vsel %vm3015, %v3007, %v3012
        %v3017 = vrsqrt.pop %v2955
        %v3018 = vmul.f32 %v3017, %v2955
        %v3019 = vmul.f32 %v3018, %v3017
        %v3020 = vmul.f32 0.5, %v3019
        %v3021 = vsub.f32 1.5, %v3020
        %v3022 = vmul.f32 %v3017, %v3021
        %vm3023 = vweird.f32 %v2955
        %vm3024 = vweird.f32 %v3017
        %vm3025 = vmor %vm3023, %vm3024
        %v3026 = vsel %vm3025, %v3017, %v3022
        %v3027 = vrsqrt.pop %v2956
        %v3028 = vmul.f32 %v3027, %v2956
        %v3029 = vmul.f32 %v3028, %v3027
        %v3030 = vmul.f32 0.5, %v3029
        %v3031 = vsub.f32 1.5, %v3030
        %v3032 = vmul.f32 %v3027, %v3031
        %vm3033 = vweird.f32 %v2956
        %vm3034 = vweird.f32 %v3027
        %vm3035 = vmor %vm3033, %vm3034
        %v3036 = vsel %vm3035, %v3027, %v3032
        %v3037 = vmul.f32 %v2869, %v2966
        %v3038 = vmul.f32 %v2870, %v2976
        %v3039 = vmul.f32 %v2871, %v2986
        %v3040 = vmul.f32 %v2872, %v2996
        %v3041 = vmul.f32 %v2873, %v3006
        %v3042 = vmul.f32 %v2874, %v3016
        %v3043 = vmul.f32 %v2875, %v3026
        %v3044 = vmul.f32 %v2876, %v3036
        %v3047 = vperm.slane %v2795, 0
        %v3048 = vperm.slane %v2795, 2
        %v3049 = vperm.slane %v2795, 4
        %v3050 = vperm.slane %v2795, 6
        %v3051 = vperm.slane %v2796, 0
        %v3052 = vperm.slane %v2796, 2
        %v3053 = vperm.slane %v2796, 4
        %v3054 = vperm.slane %v2796, 6
        %v3063 = vperm.slane %v3047, 0
        %v3064 = vperm.slane %v3048, 0
        %v3065 = vperm.slane %v3049, 0
        %v3066 = vperm.slane %v3050, 0
        %v3067 = vperm.slane %v3051, 0
        %v3068 = vperm.slane %v3052, 0
        %v3069 = vperm.slane %v3053, 0
        %v3070 = vperm.slane %v3054, 0
        %v3071 = vmul.f32 %v3037, %v3063
        %v3072 = vmul.f32 %v3038, %v3064
        %v3073 = vmul.f32 %v3039, %v3065
        %v3074 = vmul.f32 %v3040, %v3066
        %v3075 = vmul.f32 %v3041, %v3067
        %v3076 = vmul.f32 %v3042, %v3068
        %v3077 = vmul.f32 %v3043, %v3069
        %v3078 = vmul.f32 %v3044, %v3070
        %v3079 = vperm.slane %v2795, 1
        %v3080 = vperm.slane %v2795, 3
        %v3081 = vperm.slane %v2795, 5
        %v3082 = vperm.slane %v2795, 7
        %v3083 = vperm.slane %v2796, 1
        %v3084 = vperm.slane %v2796, 3
        %v3085 = vperm.slane %v2796, 5
        %v3086 = vperm.slane %v2796, 7
        %v3095 = vperm.slane %v3079, 1
        %v3096 = vperm.slane %v3080, 1
        %v3097 = vperm.slane %v3081, 1
        %v3098 = vperm.slane %v3082, 1
        %v3099 = vperm.slane %v3083, 1
        %v3100 = vperm.slane %v3084, 1
        %v3101 = vperm.slane %v3085, 1
        %v3102 = vperm.slane %v3086, 1
        %v3103 = vadd.f32 %v3071, %v3095
        %v3104 = vadd.f32 %v3072, %v3096
        %v3105 = vadd.f32 %v3073, %v3097
        %v3106 = vadd.f32 %v3074, %v3098
        %v3107 = vadd.f32 %v3075, %v3099
        %v3108 = vadd.f32 %v3076, %v3100
        %v3109 = vadd.f32 %v3077, %v3101
        %v3110 = vadd.f32 %v3078, %v3102
        %v3111 = vmax.f32 %v3103, 0.0
        %v3112 = vmax.f32 %v3104, 0.0
        %v3113 = vmax.f32 %v3105, 0.0
        %v3114 = vmax.f32 %v3106, 0.0
        %v3115 = vmax.f32 %v3107, 0.0
        %v3116 = vmax.f32 %v3108, 0.0
        %v3117 = vmax.f32 %v3109, 0.0
        %v3118 = vmax.f32 %v3110, 0.0
        %v3119 = vld [vmem:[#allocation2] sm:$0xff]
        %v3120 = vld [vmem:[%s402] sm:$0xff]
        %v3121 = vld [vmem:[%s402 + $0x8] sm:$0xff]
        %v3122 = vld [vmem:[%s402 + $0x10] sm:$0xff]
        %v3123 = vld [vmem:[%s402 + $0x18] sm:$0xff]
        %v3124 = vld [vmem:[%s402 + $0x20] sm:$0xff]
        %v3125 = vld [vmem:[%s402 + $0x28] sm:$0xff]
        %v3126 = vld [vmem:[%s402 + $0x30] sm:$0xff]
        %v3127 = vld [vmem:[%s402 + $0x38] sm:$0xff]
        %v3128 = vld [vmem:[%s402 + $0x40] sm:$0xff]
        %v3129 = vld [vmem:[%s402 + $0x48] sm:$0xff]
        %v3130 = vld [vmem:[%s402 + $0x50] sm:$0xff]
        %v3131 = vld [vmem:[%s402 + $0x58] sm:$0xff]
        %v3132 = vld [vmem:[%s402 + $0x60] sm:$0xff]
        %v3133 = vld [vmem:[%s402 + $0x68] sm:$0xff]
        %v3134 = vld [vmem:[%s402 + $0x70] sm:$0xff]
        %v3135 = vld [vmem:[%s402 + $0x78] sm:$0xff]
        %v3136 = vld [vmem:[%s402 + $0x80] sm:$0xff]
        %v3137 = vld [vmem:[%s402 + $0x88] sm:$0xff]
        %v3138 = vld [vmem:[%s402 + $0x90] sm:$0xff]
        %v3139 = vld [vmem:[%s402 + $0x98] sm:$0xff]
        %v3140 = vld [vmem:[%s402 + $0xa0] sm:$0xff]
        %v3141 = vld [vmem:[%s402 + $0xa8] sm:$0xff]
        %v3142 = vld [vmem:[%s402 + $0xb0] sm:$0xff]
        %v3143 = vld [vmem:[%s402 + $0xb8] sm:$0xff]
        %v3144 = vld [vmem:[%s402 + $0xc0] sm:$0xff]
        %v3145 = vld [vmem:[%s402 + $0xc8] sm:$0xff]
        %v3146 = vld [vmem:[%s402 + $0xd0] sm:$0xff]
        %v3147 = vld [vmem:[%s402 + $0xd8] sm:$0xff]
        %v3148 = vld [vmem:[%s402 + $0xe0] sm:$0xff]
        %v3149 = vld [vmem:[%s402 + $0xe8] sm:$0xff]
        %v3150 = vld [vmem:[%s402 + $0xf0] sm:$0xff]
        %v3151 = vld [vmem:[%s402 + $0xf8] sm:$0xff]
        %v3152 = vld [vmem:[%s402 + $0x100] sm:$0xff]
        %v3153 = vld [vmem:[%s402 + $0x108] sm:$0xff]
        %v3154 = vld [vmem:[%s402 + $0x110] sm:$0xff]
        %v3155 = vld [vmem:[%s402 + $0x118] sm:$0xff]
        %v3156 = vld [vmem:[%s402 + $0x120] sm:$0xff]
        %v3157 = vld [vmem:[%s402 + $0x128] sm:$0xff]
        %v3158 = vld [vmem:[%s402 + $0x130] sm:$0xff]
        %v3159 = vld [vmem:[%s402 + $0x138] sm:$0xff]
        %v3160 = vld [vmem:[%s402 + $0x140] sm:$0xff]
        %v3161 = vld [vmem:[%s402 + $0x148] sm:$0xff]
        %v3162 = vld [vmem:[%s402 + $0x150] sm:$0xff]
        %v3163 = vld [vmem:[%s402 + $0x158] sm:$0xff]
        %v3164 = vld [vmem:[%s402 + $0x160] sm:$0xff]
        %v3165 = vld [vmem:[%s402 + $0x168] sm:$0xff]
        %v3166 = vld [vmem:[%s402 + $0x170] sm:$0xff]
        %v3167 = vld [vmem:[%s402 + $0x178] sm:$0xff]
        %v3168 = vld [vmem:[%s402 + $0x180] sm:$0xff]
        %v3169 = vld [vmem:[%s402 + $0x188] sm:$0xff]
        %v3170 = vld [vmem:[%s402 + $0x190] sm:$0xff]
        %v3171 = vld [vmem:[%s402 + $0x198] sm:$0xff]
        %v3172 = vld [vmem:[%s402 + $0x1a0] sm:$0xff]
        %v3173 = vld [vmem:[%s402 + $0x1a8] sm:$0xff]
        %v3174 = vld [vmem:[%s402 + $0x1b0] sm:$0xff]
        %v3175 = vld [vmem:[%s402 + $0x1b8] sm:$0xff]
        %v3176 = vld [vmem:[%s402 + $0x1c0] sm:$0xff]
        %v3177 = vld [vmem:[%s402 + $0x1c8] sm:$0xff]
        %v3178 = vld [vmem:[%s402 + $0x1d0] sm:$0xff]
        %v3179 = vld [vmem:[%s402 + $0x1d8] sm:$0xff]
        %v3180 = vld [vmem:[%s402 + $0x1e0] sm:$0xff]
        %v3181 = vld [vmem:[%s402 + $0x1e8] sm:$0xff]
        %v3182 = vld [vmem:[%s402 + $0x1f0] sm:$0xff]
        %v3183 = vld [vmem:[%s402 + $0x1f8] sm:$0xff]
        %v3184 = vld [vmem:[%s402 + $0x200] sm:$0xff]
        %v3185 = vld [vmem:[%s402 + $0x208] sm:$0xff]
        %v3186 = vld [vmem:[%s402 + $0x210] sm:$0xff]
        %v3187 = vld [vmem:[%s402 + $0x218] sm:$0xff]
        %v3188 = vld [vmem:[%s402 + $0x220] sm:$0xff]
        %v3189 = vld [vmem:[%s402 + $0x228] sm:$0xff]
        %v3190 = vld [vmem:[%s402 + $0x230] sm:$0xff]
        %v3191 = vld [vmem:[%s402 + $0x238] sm:$0xff]
        %v3192 = vld [vmem:[%s402 + $0x240] sm:$0xff]
        %v3193 = vld [vmem:[%s402 + $0x248] sm:$0xff]
        %v3194 = vld [vmem:[%s402 + $0x250] sm:$0xff]
        %v3195 = vld [vmem:[%s402 + $0x258] sm:$0xff]
        %v3196 = vld [vmem:[%s402 + $0x260] sm:$0xff]
        %v3197 = vld [vmem:[%s402 + $0x268] sm:$0xff]
        %v3198 = vld [vmem:[%s402 + $0x270] sm:$0xff]
        %v3199 = vld [vmem:[%s402 + $0x278] sm:$0xff]
        %v3200 = vld [vmem:[%s402 + $0x280] sm:$0xff]
        %v3201 = vld [vmem:[%s402 + $0x288] sm:$0xff]
        %v3202 = vld [vmem:[%s402 + $0x290] sm:$0xff]
        %v3203 = vld [vmem:[%s402 + $0x298] sm:$0xff]
        %v3204 = vld [vmem:[%s402 + $0x2a0] sm:$0xff]
        %v3205 = vld [vmem:[%s402 + $0x2a8] sm:$0xff]
        %v3206 = vld [vmem:[%s402 + $0x2b0] sm:$0xff]
        %v3207 = vld [vmem:[%s402 + $0x2b8] sm:$0xff]
        %v3208 = vld [vmem:[%s402 + $0x2c0] sm:$0xff]
        %v3209 = vld [vmem:[%s402 + $0x2c8] sm:$0xff]
        %v3210 = vld [vmem:[%s402 + $0x2d0] sm:$0xff]
        %v3211 = vld [vmem:[%s402 + $0x2d8] sm:$0xff]
        %v3212 = vld [vmem:[%s402 + $0x2e0] sm:$0xff]
        %v3213 = vld [vmem:[%s402 + $0x2e8] sm:$0xff]
        %v3214 = vld [vmem:[%s402 + $0x2f0] sm:$0xff]
        %v3215 = vld [vmem:[%s402 + $0x2f8] sm:$0xff]
        %v3216 = vld [vmem:[%s402 + $0x300] sm:$0xff]
        %v3217 = vld [vmem:[%s402 + $0x308] sm:$0xff]
        %v3218 = vld [vmem:[%s402 + $0x310] sm:$0xff]
        %v3219 = vld [vmem:[%s402 + $0x318] sm:$0xff]
        %v3220 = vld [vmem:[%s402 + $0x320] sm:$0xff]
        %v3221 = vld [vmem:[%s402 + $0x328] sm:$0xff]
        %v3222 = vld [vmem:[%s402 + $0x330] sm:$0xff]
        %v3223 = vld [vmem:[%s402 + $0x338] sm:$0xff]
        %v3224 = vld [vmem:[%s402 + $0x340] sm:$0xff]
        %v3225 = vld [vmem:[%s402 + $0x348] sm:$0xff]
        %v3226 = vld [vmem:[%s402 + $0x350] sm:$0xff]
        %v3227 = vld [vmem:[%s402 + $0x358] sm:$0xff]
        %v3228 = vld [vmem:[%s402 + $0x360] sm:$0xff]
        %v3229 = vld [vmem:[%s402 + $0x368] sm:$0xff]
        %v3230 = vld [vmem:[%s402 + $0x370] sm:$0xff]
        %v3231 = vld [vmem:[%s402 + $0x378] sm:$0xff]
        %v3232 = vld [vmem:[%s402 + $0x380] sm:$0xff]
        %v3233 = vld [vmem:[%s402 + $0x388] sm:$0xff]
        %v3234 = vld [vmem:[%s402 + $0x390] sm:$0xff]
        %v3235 = vld [vmem:[%s402 + $0x398] sm:$0xff]
        %v3236 = vld [vmem:[%s402 + $0x3a0] sm:$0xff]
        %v3237 = vld [vmem:[%s402 + $0x3a8] sm:$0xff]
        %v3238 = vld [vmem:[%s402 + $0x3b0] sm:$0xff]
        %v3239 = vld [vmem:[%s402 + $0x3b8] sm:$0xff]
        %v3240 = vld [vmem:[%s402 + $0x3c0] sm:$0xff]
        %v3241 = vld [vmem:[%s402 + $0x3c8] sm:$0xff]
        %v3242 = vld [vmem:[%s402 + $0x3d0] sm:$0xff]
        %v3243 = vld [vmem:[%s402 + $0x3d8] sm:$0xff]
        %v3244 = vld [vmem:[%s402 + $0x3e0] sm:$0xff]
        %v3245 = vld [vmem:[%s402 + $0x3e8] sm:$0xff]
        %v3246 = vld [vmem:[%s402 + $0x3f0] sm:$0xff]
        %v3247 = vld [vmem:[%s402 + $0x3f8] sm:$0xff]
        %v3248 = vld [vmem:[%s402 + $0x400] sm:$0xff]
        %v3249 = vld [vmem:[%s402 + $0x408] sm:$0xff]
        %v3250 = vld [vmem:[%s402 + $0x410] sm:$0xff]
        %v3251 = vld [vmem:[%s402 + $0x418] sm:$0xff]
        %v3252 = vld [vmem:[%s402 + $0x420] sm:$0xff]
        %v3253 = vld [vmem:[%s402 + $0x428] sm:$0xff]
        %v3254 = vld [vmem:[%s402 + $0x430] sm:$0xff]
        %v3255 = vld [vmem:[%s402 + $0x438] sm:$0xff]
        %v3256 = vld [vmem:[%s402 + $0x440] sm:$0xff]
        %v3257 = vld [vmem:[%s402 + $0x448] sm:$0xff]
        %v3258 = vld [vmem:[%s402 + $0x450] sm:$0xff]
        %v3259 = vld [vmem:[%s402 + $0x458] sm:$0xff]
        %v3260 = vld [vmem:[%s402 + $0x460] sm:$0xff]
        %v3261 = vld [vmem:[%s402 + $0x468] sm:$0xff]
        %v3262 = vld [vmem:[%s402 + $0x470] sm:$0xff]
        %v3263 = vld [vmem:[%s402 + $0x478] sm:$0xff]
        %v3264 = vld [vmem:[%s402 + $0x480] sm:$0xff]
        %v3265 = vld [vmem:[%s402 + $0x488] sm:$0xff]
        %v3266 = vld [vmem:[%s402 + $0x490] sm:$0xff]
        %v3267 = vld [vmem:[%s402 + $0x498] sm:$0xff]
        %v3268 = vld [vmem:[%s402 + $0x4a0] sm:$0xff]
        %v3269 = vld [vmem:[%s402 + $0x4a8] sm:$0xff]
        %v3270 = vld [vmem:[%s402 + $0x4b0] sm:$0xff]
        %v3271 = vld [vmem:[%s402 + $0x4b8] sm:$0xff]
        %v3272 = vld [vmem:[%s402 + $0x4c0] sm:$0xff]
        %v3273 = vld [vmem:[%s402 + $0x4c8] sm:$0xff]
        %v3274 = vld [vmem:[%s402 + $0x4d0] sm:$0xff]
        %v3275 = vld [vmem:[%s402 + $0x4d8] sm:$0xff]
        %v3276 = vld [vmem:[%s402 + $0x4e0] sm:$0xff]
        %v3277 = vld [vmem:[%s402 + $0x4e8] sm:$0xff]
        %v3278 = vld [vmem:[%s402 + $0x4f0] sm:$0xff]
        %v3279 = vld [vmem:[%s402 + $0x4f8] sm:$0xff]
        %v3280 = vld [vmem:[%s402 + $0x500] sm:$0xff]
        %v3281 = vld [vmem:[%s402 + $0x508] sm:$0xff]
        %v3282 = vld [vmem:[%s402 + $0x510] sm:$0xff]
        %v3283 = vld [vmem:[%s402 + $0x518] sm:$0xff]
        %v3284 = vld [vmem:[%s402 + $0x520] sm:$0xff]
        %v3285 = vld [vmem:[%s402 + $0x528] sm:$0xff]
        %v3286 = vld [vmem:[%s402 + $0x530] sm:$0xff]
        %v3287 = vld [vmem:[%s402 + $0x538] sm:$0xff]
        %v3288 = vld [vmem:[%s402 + $0x540] sm:$0xff]
        %v3289 = vld [vmem:[%s402 + $0x548] sm:$0xff]
        %v3290 = vld [vmem:[%s402 + $0x550] sm:$0xff]
        %v3291 = vld [vmem:[%s402 + $0x558] sm:$0xff]
        %v3292 = vld [vmem:[%s402 + $0x560] sm:$0xff]
        %v3293 = vld [vmem:[%s402 + $0x568] sm:$0xff]
        %v3294 = vld [vmem:[%s402 + $0x570] sm:$0xff]
        %v3295 = vld [vmem:[%s402 + $0x578] sm:$0xff]
        %v3296 = vld [vmem:[%s402 + $0x580] sm:$0xff]
        %v3297 = vld [vmem:[%s402 + $0x588] sm:$0xff]
        %v3298 = vld [vmem:[%s402 + $0x590] sm:$0xff]
        %v3299 = vld [vmem:[%s402 + $0x598] sm:$0xff]
        %v3300 = vld [vmem:[%s402 + $0x5a0] sm:$0xff]
        %v3301 = vld [vmem:[%s402 + $0x5a8] sm:$0xff]
        %v3302 = vld [vmem:[%s402 + $0x5b0] sm:$0xff]
        %v3303 = vld [vmem:[%s402 + $0x5b8] sm:$0xff]
        %v3304 = vld [vmem:[%s402 + $0x5c0] sm:$0xff]
        %v3305 = vld [vmem:[%s402 + $0x5c8] sm:$0xff]
        %v3306 = vld [vmem:[%s402 + $0x5d0] sm:$0xff]
        %v3307 = vld [vmem:[%s402 + $0x5d8] sm:$0xff]
        %v3308 = vld [vmem:[%s402 + $0x5e0] sm:$0xff]
        %v3309 = vld [vmem:[%s402 + $0x5e8] sm:$0xff]
        %v3310 = vld [vmem:[%s402 + $0x5f0] sm:$0xff]
        %v3311 = vld [vmem:[%s402 + $0x5f8] sm:$0xff]
        %v3312 = vld [vmem:[%s402 + $0x600] sm:$0xff]
        %v3313 = vld [vmem:[%s402 + $0x608] sm:$0xff]
        %v3314 = vld [vmem:[%s402 + $0x610] sm:$0xff]
        %v3315 = vld [vmem:[%s402 + $0x618] sm:$0xff]
        %v3316 = vld [vmem:[%s402 + $0x620] sm:$0xff]
        %v3317 = vld [vmem:[%s402 + $0x628] sm:$0xff]
        %v3318 = vld [vmem:[%s402 + $0x630] sm:$0xff]
        %v3319 = vld [vmem:[%s402 + $0x638] sm:$0xff]
        %v3320 = vld [vmem:[%s402 + $0x640] sm:$0xff]
        %v3321 = vld [vmem:[%s402 + $0x648] sm:$0xff]
        %v3322 = vld [vmem:[%s402 + $0x650] sm:$0xff]
        %v3323 = vld [vmem:[%s402 + $0x658] sm:$0xff]
        %v3324 = vld [vmem:[%s402 + $0x660] sm:$0xff]
        %v3325 = vld [vmem:[%s402 + $0x668] sm:$0xff]
        %v3326 = vld [vmem:[%s402 + $0x670] sm:$0xff]
        %v3327 = vld [vmem:[%s402 + $0x678] sm:$0xff]
        %v3328 = vld [vmem:[%s402 + $0x680] sm:$0xff]
        %v3329 = vld [vmem:[%s402 + $0x688] sm:$0xff]
        %v3330 = vld [vmem:[%s402 + $0x690] sm:$0xff]
        %v3331 = vld [vmem:[%s402 + $0x698] sm:$0xff]
        %v3332 = vld [vmem:[%s402 + $0x6a0] sm:$0xff]
        %v3333 = vld [vmem:[%s402 + $0x6a8] sm:$0xff]
        %v3334 = vld [vmem:[%s402 + $0x6b0] sm:$0xff]
        %v3335 = vld [vmem:[%s402 + $0x6b8] sm:$0xff]
        %v3336 = vld [vmem:[%s402 + $0x6c0] sm:$0xff]
        %v3337 = vld [vmem:[%s402 + $0x6c8] sm:$0xff]
        %v3338 = vld [vmem:[%s402 + $0x6d0] sm:$0xff]
        %v3339 = vld [vmem:[%s402 + $0x6d8] sm:$0xff]
        %v3340 = vld [vmem:[%s402 + $0x6e0] sm:$0xff]
        %v3341 = vld [vmem:[%s402 + $0x6e8] sm:$0xff]
        %v3342 = vld [vmem:[%s402 + $0x6f0] sm:$0xff]
        %v3343 = vld [vmem:[%s402 + $0x6f8] sm:$0xff]
        %v3344 = vld [vmem:[%s402 + $0x700] sm:$0xff]
        %v3345 = vld [vmem:[%s402 + $0x708] sm:$0xff]
        %v3346 = vld [vmem:[%s402 + $0x710] sm:$0xff]
        %v3347 = vld [vmem:[%s402 + $0x718] sm:$0xff]
        %v3348 = vld [vmem:[%s402 + $0x720] sm:$0xff]
        %v3349 = vld [vmem:[%s402 + $0x728] sm:$0xff]
        %v3350 = vld [vmem:[%s402 + $0x730] sm:$0xff]
        %v3351 = vld [vmem:[%s402 + $0x738] sm:$0xff]
        %v3352 = vld [vmem:[%s402 + $0x740] sm:$0xff]
        %v3353 = vld [vmem:[%s402 + $0x748] sm:$0xff]
        %v3354 = vld [vmem:[%s402 + $0x750] sm:$0xff]
        %v3355 = vld [vmem:[%s402 + $0x758] sm:$0xff]
        %v3356 = vld [vmem:[%s402 + $0x760] sm:$0xff]
        %v3357 = vld [vmem:[%s402 + $0x768] sm:$0xff]
        %v3358 = vld [vmem:[%s402 + $0x770] sm:$0xff]
        %v3359 = vld [vmem:[%s402 + $0x778] sm:$0xff]
        %v3360 = vld [vmem:[%s402 + $0x780] sm:$0xff]
        %v3361 = vld [vmem:[%s402 + $0x788] sm:$0xff]
        %v3362 = vld [vmem:[%s402 + $0x790] sm:$0xff]
        %v3363 = vld [vmem:[%s402 + $0x798] sm:$0xff]
        %v3364 = vld [vmem:[%s402 + $0x7a0] sm:$0xff]
        %v3365 = vld [vmem:[%s402 + $0x7a8] sm:$0xff]
        %v3366 = vld [vmem:[%s402 + $0x7b0] sm:$0xff]
        %v3367 = vld [vmem:[%s402 + $0x7b8] sm:$0xff]
        %v3368 = vld [vmem:[%s402 + $0x7c0] sm:$0xff]
        %v3369 = vld [vmem:[%s402 + $0x7c8] sm:$0xff]
        %v3370 = vld [vmem:[%s402 + $0x7d0] sm:$0xff]
        %v3371 = vld [vmem:[%s402 + $0x7d8] sm:$0xff]
        %v3372 = vld [vmem:[%s402 + $0x7e0] sm:$0xff]
        %v3373 = vld [vmem:[%s402 + $0x7e8] sm:$0xff]
        %v3374 = vld [vmem:[%s402 + $0x7f0] sm:$0xff]
        %v3375 = vld [vmem:[%s402 + $0x7f8] sm:$0xff]
        %v3376 = vld [vmem:[%s402 + $0x800] sm:$0xff]
        %v3377 = vld [vmem:[%s402 + $0x808] sm:$0xff]
        %v3378 = vld [vmem:[%s402 + $0x810] sm:$0xff]
        %v3379 = vld [vmem:[%s402 + $0x818] sm:$0xff]
        %v3380 = vld [vmem:[%s402 + $0x820] sm:$0xff]
        %v3381 = vld [vmem:[%s402 + $0x828] sm:$0xff]
        %v3382 = vld [vmem:[%s402 + $0x830] sm:$0xff]
        %v3383 = vld [vmem:[%s402 + $0x838] sm:$0xff]
        %v3384 = vld [vmem:[%s402 + $0x840] sm:$0xff]
        %v3385 = vld [vmem:[%s402 + $0x848] sm:$0xff]
        %v3386 = vld [vmem:[%s402 + $0x850] sm:$0xff]
        %v3387 = vld [vmem:[%s402 + $0x858] sm:$0xff]
        %v3388 = vld [vmem:[%s402 + $0x860] sm:$0xff]
        %v3389 = vld [vmem:[%s402 + $0x868] sm:$0xff]
        %v3390 = vld [vmem:[%s402 + $0x870] sm:$0xff]
        %v3391 = vld [vmem:[%s402 + $0x878] sm:$0xff]
        %v3392 = vld [vmem:[%s402 + $0x880] sm:$0xff]
        %v3393 = vld [vmem:[%s402 + $0x888] sm:$0xff]
        %v3394 = vld [vmem:[%s402 + $0x890] sm:$0xff]
        %v3395 = vld [vmem:[%s402 + $0x898] sm:$0xff]
        %v3396 = vld [vmem:[%s402 + $0x8a0] sm:$0xff]
        %v3397 = vld [vmem:[%s402 + $0x8a8] sm:$0xff]
        %v3398 = vld [vmem:[%s402 + $0x8b0] sm:$0xff]
        %v3399 = vld [vmem:[%s402 + $0x8b8] sm:$0xff]
        %v3400 = vld [vmem:[%s402 + $0x8c0] sm:$0xff]
        %v3401 = vld [vmem:[%s402 + $0x8c8] sm:$0xff]
        %v3402 = vld [vmem:[%s402 + $0x8d0] sm:$0xff]
        %v3403 = vld [vmem:[%s402 + $0x8d8] sm:$0xff]
        %v3404 = vld [vmem:[%s402 + $0x8e0] sm:$0xff]
        %v3405 = vld [vmem:[%s402 + $0x8e8] sm:$0xff]
        %v3406 = vld [vmem:[%s402 + $0x8f0] sm:$0xff]
        %v3407 = vld [vmem:[%s402 + $0x8f8] sm:$0xff]
        %v3408 = vld [vmem:[%s402 + $0x900] sm:$0xff]
        %v3409 = vld [vmem:[%s402 + $0x908] sm:$0xff]
        %v3410 = vld [vmem:[%s402 + $0x910] sm:$0xff]
        %v3411 = vld [vmem:[%s402 + $0x918] sm:$0xff]
        %v3412 = vld [vmem:[%s402 + $0x920] sm:$0xff]
        %v3413 = vld [vmem:[%s402 + $0x928] sm:$0xff]
        %v3414 = vld [vmem:[%s402 + $0x930] sm:$0xff]
        %v3415 = vld [vmem:[%s402 + $0x938] sm:$0xff]
        %v3416 = vld [vmem:[%s402 + $0x940] sm:$0xff]
        %v3417 = vld [vmem:[%s402 + $0x948] sm:$0xff]
        %v3418 = vld [vmem:[%s402 + $0x950] sm:$0xff]
        %v3419 = vld [vmem:[%s402 + $0x958] sm:$0xff]
        %v3420 = vld [vmem:[%s402 + $0x960] sm:$0xff]
        %v3421 = vld [vmem:[%s402 + $0x968] sm:$0xff]
        %v3422 = vld [vmem:[%s402 + $0x970] sm:$0xff]
        %v3423 = vld [vmem:[%s402 + $0x978] sm:$0xff]
        %v3424 = vld [vmem:[%s402 + $0x980] sm:$0xff]
        %v3425 = vld [vmem:[%s402 + $0x988] sm:$0xff]
        %v3426 = vld [vmem:[%s402 + $0x990] sm:$0xff]
        %v3427 = vld [vmem:[%s402 + $0x998] sm:$0xff]
        %v3428 = vld [vmem:[%s402 + $0x9a0] sm:$0xff]
        %v3429 = vld [vmem:[%s402 + $0x9a8] sm:$0xff]
        %v3430 = vld [vmem:[%s402 + $0x9b0] sm:$0xff]
        %v3431 = vld [vmem:[%s402 + $0x9b8] sm:$0xff]
        %v3432 = vld [vmem:[%s402 + $0x9c0] sm:$0xff]
        %v3433 = vld [vmem:[%s402 + $0x9c8] sm:$0xff]
        %v3434 = vld [vmem:[%s402 + $0x9d0] sm:$0xff]
        %v3435 = vld [vmem:[%s402 + $0x9d8] sm:$0xff]
        %v3436 = vld [vmem:[%s402 + $0x9e0] sm:$0xff]
        %v3437 = vld [vmem:[%s402 + $0x9e8] sm:$0xff]
        %v3438 = vld [vmem:[%s402 + $0x9f0] sm:$0xff]
        %v3439 = vld [vmem:[%s402 + $0x9f8] sm:$0xff]
        %v3440 = vld [vmem:[%s402 + $0xa00] sm:$0xff]
        %v3441 = vld [vmem:[%s402 + $0xa08] sm:$0xff]
        %v3442 = vld [vmem:[%s402 + $0xa10] sm:$0xff]
        %v3443 = vld [vmem:[%s402 + $0xa18] sm:$0xff]
        %v3444 = vld [vmem:[%s402 + $0xa20] sm:$0xff]
        %v3445 = vld [vmem:[%s402 + $0xa28] sm:$0xff]
        %v3446 = vld [vmem:[%s402 + $0xa30] sm:$0xff]
        %v3447 = vld [vmem:[%s402 + $0xa38] sm:$0xff]
        %v3448 = vld [vmem:[%s402 + $0xa40] sm:$0xff]
        %v3449 = vld [vmem:[%s402 + $0xa48] sm:$0xff]
        %v3450 = vld [vmem:[%s402 + $0xa50] sm:$0xff]
        %v3451 = vld [vmem:[%s402 + $0xa58] sm:$0xff]
        %v3452 = vld [vmem:[%s402 + $0xa60] sm:$0xff]
        %v3453 = vld [vmem:[%s402 + $0xa68] sm:$0xff]
        %v3454 = vld [vmem:[%s402 + $0xa70] sm:$0xff]
        %v3455 = vld [vmem:[%s402 + $0xa78] sm:$0xff]
        %v3456 = vld [vmem:[%s402 + $0xa80] sm:$0xff]
        %v3457 = vld [vmem:[%s402 + $0xa88] sm:$0xff]
        %v3458 = vld [vmem:[%s402 + $0xa90] sm:$0xff]
        %v3459 = vld [vmem:[%s402 + $0xa98] sm:$0xff]
        %v3460 = vld [vmem:[%s402 + $0xaa0] sm:$0xff]
        %v3461 = vld [vmem:[%s402 + $0xaa8] sm:$0xff]
        %v3462 = vld [vmem:[%s402 + $0xab0] sm:$0xff]
        %v3463 = vld [vmem:[%s402 + $0xab8] sm:$0xff]
        %v3464 = vld [vmem:[%s402 + $0xac0] sm:$0xff]
        %v3465 = vld [vmem:[%s402 + $0xac8] sm:$0xff]
        %v3466 = vld [vmem:[%s402 + $0xad0] sm:$0xff]
        %v3467 = vld [vmem:[%s402 + $0xad8] sm:$0xff]
        %v3468 = vld [vmem:[%s402 + $0xae0] sm:$0xff]
        %v3469 = vld [vmem:[%s402 + $0xae8] sm:$0xff]
        %v3470 = vld [vmem:[%s402 + $0xaf0] sm:$0xff]
        %v3471 = vld [vmem:[%s402 + $0xaf8] sm:$0xff]
        %v3472 = vld [vmem:[%s402 + $0xb00] sm:$0xff]
        %v3473 = vld [vmem:[%s402 + $0xb08] sm:$0xff]
        %v3474 = vld [vmem:[%s402 + $0xb10] sm:$0xff]
        %v3475 = vld [vmem:[%s402 + $0xb18] sm:$0xff]
        %v3476 = vld [vmem:[%s402 + $0xb20] sm:$0xff]
        %v3477 = vld [vmem:[%s402 + $0xb28] sm:$0xff]
        %v3478 = vld [vmem:[%s402 + $0xb30] sm:$0xff]
        %v3479 = vld [vmem:[%s402 + $0xb38] sm:$0xff]
        %v3480 = vld [vmem:[%s402 + $0xb40] sm:$0xff]
        %v3481 = vld [vmem:[%s402 + $0xb48] sm:$0xff]
        %v3482 = vld [vmem:[%s402 + $0xb50] sm:$0xff]
        %v3483 = vld [vmem:[%s402 + $0xb58] sm:$0xff]
        %v3484 = vld [vmem:[%s402 + $0xb60] sm:$0xff]
        %v3485 = vld [vmem:[%s402 + $0xb68] sm:$0xff]
        %v3486 = vld [vmem:[%s402 + $0xb70] sm:$0xff]
        %v3487 = vld [vmem:[%s402 + $0xb78] sm:$0xff]
        %v3488 = vld [vmem:[%s402 + $0xb80] sm:$0xff]
        %v3489 = vld [vmem:[%s402 + $0xb88] sm:$0xff]
        %v3490 = vld [vmem:[%s402 + $0xb90] sm:$0xff]
        %v3491 = vld [vmem:[%s402 + $0xb98] sm:$0xff]
        %v3492 = vld [vmem:[%s402 + $0xba0] sm:$0xff]
        %v3493 = vld [vmem:[%s402 + $0xba8] sm:$0xff]
        %v3494 = vld [vmem:[%s402 + $0xbb0] sm:$0xff]
        %v3495 = vld [vmem:[%s402 + $0xbb8] sm:$0xff]
        %v3496 = vld [vmem:[%s402 + $0xbc0] sm:$0xff]
        %v3497 = vld [vmem:[%s402 + $0xbc8] sm:$0xff]
        %v3498 = vld [vmem:[%s402 + $0xbd0] sm:$0xff]
        %v3499 = vld [vmem:[%s402 + $0xbd8] sm:$0xff]
        %v3500 = vld [vmem:[%s402 + $0xbe0] sm:$0xff]
        %v3501 = vld [vmem:[%s402 + $0xbe8] sm:$0xff]
        %v3502 = vld [vmem:[%s402 + $0xbf0] sm:$0xff]
        %v3503 = vld [vmem:[%s402 + $0xbf8] sm:$0xff]
        %v3504 = vld [vmem:[%s402 + $0xc00] sm:$0xff]
        %v3505 = vld [vmem:[%s402 + $0xc08] sm:$0xff]
        %v3506 = vld [vmem:[%s402 + $0xc10] sm:$0xff]
        %v3507 = vld [vmem:[%s402 + $0xc18] sm:$0xff]
        %v3508 = vld [vmem:[%s402 + $0xc20] sm:$0xff]
        %v3509 = vld [vmem:[%s402 + $0xc28] sm:$0xff]
        %v3510 = vld [vmem:[%s402 + $0xc30] sm:$0xff]
        %v3511 = vld [vmem:[%s402 + $0xc38] sm:$0xff]
        %v3512 = vld [vmem:[%s402 + $0xc40] sm:$0xff]
        %v3513 = vld [vmem:[%s402 + $0xc48] sm:$0xff]
        %v3514 = vld [vmem:[%s402 + $0xc50] sm:$0xff]
        %v3515 = vld [vmem:[%s402 + $0xc58] sm:$0xff]
        %v3516 = vld [vmem:[%s402 + $0xc60] sm:$0xff]
        %v3517 = vld [vmem:[%s402 + $0xc68] sm:$0xff]
        %v3518 = vld [vmem:[%s402 + $0xc70] sm:$0xff]
        %v3519 = vld [vmem:[%s402 + $0xc78] sm:$0xff]
        %v3520 = vld [vmem:[%s402 + $0xc80] sm:$0xff]
        %v3521 = vld [vmem:[%s402 + $0xc88] sm:$0xff]
        %v3522 = vld [vmem:[%s402 + $0xc90] sm:$0xff]
        %v3523 = vld [vmem:[%s402 + $0xc98] sm:$0xff]
        %v3524 = vld [vmem:[%s402 + $0xca0] sm:$0xff]
        %v3525 = vld [vmem:[%s402 + $0xca8] sm:$0xff]
        %v3526 = vld [vmem:[%s402 + $0xcb0] sm:$0xff]
        %v3527 = vld [vmem:[%s402 + $0xcb8] sm:$0xff]
        %v3528 = vld [vmem:[%s402 + $0xcc0] sm:$0xff]
        %v3529 = vld [vmem:[%s402 + $0xcc8] sm:$0xff]
        %v3530 = vld [vmem:[%s402 + $0xcd0] sm:$0xff]
        %v3531 = vld [vmem:[%s402 + $0xcd8] sm:$0xff]
        %v3532 = vld [vmem:[%s402 + $0xce0] sm:$0xff]
        %v3533 = vld [vmem:[%s402 + $0xce8] sm:$0xff]
        %v3534 = vld [vmem:[%s402 + $0xcf0] sm:$0xff]
        %v3535 = vld [vmem:[%s402 + $0xcf8] sm:$0xff]
        %v3536 = vld [vmem:[%s402 + $0xd00] sm:$0xff]
        %v3537 = vld [vmem:[%s402 + $0xd08] sm:$0xff]
        %v3538 = vld [vmem:[%s402 + $0xd10] sm:$0xff]
        %v3539 = vld [vmem:[%s402 + $0xd18] sm:$0xff]
        %v3540 = vld [vmem:[%s402 + $0xd20] sm:$0xff]
        %v3541 = vld [vmem:[%s402 + $0xd28] sm:$0xff]
        %v3542 = vld [vmem:[%s402 + $0xd30] sm:$0xff]
        %v3543 = vld [vmem:[%s402 + $0xd38] sm:$0xff]
        %v3544 = vld [vmem:[%s402 + $0xd40] sm:$0xff]
        %v3545 = vld [vmem:[%s402 + $0xd48] sm:$0xff]
        %v3546 = vld [vmem:[%s402 + $0xd50] sm:$0xff]
        %v3547 = vld [vmem:[%s402 + $0xd58] sm:$0xff]
        %v3548 = vld [vmem:[%s402 + $0xd60] sm:$0xff]
        %v3549 = vld [vmem:[%s402 + $0xd68] sm:$0xff]
        %v3550 = vld [vmem:[%s402 + $0xd70] sm:$0xff]
        %v3551 = vld [vmem:[%s402 + $0xd78] sm:$0xff]
        %v3552 = vld [vmem:[%s402 + $0xd80] sm:$0xff]
        %v3553 = vld [vmem:[%s402 + $0xd88] sm:$0xff]
        %v3554 = vld [vmem:[%s402 + $0xd90] sm:$0xff]
        %v3555 = vld [vmem:[%s402 + $0xd98] sm:$0xff]
        %v3556 = vld [vmem:[%s402 + $0xda0] sm:$0xff]
        %v3557 = vld [vmem:[%s402 + $0xda8] sm:$0xff]
        %v3558 = vld [vmem:[%s402 + $0xdb0] sm:$0xff]
        %v3559 = vld [vmem:[%s402 + $0xdb8] sm:$0xff]
        %v3560 = vld [vmem:[%s402 + $0xdc0] sm:$0xff]
        %v3561 = vld [vmem:[%s402 + $0xdc8] sm:$0xff]
        %v3562 = vld [vmem:[%s402 + $0xdd0] sm:$0xff]
        %v3563 = vld [vmem:[%s402 + $0xdd8] sm:$0xff]
        %v3564 = vld [vmem:[%s402 + $0xde0] sm:$0xff]
        %v3565 = vld [vmem:[%s402 + $0xde8] sm:$0xff]
        %v3566 = vld [vmem:[%s402 + $0xdf0] sm:$0xff]
        %v3567 = vld [vmem:[%s402 + $0xdf8] sm:$0xff]
        %v3568 = vld [vmem:[%s402 + $0xe00] sm:$0xff]
        %v3569 = vld [vmem:[%s402 + $0xe08] sm:$0xff]
        %v3570 = vld [vmem:[%s402 + $0xe10] sm:$0xff]
        %v3571 = vld [vmem:[%s402 + $0xe18] sm:$0xff]
        %v3572 = vld [vmem:[%s402 + $0xe20] sm:$0xff]
        %v3573 = vld [vmem:[%s402 + $0xe28] sm:$0xff]
        %v3574 = vld [vmem:[%s402 + $0xe30] sm:$0xff]
        %v3575 = vld [vmem:[%s402 + $0xe38] sm:$0xff]
        %v3576 = vld [vmem:[%s402 + $0xe40] sm:$0xff]
        %v3577 = vld [vmem:[%s402 + $0xe48] sm:$0xff]
        %v3578 = vld [vmem:[%s402 + $0xe50] sm:$0xff]
        %v3579 = vld [vmem:[%s402 + $0xe58] sm:$0xff]
        %v3580 = vld [vmem:[%s402 + $0xe60] sm:$0xff]
        %v3581 = vld [vmem:[%s402 + $0xe68] sm:$0xff]
        %v3582 = vld [vmem:[%s402 + $0xe70] sm:$0xff]
        %v3583 = vld [vmem:[%s402 + $0xe78] sm:$0xff]
        %v3584 = vld [vmem:[%s402 + $0xe80] sm:$0xff]
        %v3585 = vld [vmem:[%s402 + $0xe88] sm:$0xff]
        %v3586 = vld [vmem:[%s402 + $0xe90] sm:$0xff]
        %v3587 = vld [vmem:[%s402 + $0xe98] sm:$0xff]
        %v3588 = vld [vmem:[%s402 + $0xea0] sm:$0xff]
        %v3589 = vld [vmem:[%s402 + $0xea8] sm:$0xff]
        %v3590 = vld [vmem:[%s402 + $0xeb0] sm:$0xff]
        %v3591 = vld [vmem:[%s402 + $0xeb8] sm:$0xff]
        %v3592 = vld [vmem:[%s402 + $0xec0] sm:$0xff]
        %v3593 = vld [vmem:[%s402 + $0xec8] sm:$0xff]
        %v3594 = vld [vmem:[%s402 + $0xed0] sm:$0xff]
        %v3595 = vld [vmem:[%s402 + $0xed8] sm:$0xff]
        %v3596 = vld [vmem:[%s402 + $0xee0] sm:$0xff]
        %v3597 = vld [vmem:[%s402 + $0xee8] sm:$0xff]
        %v3598 = vld [vmem:[%s402 + $0xef0] sm:$0xff]
        %v3599 = vld [vmem:[%s402 + $0xef8] sm:$0xff]
        %v3600 = vld [vmem:[%s402 + $0xf00] sm:$0xff]
        %v3601 = vld [vmem:[%s402 + $0xf08] sm:$0xff]
        %v3602 = vld [vmem:[%s402 + $0xf10] sm:$0xff]
        %v3603 = vld [vmem:[%s402 + $0xf18] sm:$0xff]
        %v3604 = vld [vmem:[%s402 + $0xf20] sm:$0xff]
        %v3605 = vld [vmem:[%s402 + $0xf28] sm:$0xff]
        %v3606 = vld [vmem:[%s402 + $0xf30] sm:$0xff]
        %v3607 = vld [vmem:[%s402 + $0xf38] sm:$0xff]
        %v3608 = vld [vmem:[%s402 + $0xf40] sm:$0xff]
        %v3609 = vld [vmem:[%s402 + $0xf48] sm:$0xff]
        %v3610 = vld [vmem:[%s402 + $0xf50] sm:$0xff]
        %v3611 = vld [vmem:[%s402 + $0xf58] sm:$0xff]
        %v3612 = vld [vmem:[%s402 + $0xf60] sm:$0xff]
        %v3613 = vld [vmem:[%s402 + $0xf68] sm:$0xff]
        %v3614 = vld [vmem:[%s402 + $0xf70] sm:$0xff]
        %v3615 = vld [vmem:[%s402 + $0xf78] sm:$0xff]
        %v3616 = vld [vmem:[%s402 + $0xf80] sm:$0xff]
        %v3617 = vld [vmem:[%s402 + $0xf88] sm:$0xff]
        %v3618 = vld [vmem:[%s402 + $0xf90] sm:$0xff]
        %v3619 = vld [vmem:[%s402 + $0xf98] sm:$0xff]
        %v3620 = vld [vmem:[%s402 + $0xfa0] sm:$0xff]
        %v3621 = vld [vmem:[%s402 + $0xfa8] sm:$0xff]
        %v3622 = vld [vmem:[%s402 + $0xfb0] sm:$0xff]
        %v3623 = vld [vmem:[%s402 + $0xfb8] sm:$0xff]
        %v3624 = vld [vmem:[%s402 + $0xfc0] sm:$0xff]
        %v3625 = vld [vmem:[%s402 + $0xfc8] sm:$0xff]
        %v3626 = vld [vmem:[%s402 + $0xfd0] sm:$0xff]
        %v3627 = vld [vmem:[%s402 + $0xfd8] sm:$0xff]
        %v3628 = vld [vmem:[%s402 + $0xfe0] sm:$0xff]
        %v3629 = vld [vmem:[%s402 + $0xfe8] sm:$0xff]
        %v3630 = vld [vmem:[%s402 + $0xff0] sm:$0xff]
        %v3631 = vld [vmem:[%s402 + $0xff8] sm:$0xff]
        %3632 = vmatpush.msra.mxu0 %v3180
        %3633 = vmatpush.msra.mxu0 %v3176
        %3634 = vmatpush.msra.mxu0 %v3172
        %3635 = vmatpush.msra.mxu0 %v3168
        %3636 = vmatpush.msra.mxu0 %v3164
        %3637 = vmatpush.msra.mxu0 %v3160
        %3638 = vmatpush.msra.mxu0 %v3156
        %3639 = vmatpush.msra.mxu0 %v3152
        %3640 = vmatpush.msra.mxu0 %v3148
        %3641 = vmatpush.msra.mxu0 %v3144
        %3642 = vmatpush.msra.mxu0 %v3140
        %3643 = vmatpush.msra.mxu0 %v3136
        %3644 = vmatpush.msra.mxu0 %v3132
        %3645 = vmatpush.msra.mxu0 %v3128
        %3646 = vmatpush.msra.mxu0 %v3124
        %3647 = vmatpush.msra.mxu0 %v3120
        %3648 = vmatmul.f32.gmra.mxu0 %v3111
        %v3649 = vpop.f32.mrf.mxu0
        %v3650 = vadd.f32 0.0, %v3649
        %3651 = vdwg.mxu0
        %3652 = vmatpush.msra.mxu0 %v3244
        %3653 = vmatpush.msra.mxu0 %v3240
        %3654 = vmatpush.msra.mxu0 %v3236
        %3655 = vmatpush.msra.mxu0 %v3232
        %3656 = vmatpush.msra.mxu0 %v3228
        %3657 = vmatpush.msra.mxu0 %v3224
        %3658 = vmatpush.msra.mxu0 %v3220
        %3659 = vmatpush.msra.mxu0 %v3216
        %3660 = vmatpush.msra.mxu0 %v3212
        %3661 = vmatpush.msra.mxu0 %v3208
        %3662 = vmatpush.msra.mxu0 %v3204
        %3663 = vmatpush.msra.mxu0 %v3200
        %3664 = vmatpush.msra.mxu0 %v3196
        %3665 = vmatpush.msra.mxu0 %v3192
        %3666 = vmatpush.msra.mxu0 %v3188
        %3667 = vmatpush.msra.mxu0 %v3184
        %3668 = vmatmul.f32.gmra.mxu0 %v3112
        %v3669 = vpop.f32.mrf.mxu0
        %v3670 = vadd.f32 %v3650, %v3669
        %3671 = vdwg.mxu0
        %3672 = vmatpush.msra.mxu0 %v3308
        %3673 = vmatpush.msra.mxu0 %v3304
        %3674 = vmatpush.msra.mxu0 %v3300
        %3675 = vmatpush.msra.mxu0 %v3296
        %3676 = vmatpush.msra.mxu0 %v3292
        %3677 = vmatpush.msra.mxu0 %v3288
        %3678 = vmatpush.msra.mxu0 %v3284
        %3679 = vmatpush.msra.mxu0 %v3280
        %3680 = vmatpush.msra.mxu0 %v3276
        %3681 = vmatpush.msra.mxu0 %v3272
        %3682 = vmatpush.msra.mxu0 %v3268
        %3683 = vmatpush.msra.mxu0 %v3264
        %3684 = vmatpush.msra.mxu0 %v3260
        %3685 = vmatpush.msra.mxu0 %v3256
        %3686 = vmatpush.msra.mxu0 %v3252
        %3687 = vmatpush.msra.mxu0 %v3248
        %3688 = vmatmul.f32.gmra.mxu0 %v3113
        %v3689 = vpop.f32.mrf.mxu0
        %v3690 = vadd.f32 %v3670, %v3689
        %3691 = vdwg.mxu0
        %3692 = vmatpush.msra.mxu0 %v3372
        %3693 = vmatpush.msra.mxu0 %v3368
        %3694 = vmatpush.msra.mxu0 %v3364
        %3695 = vmatpush.msra.mxu0 %v3360
        %3696 = vmatpush.msra.mxu0 %v3356
        %3697 = vmatpush.msra.mxu0 %v3352
        %3698 = vmatpush.msra.mxu0 %v3348
        %3699 = vmatpush.msra.mxu0 %v3344
        %3700 = vmatpush.msra.mxu0 %v3340
        %3701 = vmatpush.msra.mxu0 %v3336
        %3702 = vmatpush.msra.mxu0 %v3332
        %3703 = vmatpush.msra.mxu0 %v3328
        %3704 = vmatpush.msra.mxu0 %v3324
        %3705 = vmatpush.msra.mxu0 %v3320
        %3706 = vmatpush.msra.mxu0 %v3316
        %3707 = vmatpush.msra.mxu0 %v3312
        %3708 = vmatmul.f32.gmra.mxu0 %v3114
        %v3709 = vpop.f32.mrf.mxu0
        %v3710 = vadd.f32 %v3690, %v3709
        %3711 = vdwg.mxu0
        %3712 = vmatpush.msra.mxu0 %v3436
        %3713 = vmatpush.msra.mxu0 %v3432
        %3714 = vmatpush.msra.mxu0 %v3428
        %3715 = vmatpush.msra.mxu0 %v3424
        %3716 = vmatpush.msra.mxu0 %v3420
        %3717 = vmatpush.msra.mxu0 %v3416
        %3718 = vmatpush.msra.mxu0 %v3412
        %3719 = vmatpush.msra.mxu0 %v3408
        %3720 = vmatpush.msra.mxu0 %v3404
        %3721 = vmatpush.msra.mxu0 %v3400
        %3722 = vmatpush.msra.mxu0 %v3396
        %3723 = vmatpush.msra.mxu0 %v3392
        %3724 = vmatpush.msra.mxu0 %v3388
        %3725 = vmatpush.msra.mxu0 %v3384
        %3726 = vmatpush.msra.mxu0 %v3380
        %3727 = vmatpush.msra.mxu0 %v3376
        %3728 = vmatmul.f32.gmra.mxu0 %v3115
        %v3729 = vpop.f32.mrf.mxu0
        %v3730 = vadd.f32 %v3710, %v3729
        %3731 = vdwg.mxu0
        %3732 = vmatpush.msra.mxu0 %v3500
        %3733 = vmatpush.msra.mxu0 %v3496
        %3734 = vmatpush.msra.mxu0 %v3492
        %3735 = vmatpush.msra.mxu0 %v3488
        %3736 = vmatpush.msra.mxu0 %v3484
        %3737 = vmatpush.msra.mxu0 %v3480
        %3738 = vmatpush.msra.mxu0 %v3476
        %3739 = vmatpush.msra.mxu0 %v3472
        %3740 = vmatpush.msra.mxu0 %v3468
        %3741 = vmatpush.msra.mxu0 %v3464
        %3742 = vmatpush.msra.mxu0 %v3460
        %3743 = vmatpush.msra.mxu0 %v3456
        %3744 = vmatpush.msra.mxu0 %v3452
        %3745 = vmatpush.msra.mxu0 %v3448
        %3746 = vmatpush.msra.mxu0 %v3444
        %3747 = vmatpush.msra.mxu0 %v3440
        %3748 = vmatmul.f32.gmra.mxu0 %v3116
        %v3749 = vpop.f32.mrf.mxu0
        %v3750 = vadd.f32 %v3730, %v3749
        %3751 = vdwg.mxu0
        %3752 = vmatpush.msra.mxu0 %v3564
        %3753 = vmatpush.msra.mxu0 %v3560
        %3754 = vmatpush.msra.mxu0 %v3556
        %3755 = vmatpush.msra.mxu0 %v3552
        %3756 = vmatpush.msra.mxu0 %v3548
        %3757 = vmatpush.msra.mxu0 %v3544
        %3758 = vmatpush.msra.mxu0 %v3540
        %3759 = vmatpush.msra.mxu0 %v3536
        %3760 = vmatpush.msra.mxu0 %v3532
        %3761 = vmatpush.msra.mxu0 %v3528
        %3762 = vmatpush.msra.mxu0 %v3524
        %3763 = vmatpush.msra.mxu0 %v3520
        %3764 = vmatpush.msra.mxu0 %v3516
        %3765 = vmatpush.msra.mxu0 %v3512
        %3766 = vmatpush.msra.mxu0 %v3508
        %3767 = vmatpush.msra.mxu0 %v3504
        %3768 = vmatmul.f32.gmra.mxu0 %v3117
        %v3769 = vpop.f32.mrf.mxu0
        %v3770 = vadd.f32 %v3750, %v3769
        %3771 = vdwg.mxu0
        %3772 = vmatpush.msra.mxu0 %v3628
        %3773 = vmatpush.msra.mxu0 %v3624
        %3774 = vmatpush.msra.mxu0 %v3620
        %3775 = vmatpush.msra.mxu0 %v3616
        %3776 = vmatpush.msra.mxu0 %v3612
        %3777 = vmatpush.msra.mxu0 %v3608
        %3778 = vmatpush.msra.mxu0 %v3604
        %3779 = vmatpush.msra.mxu0 %v3600
        %3780 = vmatpush.msra.mxu0 %v3596
        %3781 = vmatpush.msra.mxu0 %v3592
        %3782 = vmatpush.msra.mxu0 %v3588
        %3783 = vmatpush.msra.mxu0 %v3584
        %3784 = vmatpush.msra.mxu0 %v3580
        %3785 = vmatpush.msra.mxu0 %v3576
        %3786 = vmatpush.msra.mxu0 %v3572
        %3787 = vmatpush.msra.mxu0 %v3568
        %3788 = vmatmul.f32.gmra.mxu0 %v3118
        %v3789 = vpop.f32.mrf.mxu0
        %v3790 = vadd.f32 %v3770, %v3789
        %3791 = vdwg.mxu0
        %3792 = vmatpush.msra.mxu0 %v3181
        %3793 = vmatpush.msra.mxu0 %v3177
        %3794 = vmatpush.msra.mxu0 %v3173
        %3795 = vmatpush.msra.mxu0 %v3169
        %3796 = vmatpush.msra.mxu0 %v3165
        %3797 = vmatpush.msra.mxu0 %v3161
        %3798 = vmatpush.msra.mxu0 %v3157
        %3799 = vmatpush.msra.mxu0 %v3153
        %3800 = vmatpush.msra.mxu0 %v3149
        %3801 = vmatpush.msra.mxu0 %v3145
        %3802 = vmatpush.msra.mxu0 %v3141
        %3803 = vmatpush.msra.mxu0 %v3137
        %3804 = vmatpush.msra.mxu0 %v3133
        %3805 = vmatpush.msra.mxu0 %v3129
        %3806 = vmatpush.msra.mxu0 %v3125
        %3807 = vmatpush.msra.mxu0 %v3121
        %3808 = vmatmul.f32.gmra.mxu0 %v3111
        %v3809 = vpop.f32.mrf.mxu0
        %v3810 = vadd.f32 0.0, %v3809
        %3811 = vdwg.mxu0
        %3812 = vmatpush.msra.mxu0 %v3245
        %3813 = vmatpush.msra.mxu0 %v3241
        %3814 = vmatpush.msra.mxu0 %v3237
        %3815 = vmatpush.msra.mxu0 %v3233
        %3816 = vmatpush.msra.mxu0 %v3229
        %3817 = vmatpush.msra.mxu0 %v3225
        %3818 = vmatpush.msra.mxu0 %v3221
        %3819 = vmatpush.msra.mxu0 %v3217
        %3820 = vmatpush.msra.mxu0 %v3213
        %3821 = vmatpush.msra.mxu0 %v3209
        %3822 = vmatpush.msra.mxu0 %v3205
        %3823 = vmatpush.msra.mxu0 %v3201
        %3824 = vmatpush.msra.mxu0 %v3197
        %3825 = vmatpush.msra.mxu0 %v3193
        %3826 = vmatpush.msra.mxu0 %v3189
        %3827 = vmatpush.msra.mxu0 %v3185
        %3828 = vmatmul.f32.gmra.mxu0 %v3112
        %v3829 = vpop.f32.mrf.mxu0
        %v3830 = vadd.f32 %v3810, %v3829
        %3831 = vdwg.mxu0
        %3832 = vmatpush.msra.mxu0 %v3309
        %3833 = vmatpush.msra.mxu0 %v3305
        %3834 = vmatpush.msra.mxu0 %v3301
        %3835 = vmatpush.msra.mxu0 %v3297
        %3836 = vmatpush.msra.mxu0 %v3293
        %3837 = vmatpush.msra.mxu0 %v3289
        %3838 = vmatpush.msra.mxu0 %v3285
        %3839 = vmatpush.msra.mxu0 %v3281
        %3840 = vmatpush.msra.mxu0 %v3277
        %3841 = vmatpush.msra.mxu0 %v3273
        %3842 = vmatpush.msra.mxu0 %v3269
        %3843 = vmatpush.msra.mxu0 %v3265
        %3844 = vmatpush.msra.mxu0 %v3261
        %3845 = vmatpush.msra.mxu0 %v3257
        %3846 = vmatpush.msra.mxu0 %v3253
        %3847 = vmatpush.msra.mxu0 %v3249
        %3848 = vmatmul.f32.gmra.mxu0 %v3113
        %v3849 = vpop.f32.mrf.mxu0
        %v3850 = vadd.f32 %v3830, %v3849
        %3851 = vdwg.mxu0
        %3852 = vmatpush.msra.mxu0 %v3373
        %3853 = vmatpush.msra.mxu0 %v3369
        %3854 = vmatpush.msra.mxu0 %v3365
        %3855 = vmatpush.msra.mxu0 %v3361
        %3856 = vmatpush.msra.mxu0 %v3357
        %3857 = vmatpush.msra.mxu0 %v3353
        %3858 = vmatpush.msra.mxu0 %v3349
        %3859 = vmatpush.msra.mxu0 %v3345
        %3860 = vmatpush.msra.mxu0 %v3341
        %3861 = vmatpush.msra.mxu0 %v3337
        %3862 = vmatpush.msra.mxu0 %v3333
        %3863 = vmatpush.msra.mxu0 %v3329
        %3864 = vmatpush.msra.mxu0 %v3325
        %3865 = vmatpush.msra.mxu0 %v3321
        %3866 = vmatpush.msra.mxu0 %v3317
        %3867 = vmatpush.msra.mxu0 %v3313
        %3868 = vmatmul.f32.gmra.mxu0 %v3114
        %v3869 = vpop.f32.mrf.mxu0
        %v3870 = vadd.f32 %v3850, %v3869
        %3871 = vdwg.mxu0
        %3872 = vmatpush.msra.mxu0 %v3437
        %3873 = vmatpush.msra.mxu0 %v3433
        %3874 = vmatpush.msra.mxu0 %v3429
        %3875 = vmatpush.msra.mxu0 %v3425
        %3876 = vmatpush.msra.mxu0 %v3421
        %3877 = vmatpush.msra.mxu0 %v3417
        %3878 = vmatpush.msra.mxu0 %v3413
        %3879 = vmatpush.msra.mxu0 %v3409
        %3880 = vmatpush.msra.mxu0 %v3405
        %3881 = vmatpush.msra.mxu0 %v3401
        %3882 = vmatpush.msra.mxu0 %v3397
        %3883 = vmatpush.msra.mxu0 %v3393
        %3884 = vmatpush.msra.mxu0 %v3389
        %3885 = vmatpush.msra.mxu0 %v3385
        %3886 = vmatpush.msra.mxu0 %v3381
        %3887 = vmatpush.msra.mxu0 %v3377
        %3888 = vmatmul.f32.gmra.mxu0 %v3115
        %v3889 = vpop.f32.mrf.mxu0
        %v3890 = vadd.f32 %v3870, %v3889
        %3891 = vdwg.mxu0
        %3892 = vmatpush.msra.mxu0 %v3501
        %3893 = vmatpush.msra.mxu0 %v3497
        %3894 = vmatpush.msra.mxu0 %v3493
        %3895 = vmatpush.msra.mxu0 %v3489
        %3896 = vmatpush.msra.mxu0 %v3485
        %3897 = vmatpush.msra.mxu0 %v3481
        %3898 = vmatpush.msra.mxu0 %v3477
        %3899 = vmatpush.msra.mxu0 %v3473
        %3900 = vmatpush.msra.mxu0 %v3469
        %3901 = vmatpush.msra.mxu0 %v3465
        %3902 = vmatpush.msra.mxu0 %v3461
        %3903 = vmatpush.msra.mxu0 %v3457
        %3904 = vmatpush.msra.mxu0 %v3453
        %3905 = vmatpush.msra.mxu0 %v3449
        %3906 = vmatpush.msra.mxu0 %v3445
        %3907 = vmatpush.msra.mxu0 %v3441
        %3908 = vmatmul.f32.gmra.mxu0 %v3116
        %v3909 = vpop.f32.mrf.mxu0
        %v3910 = vadd.f32 %v3890, %v3909
        %3911 = vdwg.mxu0
        %3912 = vmatpush.msra.mxu0 %v3565
        %3913 = vmatpush.msra.mxu0 %v3561
        %3914 = vmatpush.msra.mxu0 %v3557
        %3915 = vmatpush.msra.mxu0 %v3553
        %3916 = vmatpush.msra.mxu0 %v3549
        %3917 = vmatpush.msra.mxu0 %v3545
        %3918 = vmatpush.msra.mxu0 %v3541
        %3919 = vmatpush.msra.mxu0 %v3537
        %3920 = vmatpush.msra.mxu0 %v3533
        %3921 = vmatpush.msra.mxu0 %v3529
        %3922 = vmatpush.msra.mxu0 %v3525
        %3923 = vmatpush.msra.mxu0 %v3521
        %3924 = vmatpush.msra.mxu0 %v3517
        %3925 = vmatpush.msra.mxu0 %v3513
        %3926 = vmatpush.msra.mxu0 %v3509
        %3927 = vmatpush.msra.mxu0 %v3505
        %3928 = vmatmul.f32.gmra.mxu0 %v3117
        %v3929 = vpop.f32.mrf.mxu0
        %v3930 = vadd.f32 %v3910, %v3929
        %3931 = vdwg.mxu0
        %3932 = vmatpush.msra.mxu0 %v3629
        %3933 = vmatpush.msra.mxu0 %v3625
        %3934 = vmatpush.msra.mxu0 %v3621
        %3935 = vmatpush.msra.mxu0 %v3617
        %3936 = vmatpush.msra.mxu0 %v3613
        %3937 = vmatpush.msra.mxu0 %v3609
        %3938 = vmatpush.msra.mxu0 %v3605
        %3939 = vmatpush.msra.mxu0 %v3601
        %3940 = vmatpush.msra.mxu0 %v3597
        %3941 = vmatpush.msra.mxu0 %v3593
        %3942 = vmatpush.msra.mxu0 %v3589
        %3943 = vmatpush.msra.mxu0 %v3585
        %3944 = vmatpush.msra.mxu0 %v3581
        %3945 = vmatpush.msra.mxu0 %v3577
        %3946 = vmatpush.msra.mxu0 %v3573
        %3947 = vmatpush.msra.mxu0 %v3569
        %3948 = vmatmul.f32.gmra.mxu0 %v3118
        %v3949 = vpop.f32.mrf.mxu0
        %v3950 = vadd.f32 %v3930, %v3949
        %3951 = vdwg.mxu0
        %3952 = vmatpush.msra.mxu0 %v3182
        %3953 = vmatpush.msra.mxu0 %v3178
        %3954 = vmatpush.msra.mxu0 %v3174
        %3955 = vmatpush.msra.mxu0 %v3170
        %3956 = vmatpush.msra.mxu0 %v3166
        %3957 = vmatpush.msra.mxu0 %v3162
        %3958 = vmatpush.msra.mxu0 %v3158
        %3959 = vmatpush.msra.mxu0 %v3154
        %3960 = vmatpush.msra.mxu0 %v3150
        %3961 = vmatpush.msra.mxu0 %v3146
        %3962 = vmatpush.msra.mxu0 %v3142
        %3963 = vmatpush.msra.mxu0 %v3138
        %3964 = vmatpush.msra.mxu0 %v3134
        %3965 = vmatpush.msra.mxu0 %v3130
        %3966 = vmatpush.msra.mxu0 %v3126
        %3967 = vmatpush.msra.mxu0 %v3122
        %3968 = vmatmul.f32.gmra.mxu0 %v3111
        %v3969 = vpop.f32.mrf.mxu0
        %v3970 = vadd.f32 0.0, %v3969
        %3971 = vdwg.mxu0
        %3972 = vmatpush.msra.mxu0 %v3246
        %3973 = vmatpush.msra.mxu0 %v3242
        %3974 = vmatpush.msra.mxu0 %v3238
        %3975 = vmatpush.msra.mxu0 %v3234
        %3976 = vmatpush.msra.mxu0 %v3230
        %3977 = vmatpush.msra.mxu0 %v3226
        %3978 = vmatpush.msra.mxu0 %v3222
        %3979 = vmatpush.msra.mxu0 %v3218
        %3980 = vmatpush.msra.mxu0 %v3214
        %3981 = vmatpush.msra.mxu0 %v3210
        %3982 = vmatpush.msra.mxu0 %v3206
        %3983 = vmatpush.msra.mxu0 %v3202
        %3984 = vmatpush.msra.mxu0 %v3198
        %3985 = vmatpush.msra.mxu0 %v3194
        %3986 = vmatpush.msra.mxu0 %v3190
        %3987 = vmatpush.msra.mxu0 %v3186
        %3988 = vmatmul.f32.gmra.mxu0 %v3112
        %v3989 = vpop.f32.mrf.mxu0
        %v3990 = vadd.f32 %v3970, %v3989
        %3991 = vdwg.mxu0
        %3992 = vmatpush.msra.mxu0 %v3310
        %3993 = vmatpush.msra.mxu0 %v3306
        %3994 = vmatpush.msra.mxu0 %v3302
        %3995 = vmatpush.msra.mxu0 %v3298
        %3996 = vmatpush.msra.mxu0 %v3294
        %3997 = vmatpush.msra.mxu0 %v3290
        %3998 = vmatpush.msra.mxu0 %v3286
        %3999 = vmatpush.msra.mxu0 %v3282
        %4000 = vmatpush.msra.mxu0 %v3278
        %4001 = vmatpush.msra.mxu0 %v3274
        %4002 = vmatpush.msra.mxu0 %v3270
        %4003 = vmatpush.msra.mxu0 %v3266
        %4004 = vmatpush.msra.mxu0 %v3262
        %4005 = vmatpush.msra.mxu0 %v3258
        %4006 = vmatpush.msra.mxu0 %v3254
        %4007 = vmatpush.msra.mxu0 %v3250
        %4008 = vmatmul.f32.gmra.mxu0 %v3113
        %v4009 = vpop.f32.mrf.mxu0
        %v4010 = vadd.f32 %v3990, %v4009
        %4011 = vdwg.mxu0
        %4012 = vmatpush.msra.mxu0 %v3374
        %4013 = vmatpush.msra.mxu0 %v3370
        %4014 = vmatpush.msra.mxu0 %v3366
        %4015 = vmatpush.msra.mxu0 %v3362
        %4016 = vmatpush.msra.mxu0 %v3358
        %4017 = vmatpush.msra.mxu0 %v3354
        %4018 = vmatpush.msra.mxu0 %v3350
        %4019 = vmatpush.msra.mxu0 %v3346
        %4020 = vmatpush.msra.mxu0 %v3342
        %4021 = vmatpush.msra.mxu0 %v3338
        %4022 = vmatpush.msra.mxu0 %v3334
        %4023 = vmatpush.msra.mxu0 %v3330
        %4024 = vmatpush.msra.mxu0 %v3326
        %4025 = vmatpush.msra.mxu0 %v3322
        %4026 = vmatpush.msra.mxu0 %v3318
        %4027 = vmatpush.msra.mxu0 %v3314
        %4028 = vmatmul.f32.gmra.mxu0 %v3114
        %v4029 = vpop.f32.mrf.mxu0
        %v4030 = vadd.f32 %v4010, %v4029
        %4031 = vdwg.mxu0
        %4032 = vmatpush.msra.mxu0 %v3438
        %4033 = vmatpush.msra.mxu0 %v3434
        %4034 = vmatpush.msra.mxu0 %v3430
        %4035 = vmatpush.msra.mxu0 %v3426
        %4036 = vmatpush.msra.mxu0 %v3422
        %4037 = vmatpush.msra.mxu0 %v3418
        %4038 = vmatpush.msra.mxu0 %v3414
        %4039 = vmatpush.msra.mxu0 %v3410
        %4040 = vmatpush.msra.mxu0 %v3406
        %4041 = vmatpush.msra.mxu0 %v3402
        %4042 = vmatpush.msra.mxu0 %v3398
        %4043 = vmatpush.msra.mxu0 %v3394
        %4044 = vmatpush.msra.mxu0 %v3390
        %4045 = vmatpush.msra.mxu0 %v3386
        %4046 = vmatpush.msra.mxu0 %v3382
        %4047 = vmatpush.msra.mxu0 %v3378
        %4048 = vmatmul.f32.gmra.mxu0 %v3115
        %v4049 = vpop.f32.mrf.mxu0
        %v4050 = vadd.f32 %v4030, %v4049
        %4051 = vdwg.mxu0
        %4052 = vmatpush.msra.mxu0 %v3502
        %4053 = vmatpush.msra.mxu0 %v3498
        %4054 = vmatpush.msra.mxu0 %v3494
        %4055 = vmatpush.msra.mxu0 %v3490
        %4056 = vmatpush.msra.mxu0 %v3486
        %4057 = vmatpush.msra.mxu0 %v3482
        %4058 = vmatpush.msra.mxu0 %v3478
        %4059 = vmatpush.msra.mxu0 %v3474
        %4060 = vmatpush.msra.mxu0 %v3470
        %4061 = vmatpush.msra.mxu0 %v3466
        %4062 = vmatpush.msra.mxu0 %v3462
        %4063 = vmatpush.msra.mxu0 %v3458
        %4064 = vmatpush.msra.mxu0 %v3454
        %4065 = vmatpush.msra.mxu0 %v3450
        %4066 = vmatpush.msra.mxu0 %v3446
        %4067 = vmatpush.msra.mxu0 %v3442
        %4068 = vmatmul.f32.gmra.mxu0 %v3116
        %v4069 = vpop.f32.mrf.mxu0
        %v4070 = vadd.f32 %v4050, %v4069
        %4071 = vdwg.mxu0
        %4072 = vmatpush.msra.mxu0 %v3566
        %4073 = vmatpush.msra.mxu0 %v3562
        %4074 = vmatpush.msra.mxu0 %v3558
        %4075 = vmatpush.msra.mxu0 %v3554
        %4076 = vmatpush.msra.mxu0 %v3550
        %4077 = vmatpush.msra.mxu0 %v3546
        %4078 = vmatpush.msra.mxu0 %v3542
        %4079 = vmatpush.msra.mxu0 %v3538
        %4080 = vmatpush.msra.mxu0 %v3534
        %4081 = vmatpush.msra.mxu0 %v3530
        %4082 = vmatpush.msra.mxu0 %v3526
        %4083 = vmatpush.msra.mxu0 %v3522
        %4084 = vmatpush.msra.mxu0 %v3518
        %4085 = vmatpush.msra.mxu0 %v3514
        %4086 = vmatpush.msra.mxu0 %v3510
        %4087 = vmatpush.msra.mxu0 %v3506
        %4088 = vmatmul.f32.gmra.mxu0 %v3117
        %v4089 = vpop.f32.mrf.mxu0
        %v4090 = vadd.f32 %v4070, %v4089
        %4091 = vdwg.mxu0
        %4092 = vmatpush.msra.mxu0 %v3630
        %4093 = vmatpush.msra.mxu0 %v3626
        %4094 = vmatpush.msra.mxu0 %v3622
        %4095 = vmatpush.msra.mxu0 %v3618
        %4096 = vmatpush.msra.mxu0 %v3614
        %4097 = vmatpush.msra.mxu0 %v3610
        %4098 = vmatpush.msra.mxu0 %v3606
        %4099 = vmatpush.msra.mxu0 %v3602
        %4100 = vmatpush.msra.mxu0 %v3598
        %4101 = vmatpush.msra.mxu0 %v3594
        %4102 = vmatpush.msra.mxu0 %v3590
        %4103 = vmatpush.msra.mxu0 %v3586
        %4104 = vmatpush.msra.mxu0 %v3582
        %4105 = vmatpush.msra.mxu0 %v3578
        %4106 = vmatpush.msra.mxu0 %v3574
        %4107 = vmatpush.msra.mxu0 %v3570
        %4108 = vmatmul.f32.gmra.mxu0 %v3118
        %v4109 = vpop.f32.mrf.mxu0
        %v4110 = vadd.f32 %v4090, %v4109
        %4111 = vdwg.mxu0
        %4112 = vmatpush.msra.mxu0 %v3183
        %4113 = vmatpush.msra.mxu0 %v3179
        %4114 = vmatpush.msra.mxu0 %v3175
        %4115 = vmatpush.msra.mxu0 %v3171
        %4116 = vmatpush.msra.mxu0 %v3167
        %4117 = vmatpush.msra.mxu0 %v3163
        %4118 = vmatpush.msra.mxu0 %v3159
        %4119 = vmatpush.msra.mxu0 %v3155
        %4120 = vmatpush.msra.mxu0 %v3151
        %4121 = vmatpush.msra.mxu0 %v3147
        %4122 = vmatpush.msra.mxu0 %v3143
        %4123 = vmatpush.msra.mxu0 %v3139
        %4124 = vmatpush.msra.mxu0 %v3135
        %4125 = vmatpush.msra.mxu0 %v3131
        %4126 = vmatpush.msra.mxu0 %v3127
        %4127 = vmatpush.msra.mxu0 %v3123
        %4128 = vmatmul.f32.gmra.mxu0 %v3111
        %v4129 = vpop.f32.mrf.mxu0
        %v4130 = vadd.f32 0.0, %v4129
        %4131 = vdwg.mxu0
        %4132 = vmatpush.msra.mxu0 %v3247
        %4133 = vmatpush.msra.mxu0 %v3243
        %4134 = vmatpush.msra.mxu0 %v3239
        %4135 = vmatpush.msra.mxu0 %v3235
        %4136 = vmatpush.msra.mxu0 %v3231
        %4137 = vmatpush.msra.mxu0 %v3227
        %4138 = vmatpush.msra.mxu0 %v3223
        %4139 = vmatpush.msra.mxu0 %v3219
        %4140 = vmatpush.msra.mxu0 %v3215
        %4141 = vmatpush.msra.mxu0 %v3211
        %4142 = vmatpush.msra.mxu0 %v3207
        %4143 = vmatpush.msra.mxu0 %v3203
        %4144 = vmatpush.msra.mxu0 %v3199
        %4145 = vmatpush.msra.mxu0 %v3195
        %4146 = vmatpush.msra.mxu0 %v3191
        %4147 = vmatpush.msra.mxu0 %v3187
        %4148 = vmatmul.f32.gmra.mxu0 %v3112
        %v4149 = vpop.f32.mrf.mxu0
        %v4150 = vadd.f32 %v4130, %v4149
        %4151 = vdwg.mxu0
        %4152 = vmatpush.msra.mxu0 %v3311
        %4153 = vmatpush.msra.mxu0 %v3307
        %4154 = vmatpush.msra.mxu0 %v3303
        %4155 = vmatpush.msra.mxu0 %v3299
        %4156 = vmatpush.msra.mxu0 %v3295
        %4157 = vmatpush.msra.mxu0 %v3291
        %4158 = vmatpush.msra.mxu0 %v3287
        %4159 = vmatpush.msra.mxu0 %v3283
        %4160 = vmatpush.msra.mxu0 %v3279
        %4161 = vmatpush.msra.mxu0 %v3275
        %4162 = vmatpush.msra.mxu0 %v3271
        %4163 = vmatpush.msra.mxu0 %v3267
        %4164 = vmatpush.msra.mxu0 %v3263
        %4165 = vmatpush.msra.mxu0 %v3259
        %4166 = vmatpush.msra.mxu0 %v3255
        %4167 = vmatpush.msra.mxu0 %v3251
        %4168 = vmatmul.f32.gmra.mxu0 %v3113
        %v4169 = vpop.f32.mrf.mxu0
        %v4170 = vadd.f32 %v4150, %v4169
        %4171 = vdwg.mxu0
        %4172 = vmatpush.msra.mxu0 %v3375
        %4173 = vmatpush.msra.mxu0 %v3371
        %4174 = vmatpush.msra.mxu0 %v3367
        %4175 = vmatpush.msra.mxu0 %v3363
        %4176 = vmatpush.msra.mxu0 %v3359
        %4177 = vmatpush.msra.mxu0 %v3355
        %4178 = vmatpush.msra.mxu0 %v3351
        %4179 = vmatpush.msra.mxu0 %v3347
        %4180 = vmatpush.msra.mxu0 %v3343
        %4181 = vmatpush.msra.mxu0 %v3339
        %4182 = vmatpush.msra.mxu0 %v3335
        %4183 = vmatpush.msra.mxu0 %v3331
        %4184 = vmatpush.msra.mxu0 %v3327
        %4185 = vmatpush.msra.mxu0 %v3323
        %4186 = vmatpush.msra.mxu0 %v3319
        %4187 = vmatpush.msra.mxu0 %v3315
        %4188 = vmatmul.f32.gmra.mxu0 %v3114
        %v4189 = vpop.f32.mrf.mxu0
        %v4190 = vadd.f32 %v4170, %v4189
        %4191 = vdwg.mxu0
        %4192 = vmatpush.msra.mxu0 %v3439
        %4193 = vmatpush.msra.mxu0 %v3435
        %4194 = vmatpush.msra.mxu0 %v3431
        %4195 = vmatpush.msra.mxu0 %v3427
        %4196 = vmatpush.msra.mxu0 %v3423
        %4197 = vmatpush.msra.mxu0 %v3419
        %4198 = vmatpush.msra.mxu0 %v3415
        %4199 = vmatpush.msra.mxu0 %v3411
        %4200 = vmatpush.msra.mxu0 %v3407
        %4201 = vmatpush.msra.mxu0 %v3403
        %4202 = vmatpush.msra.mxu0 %v3399
        %4203 = vmatpush.msra.mxu0 %v3395
        %4204 = vmatpush.msra.mxu0 %v3391
        %4205 = vmatpush.msra.mxu0 %v3387
        %4206 = vmatpush.msra.mxu0 %v3383
        %4207 = vmatpush.msra.mxu0 %v3379
        %4208 = vmatmul.f32.gmra.mxu0 %v3115
        %v4209 = vpop.f32.mrf.mxu0
        %v4210 = vadd.f32 %v4190, %v4209
        %4211 = vdwg.mxu0
        %4212 = vmatpush.msra.mxu0 %v3503
        %4213 = vmatpush.msra.mxu0 %v3499
        %4214 = vmatpush.msra.mxu0 %v3495
        %4215 = vmatpush.msra.mxu0 %v3491
        %4216 = vmatpush.msra.mxu0 %v3487
        %4217 = vmatpush.msra.mxu0 %v3483
        %4218 = vmatpush.msra.mxu0 %v3479
        %4219 = vmatpush.msra.mxu0 %v3475
        %4220 = vmatpush.msra.mxu0 %v3471
        %4221 = vmatpush.msra.mxu0 %v3467
        %4222 = vmatpush.msra.mxu0 %v3463
        %4223 = vmatpush.msra.mxu0 %v3459
        %4224 = vmatpush.msra.mxu0 %v3455
        %4225 = vmatpush.msra.mxu0 %v3451
        %4226 = vmatpush.msra.mxu0 %v3447
        %4227 = vmatpush.msra.mxu0 %v3443
        %4228 = vmatmul.f32.gmra.mxu0 %v3116
        %v4229 = vpop.f32.mrf.mxu0
        %v4230 = vadd.f32 %v4210, %v4229
        %4231 = vdwg.mxu0
        %4232 = vmatpush.msra.mxu0 %v3567
        %4233 = vmatpush.msra.mxu0 %v3563
        %4234 = vmatpush.msra.mxu0 %v3559
        %4235 = vmatpush.msra.mxu0 %v3555
        %4236 = vmatpush.msra.mxu0 %v3551
        %4237 = vmatpush.msra.mxu0 %v3547
        %4238 = vmatpush.msra.mxu0 %v3543
        %4239 = vmatpush.msra.mxu0 %v3539
        %4240 = vmatpush.msra.mxu0 %v3535
        %4241 = vmatpush.msra.mxu0 %v3531
        %4242 = vmatpush.msra.mxu0 %v3527
        %4243 = vmatpush.msra.mxu0 %v3523
        %4244 = vmatpush.msra.mxu0 %v3519
        %4245 = vmatpush.msra.mxu0 %v3515
        %4246 = vmatpush.msra.mxu0 %v3511
        %4247 = vmatpush.msra.mxu0 %v3507
        %4248 = vmatmul.f32.gmra.mxu0 %v3117
        %v4249 = vpop.f32.mrf.mxu0
        %v4250 = vadd.f32 %v4230, %v4249
        %4251 = vdwg.mxu0
        %4252 = vmatpush.msra.mxu0 %v3631
        %4253 = vmatpush.msra.mxu0 %v3627
        %4254 = vmatpush.msra.mxu0 %v3623
        %4255 = vmatpush.msra.mxu0 %v3619
        %4256 = vmatpush.msra.mxu0 %v3615
        %4257 = vmatpush.msra.mxu0 %v3611
        %4258 = vmatpush.msra.mxu0 %v3607
        %4259 = vmatpush.msra.mxu0 %v3603
        %4260 = vmatpush.msra.mxu0 %v3599
        %4261 = vmatpush.msra.mxu0 %v3595
        %4262 = vmatpush.msra.mxu0 %v3591
        %4263 = vmatpush.msra.mxu0 %v3587
        %4264 = vmatpush.msra.mxu0 %v3583
        %4265 = vmatpush.msra.mxu0 %v3579
        %4266 = vmatpush.msra.mxu0 %v3575
        %4267 = vmatpush.msra.mxu0 %v3571
        %4268 = vmatmul.f32.gmra.mxu0 %v3118
        %v4269 = vpop.f32.mrf.mxu0
        %v4270 = vadd.f32 %v4250, %v4269
        %4271 = vdwg.mxu0
        %v4276 = vrot.slane %v3950, 6
        %v4277 = vrot.slane %v4110, 4
        %v4278 = vrot.slane %v4270, 2
        %v4279 = vsel %vm2797, %v3790, %v4276
        %vm4280 = vcmask 1045508
        %v4281 = vsel %vm4280, %v4277, %v4278
        %vm4282 = vcmask 1043456
        %v4283 = vsel %vm4282, %v4279, %v4281
        %v4285 = vadd.f32 %v3119, %v4283
        %4286 = vst [vmem:[#allocation2] sm:$0xff] %v4285
        %p4287 = scmp.eq.s32.totalorder %s27, 1
        // Predicated region
        $region89: #{network_forward.1} parent=55 // pred_check
          %p4288 = pneg %p4287
        $region90: #{network_forward.1} parent=55 // pred_check_branch
          %4290 = sbr.rel (%p4288) target = $region92
        $region91: #{network_forward.1} parent=55 // pred_region
          %v4291 = vld [vmem:[#allocation2] sm:$0xff]
          %v4292 = vld [vmem:[#allocation9] ss:$2 sm:$0xf]
          %s4293 = scalar_lea.vmem [#allocation9], 1
          %v4294 = vld [vmem:[%s4293] ss:$2 sm:$0xf]
          %4296 = vst [vmem:[#allocation1] ss:$4 sm:$0xff] %v4291
          %v4297 = vld.sshfl [vmem:[#allocation1] sm:$0xff pattern:$0x73625140]
          %v4298 = vld.sshfl [vmem:[#allocation1 + $0x8] sm:$0xff pattern:$0x73625140]
          %v4299 = vld.sshfl [vmem:[#allocation1 + $0x10] sm:$0xff pattern:$0x73625140]
          %v4300 = vld.sshfl [vmem:[#allocation1 + $0x18] sm:$0xff pattern:$0x73625140]
          %v4305 = vsel %vm2797, %v4297, 0.0
          %v4306 = vrot.slane %v4305, 4
          %v4307 = vadd.f32 %v4305, %v4306
          %v4308 = vrot.slane %v4307, 2
          %v4309 = vadd.f32 %v4307, %v4308
          %v4310 = vrot.slane %v4309, 1
          %v4311 = vadd.f32 %v4309, %v4310
          %v4312 = vsel %vm2797, %v4298, 0.0
          %v4313 = vrot.slane %v4312, 4
          %v4314 = vadd.f32 %v4312, %v4313
          %v4315 = vrot.slane %v4314, 2
          %v4316 = vadd.f32 %v4314, %v4315
          %v4317 = vrot.slane %v4316, 1
          %v4318 = vadd.f32 %v4316, %v4317
          %v4319 = vsel %vm2797, %v4299, 0.0
          %v4320 = vrot.slane %v4319, 4
          %v4321 = vadd.f32 %v4319, %v4320
          %v4322 = vrot.slane %v4321, 2
          %v4323 = vadd.f32 %v4321, %v4322
          %v4324 = vrot.slane %v4323, 1
          %v4325 = vadd.f32 %v4323, %v4324
          %v4326 = vsel %vm2797, %v4300, 0.0
          %v4327 = vrot.slane %v4326, 4
          %v4328 = vadd.f32 %v4326, %v4327
          %v4329 = vrot.slane %v4328, 2
          %v4330 = vadd.f32 %v4328, %v4329
          %v4331 = vrot.slane %v4330, 1
          %v4332 = vadd.f32 %v4330, %v4331
          %v4333 = vmul.f32 %v4311, %v2860
          %v4334 = vmul.f32 %v4318, %v2860
          %v4335 = vmul.f32 %v4325, %v2860
          %v4336 = vmul.f32 %v4332, %v2860
          %v4341 = vrot.slane %v4334, 6
          %v4342 = vrot.slane %v4335, 4
          %v4343 = vrot.slane %v4336, 2
          %v4344 = vsel %vm2797, %v4333, %v4341
          %v4345 = vsel %vm4280, %v4342, %v4343
          %v4346 = vsel %vm4282, %v4344, %v4345
          %v4348 = vsub.f32 %v4291, %v4346
          %v4349 = vmul.f32 %v4348, %v4348
          %4351 = vst [vmem:[#allocation1] ss:$4 sm:$0xff] %v4349
          %v4352 = vld.sshfl [vmem:[#allocation1] sm:$0xff pattern:$0x73625140]
          %v4353 = vld.sshfl [vmem:[#allocation1 + $0x8] sm:$0xff pattern:$0x73625140]
          %v4354 = vld.sshfl [vmem:[#allocation1 + $0x10] sm:$0xff pattern:$0x73625140]
          %v4355 = vld.sshfl [vmem:[#allocation1 + $0x18] sm:$0xff pattern:$0x73625140]
          %v4360 = vsel %vm2797, %v4352, 0.0
          %v4361 = vrot.slane %v4360, 4
          %v4362 = vadd.f32 %v4360, %v4361
          %v4363 = vrot.slane %v4362, 2
          %v4364 = vadd.f32 %v4362, %v4363
          %v4365 = vrot.slane %v4364, 1
          %v4366 = vadd.f32 %v4364, %v4365
          %v4367 = vsel %vm2797, %v4353, 0.0
          %v4368 = vrot.slane %v4367, 4
          %v4369 = vadd.f32 %v4367, %v4368
          %v4370 = vrot.slane %v4369, 2
          %v4371 = vadd.f32 %v4369, %v4370
          %v4372 = vrot.slane %v4371, 1
          %v4373 = vadd.f32 %v4371, %v4372
          %v4374 = vsel %vm2797, %v4354, 0.0
          %v4375 = vrot.slane %v4374, 4
          %v4376 = vadd.f32 %v4374, %v4375
          %v4377 = vrot.slane %v4376, 2
          %v4378 = vadd.f32 %v4376, %v4377
          %v4379 = vrot.slane %v4378, 1
          %v4380 = vadd.f32 %v4378, %v4379
          %v4381 = vsel %vm2797, %v4355, 0.0
          %v4382 = vrot.slane %v4381, 4
          %v4383 = vadd.f32 %v4381, %v4382
          %v4384 = vrot.slane %v4383, 2
          %v4385 = vadd.f32 %v4383, %v4384
          %v4386 = vrot.slane %v4385, 1
          %v4387 = vadd.f32 %v4385, %v4386
          %v4388 = vmul.f32 %v4366, %v2860
          %v4389 = vmul.f32 %v4373, %v2860
          %v4390 = vmul.f32 %v4380, %v2860
          %v4391 = vmul.f32 %v4387, %v2860
          %v4392 = vadd.f32 %v4388, 1e-05
          %v4393 = vadd.f32 %v4389, 1e-05
          %v4394 = vadd.f32 %v4390, 1e-05
          %v4395 = vadd.f32 %v4391, 1e-05
          %v4396 = vrsqrt.pop %v4392
          %v4397 = vmul.f32 %v4396, %v4392
          %v4398 = vmul.f32 %v4397, %v4396
          %v4399 = vmul.f32 0.5, %v4398
          %v4400 = vsub.f32 1.5, %v4399
          %v4401 = vmul.f32 %v4396, %v4400
          %vm4402 = vweird.f32 %v4392
          %vm4403 = vweird.f32 %v4396
          %vm4404 = vmor %vm4402, %vm4403
          %v4405 = vsel %vm4404, %v4396, %v4401
          %v4406 = vrsqrt.pop %v4393
          %v4407 = vmul.f32 %v4406, %v4393
          %v4408 = vmul.f32 %v4407, %v4406
          %v4409 = vmul.f32 0.5, %v4408
          %v4410 = vsub.f32 1.5, %v4409
          %v4411 = vmul.f32 %v4406, %v4410
          %vm4412 = vweird.f32 %v4393
          %vm4413 = vweird.f32 %v4406
          %vm4414 = vmor %vm4412, %vm4413
          %v4415 = vsel %vm4414, %v4406, %v4411
          %v4416 = vrsqrt.pop %v4394
          %v4417 = vmul.f32 %v4416, %v4394
          %v4418 = vmul.f32 %v4417, %v4416
          %v4419 = vmul.f32 0.5, %v4418
          %v4420 = vsub.f32 1.5, %v4419
          %v4421 = vmul.f32 %v4416, %v4420
          %vm4422 = vweird.f32 %v4394
          %vm4423 = vweird.f32 %v4416
          %vm4424 = vmor %vm4422, %vm4423
          %v4425 = vsel %vm4424, %v4416, %v4421
          %v4426 = vrsqrt.pop %v4395
          %v4427 = vmul.f32 %v4426, %v4395
          %v4428 = vmul.f32 %v4427, %v4426
          %v4429 = vmul.f32 0.5, %v4428
          %v4430 = vsub.f32 1.5, %v4429
          %v4431 = vmul.f32 %v4426, %v4430
          %vm4432 = vweird.f32 %v4395
          %vm4433 = vweird.f32 %v4426
          %vm4434 = vmor %vm4432, %vm4433
          %v4435 = vsel %vm4434, %v4426, %v4431
          %v4440 = vrot.slane %v4415, 6
          %v4441 = vrot.slane %v4425, 4
          %v4442 = vrot.slane %v4435, 2
          %v4443 = vsel %vm2797, %v4405, %v4440
          %v4444 = vsel %vm4280, %v4441, %v4442
          %v4445 = vsel %vm4282, %v4443, %v4444
          %v4447 = vmul.f32 %v4348, %v4445
          %v4449 = vperm.slane %v4292, 0
          %v4450 = vperm.slane %v4292, 1
          %v4451 = vperm.slane %v4292, 2
          %v4452 = vperm.slane %v4292, 3
          %v4453 = vrot.slane %v4450, 6
          %v4454 = vrot.slane %v4451, 4
          %v4455 = vrot.slane %v4452, 2
          %v4456 = vsel %vm2797, %v4449, %v4453
          %v4457 = vsel %vm4280, %v4454, %v4455
          %v4458 = vsel %vm4282, %v4456, %v4457
          %v4460 = vmul.f32 %v4447, %v4458
          %v4462 = vperm.slane %v4294, 0
          %v4463 = vperm.slane %v4294, 1
          %v4464 = vperm.slane %v4294, 2
          %v4465 = vperm.slane %v4294, 3
          %v4466 = vrot.slane %v4463, 6
          %v4467 = vrot.slane %v4464, 4
          %v4468 = vrot.slane %v4465, 2
          %v4469 = vsel %vm2797, %v4462, %v4466
          %v4470 = vsel %vm4280, %v4467, %v4468
          %v4471 = vsel %vm4282, %v4469, %v4470
          %v4473 = vadd.f32 %v4460, %v4471
          %v4474 = vmax.f32 %v4473, 0.0
          %v4475 = vld [vmem:[#allocation10] sm:$0xff]
          %v4476 = vld [vmem:[#allocation10 + $0x8] sm:$0xff]
          %v4477 = vld [vmem:[#allocation10 + $0x10] sm:$0xff]
          %v4478 = vld [vmem:[#allocation10 + $0x18] sm:$0xff]
          %v4479 = vld [vmem:[#allocation10 + $0x20] sm:$0xff]
          %v4480 = vld [vmem:[#allocation10 + $0x28] sm:$0xff]
          %v4481 = vld [vmem:[#allocation10 + $0x30] sm:$0xff]
          %v4482 = vld [vmem:[#allocation10 + $0x38] sm:$0xff]
          %v4483 = vld [vmem:[#allocation10 + $0x40] sm:$0xff]
          %v4484 = vld [vmem:[#allocation10 + $0x48] sm:$0xff]
          %v4485 = vld [vmem:[#allocation10 + $0x50] sm:$0xff]
          %v4486 = vld [vmem:[#allocation10 + $0x58] sm:$0xff]
          %v4487 = vld [vmem:[#allocation10 + $0x60] sm:$0xff]
          %v4488 = vld [vmem:[#allocation10 + $0x68] sm:$0xff]
          %v4489 = vld [vmem:[#allocation10 + $0x70] sm:$0xff]
          %v4490 = vld [vmem:[#allocation10 + $0x78] sm:$0xff]
          %v4491 = vld [vmem:[#allocation10 + $0x80] sm:$0xff]
          %v4492 = vld [vmem:[#allocation10 + $0x88] sm:$0xff]
          %v4493 = vld [vmem:[#allocation10 + $0x90] sm:$0xff]
          %v4494 = vld [vmem:[#allocation10 + $0x98] sm:$0xff]
          %v4495 = vld [vmem:[#allocation10 + $0xa0] sm:$0xff]
          %v4496 = vld [vmem:[#allocation10 + $0xa8] sm:$0xff]
          %v4497 = vld [vmem:[#allocation10 + $0xb0] sm:$0xff]
          %v4498 = vld [vmem:[#allocation10 + $0xb8] sm:$0xff]
          %v4499 = vld [vmem:[#allocation10 + $0xc0] sm:$0xff]
          %v4500 = vld [vmem:[#allocation10 + $0xc8] sm:$0xff]
          %v4501 = vld [vmem:[#allocation10 + $0xd0] sm:$0xff]
          %v4502 = vld [vmem:[#allocation10 + $0xd8] sm:$0xff]
          %v4503 = vld [vmem:[#allocation10 + $0xe0] sm:$0xff]
          %v4504 = vld [vmem:[#allocation10 + $0xe8] sm:$0xff]
          %v4505 = vld [vmem:[#allocation10 + $0xf0] sm:$0xff]
          %v4506 = vld [vmem:[#allocation10 + $0xf8] sm:$0xff]
          %v4507 = vld [vmem:[#allocation10 + $0x100] sm:$0xff]
          %v4508 = vld [vmem:[#allocation10 + $0x108] sm:$0xff]
          %v4509 = vld [vmem:[#allocation10 + $0x110] sm:$0xff]
          %v4510 = vld [vmem:[#allocation10 + $0x118] sm:$0xff]
          %v4511 = vld [vmem:[#allocation10 + $0x120] sm:$0xff]
          %v4512 = vld [vmem:[#allocation10 + $0x128] sm:$0xff]
          %v4513 = vld [vmem:[#allocation10 + $0x130] sm:$0xff]
          %v4514 = vld [vmem:[#allocation10 + $0x138] sm:$0xff]
          %v4515 = vld [vmem:[#allocation10 + $0x140] sm:$0xff]
          %v4516 = vld [vmem:[#allocation10 + $0x148] sm:$0xff]
          %v4517 = vld [vmem:[#allocation10 + $0x150] sm:$0xff]
          %v4518 = vld [vmem:[#allocation10 + $0x158] sm:$0xff]
          %v4519 = vld [vmem:[#allocation10 + $0x160] sm:$0xff]
          %v4520 = vld [vmem:[#allocation10 + $0x168] sm:$0xff]
          %v4521 = vld [vmem:[#allocation10 + $0x170] sm:$0xff]
          %v4522 = vld [vmem:[#allocation10 + $0x178] sm:$0xff]
          %v4523 = vld [vmem:[#allocation10 + $0x180] sm:$0xff]
          %v4524 = vld [vmem:[#allocation10 + $0x188] sm:$0xff]
          %v4525 = vld [vmem:[#allocation10 + $0x190] sm:$0xff]
          %v4526 = vld [vmem:[#allocation10 + $0x198] sm:$0xff]
          %v4527 = vld [vmem:[#allocation10 + $0x1a0] sm:$0xff]
          %v4528 = vld [vmem:[#allocation10 + $0x1a8] sm:$0xff]
          %v4529 = vld [vmem:[#allocation10 + $0x1b0] sm:$0xff]
          %v4530 = vld [vmem:[#allocation10 + $0x1b8] sm:$0xff]
          %v4531 = vld [vmem:[#allocation10 + $0x1c0] sm:$0xff]
          %v4532 = vld [vmem:[#allocation10 + $0x1c8] sm:$0xff]
          %v4533 = vld [vmem:[#allocation10 + $0x1d0] sm:$0xff]
          %v4534 = vld [vmem:[#allocation10 + $0x1d8] sm:$0xff]
          %v4535 = vld [vmem:[#allocation10 + $0x1e0] sm:$0xff]
          %v4536 = vld [vmem:[#allocation10 + $0x1e8] sm:$0xff]
          %v4537 = vld [vmem:[#allocation10 + $0x1f0] sm:$0xff]
          %v4538 = vld [vmem:[#allocation10 + $0x1f8] sm:$0xff]
          %4540 = vst [vmem:[#allocation1] ss:$4 sm:$0xff] %v4474
          %v4541 = vld.sshfl [vmem:[#allocation1] sm:$0xff pattern:$0x73625140]
          %v4542 = vld.sshfl [vmem:[#allocation1 + $0x8] sm:$0xff pattern:$0x73625140]
          %v4543 = vld.sshfl [vmem:[#allocation1 + $0x10] sm:$0xff pattern:$0x73625140]
          %v4544 = vld.sshfl [vmem:[#allocation1 + $0x18] sm:$0xff pattern:$0x73625140]
          %4549 = vmatpush.msra.mxu0 %v4490
          %4550 = vmatpush.msra.mxu0 %v4489
          %4551 = vmatpush.msra.mxu0 %v4488
          %4552 = vmatpush.msra.mxu0 %v4487
          %4553 = vmatpush.msra.mxu0 %v4486
          %4554 = vmatpush.msra.mxu0 %v4485
          %4555 = vmatpush.msra.mxu0 %v4484
          %4556 = vmatpush.msra.mxu0 %v4483
          %4557 = vmatpush.msra.mxu0 %v4482
          %4558 = vmatpush.msra.mxu0 %v4481
          %4559 = vmatpush.msra.mxu0 %v4480
          %4560 = vmatpush.msra.mxu0 %v4479
          %4561 = vmatpush.msra.mxu0 %v4478
          %4562 = vmatpush.msra.mxu0 %v4477
          %4563 = vmatpush.msra.mxu0 %v4476
          %4564 = vmatpush.msra.mxu0 %v4475
          %4565 = vmatmul.f32.gmra.mxu0 %v4541
          %v4566 = vpop.f32.mrf.mxu0
          %v4567 = vadd.f32 0.0, %v4566
          %4568 = vdwg.mxu0
          %4569 = vmatpush.msra.mxu0 %v4506
          %4570 = vmatpush.msra.mxu0 %v4505
          %4571 = vmatpush.msra.mxu0 %v4504
          %4572 = vmatpush.msra.mxu0 %v4503
          %4573 = vmatpush.msra.mxu0 %v4502
          %4574 = vmatpush.msra.mxu0 %v4501
          %4575 = vmatpush.msra.mxu0 %v4500
          %4576 = vmatpush.msra.mxu0 %v4499
          %4577 = vmatpush.msra.mxu0 %v4498
          %4578 = vmatpush.msra.mxu0 %v4497
          %4579 = vmatpush.msra.mxu0 %v4496
          %4580 = vmatpush.msra.mxu0 %v4495
          %4581 = vmatpush.msra.mxu0 %v4494
          %4582 = vmatpush.msra.mxu0 %v4493
          %4583 = vmatpush.msra.mxu0 %v4492
          %4584 = vmatpush.msra.mxu0 %v4491
          %4585 = vmatmul.f32.gmra.mxu0 %v4542
          %v4586 = vpop.f32.mrf.mxu0
          %v4587 = vadd.f32 %v4567, %v4586
          %4588 = vdwg.mxu0
          %4589 = vmatpush.msra.mxu0 %v4522
          %4590 = vmatpush.msra.mxu0 %v4521
          %4591 = vmatpush.msra.mxu0 %v4520
          %4592 = vmatpush.msra.mxu0 %v4519
          %4593 = vmatpush.msra.mxu0 %v4518
          %4594 = vmatpush.msra.mxu0 %v4517
          %4595 = vmatpush.msra.mxu0 %v4516
          %4596 = vmatpush.msra.mxu0 %v4515
          %4597 = vmatpush.msra.mxu0 %v4514
          %4598 = vmatpush.msra.mxu0 %v4513
          %4599 = vmatpush.msra.mxu0 %v4512
          %4600 = vmatpush.msra.mxu0 %v4511
          %4601 = vmatpush.msra.mxu0 %v4510
          %4602 = vmatpush.msra.mxu0 %v4509
          %4603 = vmatpush.msra.mxu0 %v4508
          %4604 = vmatpush.msra.mxu0 %v4507
          %4605 = vmatmul.f32.gmra.mxu0 %v4543
          %v4606 = vpop.f32.mrf.mxu0
          %v4607 = vadd.f32 %v4587, %v4606
          %4608 = vdwg.mxu0
          %4609 = vmatpush.msra.mxu0 %v4538
          %4610 = vmatpush.msra.mxu0 %v4537
          %4611 = vmatpush.msra.mxu0 %v4536
          %4612 = vmatpush.msra.mxu0 %v4535
          %4613 = vmatpush.msra.mxu0 %v4534
          %4614 = vmatpush.msra.mxu0 %v4533
          %4615 = vmatpush.msra.mxu0 %v4532
          %4616 = vmatpush.msra.mxu0 %v4531
          %4617 = vmatpush.msra.mxu0 %v4530
          %4618 = vmatpush.msra.mxu0 %v4529
          %4619 = vmatpush.msra.mxu0 %v4528
          %4620 = vmatpush.msra.mxu0 %v4527
          %4621 = vmatpush.msra.mxu0 %v4526
          %4622 = vmatpush.msra.mxu0 %v4525
          %4623 = vmatpush.msra.mxu0 %v4524
          %4624 = vmatpush.msra.mxu0 %v4523
          %4625 = vmatmul.f32.gmra.mxu0 %v4544
          %v4626 = vpop.f32.mrf.mxu0
          %v4627 = vadd.f32 %v4607, %v4626
          %4628 = vdwg.mxu0
          %v4629 = vld [vmem:[#allocation12] sm:$0x1]
          %v4630 = vld [vmem:[#allocation12 + $0x1] sm:$0x1]
          %v4631 = vsel %vm2797, %v4627, 0.0
          %v4632 = vrot.slane %v4631, 4
          %v4633 = vadd.f32 %v4631, %v4632
          %v4634 = vrot.slane %v4633, 2
          %v4635 = vadd.f32 %v4633, %v4634
          %v4636 = vrot.slane %v4635, 1
          %v4637 = vadd.f32 %v4635, %v4636
          %v4638 = vmul.f32 %v4637, %v2860
          %v4639 = vsub.f32 %v4627, %v4638
          %v4640 = vmul.f32 %v4639, %v4639
          %v4641 = vsel %vm2797, %v4640, 0.0
          %v4642 = vrot.slane %v4641, 4
          %v4643 = vadd.f32 %v4641, %v4642
          %v4644 = vrot.slane %v4643, 2
          %v4645 = vadd.f32 %v4643, %v4644
          %v4646 = vrot.slane %v4645, 1
          %v4647 = vadd.f32 %v4645, %v4646
          %v4648 = vmul.f32 %v4647, %v2860
          %v4649 = vadd.f32 %v4648, 1e-05
          %v4650 = vrsqrt.pop %v4649
          %v4651 = vmul.f32 %v4650, %v4649
          %v4652 = vmul.f32 %v4651, %v4650
          %v4653 = vmul.f32 0.5, %v4652
          %v4654 = vsub.f32 1.5, %v4653
          %v4655 = vmul.f32 %v4650, %v4654
          %vm4656 = vweird.f32 %v4649
          %vm4657 = vweird.f32 %v4650
          %vm4658 = vmor %vm4656, %vm4657
          %v4659 = vsel %vm4658, %v4650, %v4655
          %v4660 = vmul.f32 %v4639, %v4659
          %v4661 = vperm.slane %v4629, 0
          %v4662 = vmul.f32 %v4660, %v4661
          %v4663 = vperm.slane %v4630, 0
          %v4664 = vadd.f32 %v4662, %v4663
          %v4665 = vmax.f32 %v4664, 0.0
          %v4666 = vld [vmem:[%s7] sm:$0xff]
          %v4667 = vld [vmem:[%s7 + $0x8] sm:$0xff]
          %v4668 = vld [vmem:[%s7 + $0x10] sm:$0xff]
          %v4669 = vld [vmem:[%s7 + $0x18] sm:$0xff]
          %v4670 = vld [vmem:[%s7 + $0x20] sm:$0xff]
          %v4671 = vld [vmem:[%s7 + $0x28] sm:$0xff]
          %v4672 = vld [vmem:[%s7 + $0x30] sm:$0xff]
          %v4673 = vld [vmem:[%s7 + $0x38] sm:$0xff]
          %v4674 = vld [vmem:[%s7 + $0x40] sm:$0xff]
          %v4675 = vld [vmem:[%s7 + $0x48] sm:$0xff]
          %v4676 = vld [vmem:[%s7 + $0x50] sm:$0xff]
          %v4677 = vld [vmem:[%s7 + $0x58] sm:$0xff]
          %v4678 = vld [vmem:[%s7 + $0x60] sm:$0xff]
          %v4679 = vld [vmem:[%s7 + $0x68] sm:$0xff]
          %v4680 = vld [vmem:[%s7 + $0x70] sm:$0xff]
          %v4681 = vld [vmem:[%s7 + $0x78] sm:$0xff]
          %v4682 = vld [vmem:[#allocation13] sm:$0x1]
          %v4684 = vperm.slane %v4682, 0
          %4686 = vmatpush.msra.mxu0 %v4681
          %4687 = vmatpush.msra.mxu0 %v4680
          %4688 = vmatpush.msra.mxu0 %v4679
          %4689 = vmatpush.msra.mxu0 %v4678
          %4690 = vmatpush.msra.mxu0 %v4677
          %4691 = vmatpush.msra.mxu0 %v4676
          %4692 = vmatpush.msra.mxu0 %v4675
          %4693 = vmatpush.msra.mxu0 %v4674
          %4694 = vmatpush.msra.mxu0 %v4673
          %4695 = vmatpush.msra.mxu0 %v4672
          %4696 = vmatpush.msra.mxu0 %v4671
          %4697 = vmatpush.msra.mxu0 %v4670
          %4698 = vmatpush.msra.mxu0 %v4669
          %4699 = vmatpush.msra.mxu0 %v4668
          %4700 = vmatpush.msra.mxu0 %v4667
          %4701 = vmatpush.msra.mxu0 %v4666
          %4702 = vmatmul.f32.gmra.mxu0 %v4665
          %v4703 = vpop.f32.mrf.mxu0
          %v4704 = vadd.f32 %v4684, %v4703
          %4705 = vdwg.mxu0
          %vm4706 = vcmask 181248
          %4707 = vst.msk [vmem:[#allocation15] sm:$0x3] %vm4706, %v4704
        $region92: #{network_forward.1} parent=55 // pred_fallthru
          _
        // Predicated region
        $region93: #{network_forward.1} parent=55 // pred_check
          %p4708 = pneg %p239
        $region94: #{network_forward.1} parent=55 // pred_check_branch
          %4710 = sbr.rel (%p4708) target = $region96
        $region95: #{network_forward.1} parent=55 // pred_region
          %4712 = vsyncadd [#allocation5], 0
          %s4714 = sshll.u32 [#allocation15], 4
          %s4715 = int_to_ptr.vmem [resolvable:$true] %s4714
          %s4716 = sshll.u32 %s9, 4
          %s4717 = int_to_ptr.hbm [resolvable:$true] %s4716
          %4719 = dma.vmem_to_hbm [thread:$0]  %s4715, 32, %s4717, [#allocation5]
        $region96: #{network_forward.1} parent=55 // pred_fallthru
          _
        // Predicated region
        $region97: #{network_forward.1} parent=55 // pred_check
          %p4720 = pneg %p239
        $region98: #{network_forward.1} parent=55 // pred_check_branch
          %4722 = sbr.rel (%p4720) target = $region100
        $region99: #{network_forward.1} parent=55 // pred_region
          %4724 = dma.done [#allocation5], 32
        $region100: #{network_forward.1} parent=55 // pred_fallthru
          _
      $region56: #{network_forward.1} parent=5 // pred_fallthru
        _
      %p4725 = scmp.le.s32.totalorder 2, %s22
      // Predicated region
      $region101: #{network_forward.1} parent=5 // pred_check
        %p4726 = pneg %p4725
      $region102: #{network_forward.1} parent=5 // pred_check_branch
        %4728 = sbr.rel (%p4726) target = $region104
      $region103: #{network_forward.1} parent=5 // pred_region
        %s4729 = ssub.s32 %s22, 2
      $region104: #{network_forward.1} parent=5 // pred_fallthru
        _
    $region6: #{network_forward.1} parent=1 // loop_footer
      %s26 = sadd.s32 1, %s22
    $region7: #{network_forward.1} parent=1 // loop_footer_branch
      %21 = sbr.rel target = $region3
    $region8: #{network_forward.1} parent=1 // loop_exit
      _
    %4730 = vsyncpa [#allocation4], 1
    %s4731 = scalar_lea.sflag [#allocation4], 1
    %4732 = vsyncpa %s4731, 1
    %4733 = vsyncpa [#allocation7], 1
    %4734 = vsyncpa [#allocation11], 1
    %4735 = vsyncpa [#allocation14], 1
    %4736 = vsyncpa [#allocation5], 1
    %s4737 = scalar_lea.sflag [#allocation5], 1
    %4738 = vsyncpa %s4737, 1

</llo_original>
